<compile_context>
chip_gen: v7x
topology: tpu7x:2x2x1
jax: 0.10.0
libtpu: 0.0.40
codegen_flags: <defaults>
</compile_context>

<pallas_src>
import functools

import jax
import jax.numpy as jnp
from jax.experimental import pallas as pl
from jax.experimental.pallas import tpu as pltpu


def _round_up(v, m):
    return (v + m - 1) // m * m


def _bottleneck_kernel(x_ref, w1_ref, w2_ref, w3_ref, b1_ref, b2_ref, b3_ref,
                       out_ref, q_ref, *, H, W):
    """One image per grid step.

    Shapes (per step):
      x_ref   : (1, H*W, Cp)   f32   (Cp = padded in/out channels)
      w1_ref  : (Cp, Wp)       cdt   (bn1 scale folded in)
      w2_ref  : (3, 3*Wp, Wp)  cdt   (kh, kw*ci, co; bn2 scale folded in)
      w3_ref  : (Wp, Cp)       cdt   (bn3 scale folded in)
      b*_ref  : (1, Wp|Cp)     f32
      out_ref : (1, H*W, Cp)   f32
      q_ref   : (H+2, W, 3*Wp) cdt   VMEM scratch (H halo + 3 dx taps)
    """
    cdt = w1_ref.dtype
    Wp = w1_ref.shape[1]
    HW = H * W

    x2d = x_ref[0]                                            # (HW, Cp) f32

    # ---- conv1 (1x1) + bias + ReLU ------------------------------------------
    o1 = jnp.dot(x2d.astype(cdt), w1_ref[...],
                 preferred_element_type=jnp.float32)
    o1 = jnp.maximum(o1 + b1_ref[...], 0.0)                   # (HW, Wp) f32
    o1c = o1.astype(cdt)                                      # single cast

    # ---- conv2 (3x3, stride 1, pad 1) as 3 matmuls with K = 3*Wp ------------
    # dx = -1 / +1 taps via XLU roll over the flattened (h, w) row axis; the
    # wrapped-around columns are fixed with two tiny strip stores below.
    left = pltpu.roll(o1c, shift=1, axis=0)                   # ~ o1[h, w-1]
    right = pltpu.roll(o1c, shift=HW - 1, axis=0)             # ~ o1[h, w+1]

    q_ref[0] = jnp.zeros((W, 3 * Wp), cdt)                    # top h halo row
    q_ref[H + 1] = jnp.zeros((W, 3 * Wp), cdt)                # bottom h halo row
    q_ref[1:H + 1, :, 0 * Wp:1 * Wp] = left.reshape(H, W, Wp)
    q_ref[1:H + 1, :, 1 * Wp:2 * Wp] = o1c.reshape(H, W, Wp)
    q_ref[1:H + 1, :, 2 * Wp:3 * Wp] = right.reshape(H, W, Wp)
    # zero the wrapped-around columns of the shifted taps
    q_ref[1:H + 1, 0:1, 0 * Wp:1 * Wp] = jnp.zeros((H, 1, Wp), cdt)
    q_ref[1:H + 1, W - 1:W, 2 * Wp:3 * Wp] = jnp.zeros((H, 1, Wp), cdt)

    acc = jnp.zeros((HW, Wp), jnp.float32)
    for dy in range(3):                                       # static unroll
        tap = q_ref[dy:dy + H].reshape(HW, 3 * Wp)            # kh == dy tap
        acc = acc + jnp.dot(tap, w2_ref[dy],
                            preferred_element_type=jnp.float32)
    o2 = jnp.maximum(acc + b2_ref[...], 0.0)                  # (HW, Wp) f32

    # ---- conv3 (1x1) + bias + identity skip + ReLU --------------------------
    o3 = jnp.dot(o2.astype(cdt), w3_ref[...],
                 preferred_element_type=jnp.float32)
    out = jnp.maximum(o3 + b3_ref[...] + x2d, 0.0)            # f32 skip add
    out_ref[0] = out.astype(out_ref.dtype)


def _fold_bn(gamma, beta, mean, var, eps=1e-5):
    scale = gamma / jnp.sqrt(var + eps)
    bias = beta - mean * scale
    return scale.astype(jnp.float32), bias.astype(jnp.float32)


@functools.partial(jax.jit, static_argnames=("compute_dtype",))
def bottleneck_forward(x_nchw, p, *, compute_dtype=jnp.bfloat16):
    """x_nchw: [N, C, H, W] float32; p: dict of PyTorch-shaped parameters."""
    N, Cin, H, W = x_nchw.shape
    width = p["conv1_w"].shape[0]
    Cout = p["conv3_w"].shape[0]
    assert Cin == Cout, "downsample is None -> identity skip needs Cin == Cout"
    # TODO(synk): stride > 1 / downsample branch not implemented (spec uses the
    # stride=1, downsample=None configuration).

    Cp = _round_up(Cin, 128)       # lane-dense in/out channels
    Wp = _round_up(width, 128)     # lane-dense bottleneck width

    # NHWC, pad channels, flatten spatial: kernel sees 2-D (rows, channels).
    x = jnp.transpose(x_nchw, (0, 2, 3, 1)).astype(jnp.float32)
    x = jnp.pad(x, ((0, 0), (0, 0), (0, 0), (0, Cp - Cin)))
    x2d = x.reshape(N, H * W, Cp)

    s1, b1 = _fold_bn(p["bn1_g"], p["bn1_b"], p["bn1_m"], p["bn1_v"])
    s2, b2 = _fold_bn(p["bn2_g"], p["bn2_b"], p["bn2_m"], p["bn2_v"])
    s3, b3 = _fold_bn(p["bn3_g"], p["bn3_b"], p["bn3_m"], p["bn3_v"])

    # conv1: OIHW (width, Cin, 1, 1) -> (Cin, width), fold bn1 scale, pad.
    w1 = jnp.transpose(p["conv1_w"][:, :, 0, 0], (1, 0)) * s1[None, :]
    w1 = jnp.pad(w1, ((0, Cp - Cin), (0, Wp - width))).astype(compute_dtype)

    # conv2: OIHW (width, width, 3, 3) -> (kh, kw, ci, co), fold bn2 scale,
    # pad channels, then collapse (kw, ci) -> K so each kh tap is one matmul
    # against the [w-1 | w | w+1] lane-concatenated activations.
    w2 = jnp.transpose(p["conv2_w"], (2, 3, 1, 0)) * s2[None, None, None, :]
    w2 = jnp.pad(w2, ((0, 0), (0, 0), (0, Wp - width), (0, Wp - width)))
    w2 = w2.reshape(3, 3 * Wp, Wp).astype(compute_dtype)

    # conv3: OIHW (Cout, width, 1, 1) -> (width, Cout), fold bn3 scale, pad.
    w3 = jnp.transpose(p["conv3_w"][:, :, 0, 0], (1, 0)) * s3[None, :]
    w3 = jnp.pad(w3, ((0, Wp - width), (0, Cp - Cout))).astype(compute_dtype)

    b1p = jnp.pad(b1, (0, Wp - width)).reshape(1, Wp)
    b2p = jnp.pad(b2, (0, Wp - width)).reshape(1, Wp)
    b3p = jnp.pad(b3, (0, Cp - Cout)).reshape(1, Cp)

    kernel = functools.partial(_bottleneck_kernel, H=H, W=W)

    out2d = pl.pallas_call(
        kernel,
        out_shape=jax.ShapeDtypeStruct((N, H * W, Cp), jnp.float32),
        grid=(N,),
        in_specs=[
            pl.BlockSpec((1, H * W, Cp), lambda n: (n, 0, 0)),    # x
            pl.BlockSpec((Cp, Wp), lambda n: (0, 0)),             # w1
            pl.BlockSpec((3, 3 * Wp, Wp), lambda n: (0, 0, 0)),   # w2
            pl.BlockSpec((Wp, Cp), lambda n: (0, 0)),             # w3
            pl.BlockSpec((1, Wp), lambda n: (0, 0)),              # b1
            pl.BlockSpec((1, Wp), lambda n: (0, 0)),              # b2
            pl.BlockSpec((1, Cp), lambda n: (0, 0)),              # b3
        ],
        out_specs=pl.BlockSpec((1, H * W, Cp), lambda n: (n, 0, 0)),
        scratch_shapes=[pltpu.VMEM((H + 2, W, 3 * Wp), compute_dtype)],
        compiler_params=pltpu.CompilerParams(
            dimension_semantics=("parallel",)),
    )(x2d, w1, w2, w3, b1p, b2p, b3p)

    out = out2d.reshape(N, H, W, Cp)[:, :, :, :Cout]
    return jnp.transpose(out, (0, 3, 1, 2))                   # back to NCHW


# ------------------------- pure-JAX reference (NCHW) -------------------------
def bottleneck_reference(x, p):
    def conv(x, w, pad):
        return jax.lax.conv_general_dilated(
            x, w, window_strides=(1, 1), padding=pad,
            dimension_numbers=("NCHW", "OIHW", "NCHW"))

    def bn(x, g, b, m, v, eps=1e-5):
        g, b, m, v = (t[None, :, None, None] for t in (g, b, m, v))
        return (x - m) / jnp.sqrt(v + eps) * g + b

    out = jax.nn.relu(bn(conv(x, p["conv1_w"], "VALID"),
                         p["bn1_g"], p["bn1_b"], p["bn1_m"], p["bn1_v"]))
    out = jax.nn.relu(bn(conv(out, p["conv2_w"], ((1, 1), (1, 1))),
                         p["bn2_g"], p["bn2_b"], p["bn2_m"], p["bn2_v"]))
    out = bn(conv(out, p["conv3_w"], "VALID"),
             p["bn3_g"], p["bn3_b"], p["bn3_m"], p["bn3_v"])
    return jax.nn.relu(out + x)


def init_params(key, inplanes, planes):
    width = planes                    # base_width=64, groups=1 -> width = planes
    cout = planes * 4                 # expansion = 4
    ks = jax.random.split(key, 8)

    def w(k, shape, fan_in):
        return jax.random.normal(k, shape, jnp.float32) * (2.0 / fan_in) ** 0.5

    p = {
        "conv1_w": w(ks[0], (width, inplanes, 1, 1), inplanes),
        "conv2_w": w(ks[1], (width, width, 3, 3), width * 9),
        "conv3_w": w(ks[2], (cout, width, 1, 1), width),
    }
    for i, (name, c) in enumerate((("bn1", width), ("bn2", width), ("bn3", cout))):
        k0, k1, k2, k3 = jax.random.split(ks[3 + i], 4)
        p[f"{name}_g"] = jax.random.uniform(k0, (c,), jnp.float32, 0.5, 1.5)
        p[f"{name}_b"] = jax.random.normal(k1, (c,), jnp.float32) * 0.1
        p[f"{name}_m"] = jax.random.normal(k2, (c,), jnp.float32) * 0.1
        p[f"{name}_v"] = jax.random.uniform(k3, (c,), jnp.float32, 0.5, 1.5)
    return p


if __name__ == "__main__":
    key = jax.random.PRNGKey(0)
    k_x, k_p = jax.random.split(key)

    # Bottleneck(inplanes=16, planes=4, stride=1, downsample=None) -> width=4, out=16
    N, inplanes, H, W = 2, 16, 16, 16
    planes = 4

    x = jax.random.normal(k_x, (N, inplanes, H, W), jnp.float32)
    params = init_params(k_p, inplanes, planes)

    ref = jax.block_until_ready(bottleneck_reference(x, params))

    # f32 compute path: tight check of the kernel logic (taps, halo, BN fold, skip).
    out_f32 = jax.block_until_ready(
        bottleneck_forward(x, params, compute_dtype=jnp.float32))
    assert out_f32.shape == (N, planes * 4, H, W)
    assert jnp.allclose(out_f32, ref, atol=1e-3, rtol=1e-3), \
        f"f32 max abs err {jnp.max(jnp.abs(out_f32 - ref))}"

    # bf16 MXU path (default): loose norm-based sanity check.
    out_bf16 = jax.block_until_ready(bottleneck_forward(x, params))
    rel = float(jnp.linalg.norm(out_bf16 - ref) /
                (jnp.linalg.norm(ref) + 1e-6))
    assert rel < 0.1, f"bf16 relative Frobenius error too large: {rel}"

    print("KERNEL_OK")
</pallas_src>

<mosaic_0001>
module attributes {stable_mosaic.version = 11 : i64} {
  func.func @_bottleneck_kernel(%arg0: i32, %arg1: memref<1x256x128xf32, #tpu.memory_space<vmem>>, %arg2: memref<128x128xf32, #tpu.memory_space<vmem>>, %arg3: memref<3x384x128xf32, #tpu.memory_space<vmem>>, %arg4: memref<128x128xf32, #tpu.memory_space<vmem>>, %arg5: memref<1x128xf32, #tpu.memory_space<vmem>>, %arg6: memref<1x128xf32, #tpu.memory_space<vmem>>, %arg7: memref<1x128xf32, #tpu.memory_space<vmem>>, %arg8: memref<1x256x128xf32, #tpu.memory_space<vmem>>, %arg9: memref<18x16x384xf32, #tpu.memory_space<vmem>>) attributes {dimension_semantics = [#tpu.dimension_semantics<parallel>], iteration_bounds = array<i64: 2>, scalar_prefetch = 0 : i64, scratch_operands = 1 : i64, tpu.core_type = #tpu.core_type<tc>, window_params = [{transform_indices = @transform_0, window_bounds = array<i64: 1, 256, 128>}, {pipeline_mode = #tpu.pipeline_mode<synchronous>, transform_indices = @transform_1, window_bounds = array<i64: 128, 128>}, {pipeline_mode = #tpu.pipeline_mode<synchronous>, transform_indices = @transform_2, window_bounds = array<i64: 3, 384, 128>}, {pipeline_mode = #tpu.pipeline_mode<synchronous>, transform_indices = @transform_3, window_bounds = array<i64: 128, 128>}, {pipeline_mode = #tpu.pipeline_mode<synchronous>, transform_indices = @transform_4, window_bounds = array<i64: 1, 128>}, {pipeline_mode = #tpu.pipeline_mode<synchronous>, transform_indices = @transform_5, window_bounds = array<i64: 1, 128>}, {pipeline_mode = #tpu.pipeline_mode<synchronous>, transform_indices = @transform_6, window_bounds = array<i64: 1, 128>}, {transform_indices = @transform_7, window_bounds = array<i64: 1, 256, 128>}]} {
    %c0 = arith.constant 0 : index
    %c0_0 = arith.constant 0 : index
    %c0_1 = arith.constant 0 : index
    %0 = vector.load %arg1[%c0, %c0_0, %c0_1] : memref<1x256x128xf32, #tpu.memory_space<vmem>>, vector<1x256x128xf32>
    %1 = vector.shape_cast %0 : vector<1x256x128xf32> to vector<256x128xf32>
    %c0_2 = arith.constant 0 : index
    %c0_3 = arith.constant 0 : index
    %2 = vector.load %arg2[%c0_2, %c0_3] : memref<128x128xf32, #tpu.memory_space<vmem>>, vector<128x128xf32>
    %cst = arith.constant dense<0.000000e+00> : vector<256x128xf32>
    %3 = tpu.matmul %1, %2, %cst {dimension_numbers = #tpu.dot_dimension_numbers<[1], [0], [0], [1], [0, 0, 1, 1], [], []>} : vector<256x128xf32>, vector<128x128xf32>, vector<256x128xf32> -> vector<256x128xf32>
    %c0_4 = arith.constant 0 : index
    %c0_5 = arith.constant 0 : index
    %4 = vector.load %arg5[%c0_4, %c0_5] : memref<1x128xf32, #tpu.memory_space<vmem>>, vector<1x128xf32>
    %5 = vector.broadcast %4 : vector<1x128xf32> to vector<256x128xf32>
    %6 = arith.addf %3, %5 : vector<256x128xf32>
    %cst_6 = arith.constant 0.000000e+00 : f32
    %7 = vector.broadcast %cst_6 : f32 to vector<256x128xf32>
    %8 = arith.maximumf %6, %7 : vector<256x128xf32>
    %c1_i32 = arith.constant 1 : i32
    %9 = tpu.dynamic_rotate %8 by %c1_i32 dim 0 : vector<256x128xf32>, i32 -> vector<256x128xf32>
    %c255_i32 = arith.constant 255 : i32
    %10 = tpu.dynamic_rotate %8 by %c255_i32 dim 0 : vector<256x128xf32>, i32 -> vector<256x128xf32>
    %cst_7 = arith.constant 0.000000e+00 : f32
    %11 = vector.broadcast %cst_7 : f32 to vector<16x384xf32>
    %c0_8 = arith.constant 0 : index
    %c0_9 = arith.constant 0 : index
    %c0_10 = arith.constant 0 : index
    %12 = vector.load %arg9[%c0_8, %c0_9, %c0_10] : memref<18x16x384xf32, #tpu.memory_space<vmem>>, vector<1x16x384xf32>
    %13 = vector.shape_cast %12 : vector<1x16x384xf32> to vector<16x384xf32>
    %14 = vector.shape_cast %11 : vector<16x384xf32> to vector<1x16x384xf32>
    tpu.vector_store %arg9[%c0_8, %c0_9, %c0_10], %14 {strides = array<i32>} : memref<18x16x384xf32, #tpu.memory_space<vmem>>, vector<1x16x384xf32>,
    %cst_11 = arith.constant 0.000000e+00 : f32
    %15 = vector.broadcast %cst_11 : f32 to vector<16x384xf32>
    %c17 = arith.constant 17 : index
    %c0_12 = arith.constant 0 : index
    %c0_13 = arith.constant 0 : index
    %16 = vector.load %arg9[%c17, %c0_12, %c0_13] : memref<18x16x384xf32, #tpu.memory_space<vmem>>, vector<1x16x384xf32>
    %17 = vector.shape_cast %16 : vector<1x16x384xf32> to vector<16x384xf32>
    %18 = vector.shape_cast %15 : vector<16x384xf32> to vector<1x16x384xf32>
    tpu.vector_store %arg9[%c17, %c0_12, %c0_13], %18 {strides = array<i32>} : memref<18x16x384xf32, #tpu.memory_space<vmem>>, vector<1x16x384xf32>,
    %19 = vector.shape_cast %9 : vector<256x128xf32> to vector<16x16x128xf32>
    %c1 = arith.constant 1 : index
    %c0_14 = arith.constant 0 : index
    %c0_15 = arith.constant 0 : index
    %20 = vector.load %arg9[%c1, %c0_14, %c0_15] : memref<18x16x384xf32, #tpu.memory_space<vmem>>, vector<16x16x128xf32>
    tpu.vector_store %arg9[%c1, %c0_14, %c0_15], %19 {strides = array<i32>} : memref<18x16x384xf32, #tpu.memory_space<vmem>>, vector<16x16x128xf32>,
    %21 = vector.shape_cast %8 : vector<256x128xf32> to vector<16x16x128xf32>
    %c1_16 = arith.constant 1 : index
    %c0_17 = arith.constant 0 : index
    %c128 = arith.constant 128 : index
    %22 = vector.load %arg9[%c1_16, %c0_17, %c128] : memref<18x16x384xf32, #tpu.memory_space<vmem>>, vector<16x16x128xf32>
    tpu.vector_store %arg9[%c1_16, %c0_17, %c128], %21 {strides = array<i32>} : memref<18x16x384xf32, #tpu.memory_space<vmem>>, vector<16x16x128xf32>,
    %23 = vector.shape_cast %10 : vector<256x128xf32> to vector<16x16x128xf32>
    %c1_18 = arith.constant 1 : index
    %c0_19 = arith.constant 0 : index
    %c256 = arith.constant 256 : index
    %24 = vector.load %arg9[%c1_18, %c0_19, %c256] : memref<18x16x384xf32, #tpu.memory_space<vmem>>, vector<16x16x128xf32>
    tpu.vector_store %arg9[%c1_18, %c0_19, %c256], %23 {strides = array<i32>} : memref<18x16x384xf32, #tpu.memory_space<vmem>>, vector<16x16x128xf32>,
    %cst_20 = arith.constant 0.000000e+00 : f32
    %25 = vector.broadcast %cst_20 : f32 to vector<16x1x128xf32>
    %c1_21 = arith.constant 1 : index
    %c0_22 = arith.constant 0 : index
    %c0_23 = arith.constant 0 : index
    %26 = vector.load %arg9[%c1_21, %c0_22, %c0_23] : memref<18x16x384xf32, #tpu.memory_space<vmem>>, vector<16x1x128xf32>
    tpu.vector_store %arg9[%c1_21, %c0_22, %c0_23], %25 {strides = array<i32>} : memref<18x16x384xf32, #tpu.memory_space<vmem>>, vector<16x1x128xf32>,
    %cst_24 = arith.constant 0.000000e+00 : f32
    %27 = vector.broadcast %cst_24 : f32 to vector<16x1x128xf32>
    %c1_25 = arith.constant 1 : index
    %c15 = arith.constant 15 : index
    %c256_26 = arith.constant 256 : index
    %28 = vector.load %arg9[%c1_25, %c15, %c256_26] : memref<18x16x384xf32, #tpu.memory_space<vmem>>, vector<16x1x128xf32>
    tpu.vector_store %arg9[%c1_25, %c15, %c256_26], %27 {strides = array<i32>} : memref<18x16x384xf32, #tpu.memory_space<vmem>>, vector<16x1x128xf32>,
    %cst_27 = arith.constant 0.000000e+00 : f32
    %29 = vector.broadcast %cst_27 : f32 to vector<256x128xf32>
    %c0_28 = arith.constant 0 : index
    %c0_29 = arith.constant 0 : index
    %c0_30 = arith.constant 0 : index
    %30 = vector.load %arg9[%c0_28, %c0_29, %c0_30] : memref<18x16x384xf32, #tpu.memory_space<vmem>>, vector<16x16x384xf32>
    %31 = vector.shape_cast %30 : vector<16x16x384xf32> to vector<256x384xf32>
    %c0_31 = arith.constant 0 : index
    %c0_32 = arith.constant 0 : index
    %c0_33 = arith.constant 0 : index
    %32 = vector.load %arg3[%c0_31, %c0_32, %c0_33] : memref<3x384x128xf32, #tpu.memory_space<vmem>>, vector<1x384x128xf32>
    %33 = vector.shape_cast %32 : vector<1x384x128xf32> to vector<384x128xf32>
    %cst_34 = arith.constant dense<0.000000e+00> : vector<256x128xf32>
    %34 = tpu.matmul %31, %33, %cst_34 {dimension_numbers = #tpu.dot_dimension_numbers<[1], [0], [0], [1], [0, 0, 1, 1], [], []>} : vector<256x384xf32>, vector<384x128xf32>, vector<256x128xf32> -> vector<256x128xf32>
    %35 = arith.addf %29, %34 : vector<256x128xf32>
    %c1_35 = arith.constant 1 : index
    %c0_36 = arith.constant 0 : index
    %c0_37 = arith.constant 0 : index
    %36 = vector.load %arg9[%c1_35, %c0_36, %c0_37] : memref<18x16x384xf32, #tpu.memory_space<vmem>>, vector<16x16x384xf32>
    %37 = vector.shape_cast %36 : vector<16x16x384xf32> to vector<256x384xf32>
    %c1_38 = arith.constant 1 : index
    %c0_39 = arith.constant 0 : index
    %c0_40 = arith.constant 0 : index
    %38 = vector.load %arg3[%c1_38, %c0_39, %c0_40] : memref<3x384x128xf32, #tpu.memory_space<vmem>>, vector<1x384x128xf32>
    %39 = vector.shape_cast %38 : vector<1x384x128xf32> to vector<384x128xf32>
    %cst_41 = arith.constant dense<0.000000e+00> : vector<256x128xf32>
    %40 = tpu.matmul %37, %39, %cst_41 {dimension_numbers = #tpu.dot_dimension_numbers<[1], [0], [0], [1], [0, 0, 1, 1], [], []>} : vector<256x384xf32>, vector<384x128xf32>, vector<256x128xf32> -> vector<256x128xf32>
    %41 = arith.addf %35, %40 : vector<256x128xf32>
    %c2 = arith.constant 2 : index
    %c0_42 = arith.constant 0 : index
    %c0_43 = arith.constant 0 : index
    %42 = vector.load %arg9[%c2, %c0_42, %c0_43] : memref<18x16x384xf32, #tpu.memory_space<vmem>>, vector<16x16x384xf32>
    %43 = vector.shape_cast %42 : vector<16x16x384xf32> to vector<256x384xf32>
    %c2_44 = arith.constant 2 : index
    %c0_45 = arith.constant 0 : index
    %c0_46 = arith.constant 0 : index
    %44 = vector.load %arg3[%c2_44, %c0_45, %c0_46] : memref<3x384x128xf32, #tpu.memory_space<vmem>>, vector<1x384x128xf32>
    %45 = vector.shape_cast %44 : vector<1x384x128xf32> to vector<384x128xf32>
    %cst_47 = arith.constant dense<0.000000e+00> : vector<256x128xf32>
    %46 = tpu.matmul %43, %45, %cst_47 {dimension_numbers = #tpu.dot_dimension_numbers<[1], [0], [0], [1], [0, 0, 1, 1], [], []>} : vector<256x384xf32>, vector<384x128xf32>, vector<256x128xf32> -> vector<256x128xf32>
    %47 = arith.addf %41, %46 : vector<256x128xf32>
    %c0_48 = arith.constant 0 : index
    %c0_49 = arith.constant 0 : index
    %48 = vector.load %arg6[%c0_48, %c0_49] : memref<1x128xf32, #tpu.memory_space<vmem>>, vector<1x128xf32>
    %49 = vector.broadcast %48 : vector<1x128xf32> to vector<256x128xf32>
    %50 = arith.addf %47, %49 : vector<256x128xf32>
    %cst_50 = arith.constant 0.000000e+00 : f32
    %51 = vector.broadcast %cst_50 : f32 to vector<256x128xf32>
    %52 = arith.maximumf %50, %51 : vector<256x128xf32>
    %c0_51 = arith.constant 0 : index
    %c0_52 = arith.constant 0 : index
    %53 = vector.load %arg4[%c0_51, %c0_52] : memref<128x128xf32, #tpu.memory_space<vmem>>, vector<128x128xf32>
    %cst_53 = arith.constant dense<0.000000e+00> : vector<256x128xf32>
    %54 = tpu.matmul %52, %53, %cst_53 {dimension_numbers = #tpu.dot_dimension_numbers<[1], [0], [0], [1], [0, 0, 1, 1], [], []>} : vector<256x128xf32>, vector<128x128xf32>, vector<256x128xf32> -> vector<256x128xf32>
    %c0_54 = arith.constant 0 : index
    %c0_55 = arith.constant 0 : index
    %55 = vector.load %arg7[%c0_54, %c0_55] : memref<1x128xf32, #tpu.memory_space<vmem>>, vector<1x128xf32>
    %56 = vector.broadcast %55 : vector<1x128xf32> to vector<256x128xf32>
    %57 = arith.addf %54, %56 : vector<256x128xf32>
    %58 = arith.addf %57, %1 : vector<256x128xf32>
    %cst_56 = arith.constant 0.000000e+00 : f32
    %59 = vector.broadcast %cst_56 : f32 to vector<256x128xf32>
    %60 = arith.maximumf %58, %59 : vector<256x128xf32>
    %c0_57 = arith.constant 0 : index
    %c0_58 = arith.constant 0 : index
    %c0_59 = arith.constant 0 : index
    %61 = vector.load %arg8[%c0_57, %c0_58, %c0_59] : memref<1x256x128xf32, #tpu.memory_space<vmem>>, vector<1x256x128xf32>
    %62 = vector.shape_cast %61 : vector<1x256x128xf32> to vector<256x128xf32>
    %63 = vector.shape_cast %60 : vector<256x128xf32> to vector<1x256x128xf32>
    tpu.vector_store %arg8[%c0_57, %c0_58, %c0_59], %63 {strides = array<i32>} : memref<1x256x128xf32, #tpu.memory_space<vmem>>, vector<1x256x128xf32>,
    return
  }
  func.func @transform_0(%arg0: i32) -> (i32, i32, i32) {
    %c0_i32 = arith.constant 0 : i32
    %c0_i32_0 = arith.constant 0 : i32
    %c0_i32_1 = arith.constant 0 : i32
    return %arg0, %c0_i32, %c0_i32_0 : i32, i32, i32
  }
  func.func @transform_1(%arg0: i32) -> (i32, i32) {
    %c0_i32 = arith.constant 0 : i32
    %c0_i32_0 = arith.constant 0 : i32
    %c0_i32_1 = arith.constant 0 : i32
    return %c0_i32, %c0_i32_0 : i32, i32
  }
  func.func @transform_2(%arg0: i32) -> (i32, i32, i32) {
    %c0_i32 = arith.constant 0 : i32
    %c0_i32_0 = arith.constant 0 : i32
    %c0_i32_1 = arith.constant 0 : i32
    %c0_i32_2 = arith.constant 0 : i32
    return %c0_i32, %c0_i32_0, %c0_i32_1 : i32, i32, i32
  }
  func.func @transform_3(%arg0: i32) -> (i32, i32) {
    %c0_i32 = arith.constant 0 : i32
    %c0_i32_0 = arith.constant 0 : i32
    %c0_i32_1 = arith.constant 0 : i32
    return %c0_i32, %c0_i32_0 : i32, i32
  }
  func.func @transform_4(%arg0: i32) -> (i32, i32) {
    %c0_i32 = arith.constant 0 : i32
    %c0_i32_0 = arith.constant 0 : i32
    %c0_i32_1 = arith.constant 0 : i32
    return %c0_i32, %c0_i32_0 : i32, i32
  }
  func.func @transform_5(%arg0: i32) -> (i32, i32) {
    %c0_i32 = arith.constant 0 : i32
    %c0_i32_0 = arith.constant 0 : i32
    %c0_i32_1 = arith.constant 0 : i32
    return %c0_i32, %c0_i32_0 : i32, i32
  }
  func.func @transform_6(%arg0: i32) -> (i32, i32) {
    %c0_i32 = arith.constant 0 : i32
    %c0_i32_0 = arith.constant 0 : i32
    %c0_i32_1 = arith.constant 0 : i32
    return %c0_i32, %c0_i32_0 : i32, i32
  }
  func.func @transform_7(%arg0: i32) -> (i32, i32, i32) {
    %c0_i32 = arith.constant 0 : i32
    %c0_i32_0 = arith.constant 0 : i32
    %c0_i32_1 = arith.constant 0 : i32
    return %arg0, %c0_i32, %c0_i32_0 : i32, i32, i32
  }
}

</mosaic_0001>

<llo_original>
// kernel: bottleneck_forward.1
$region0: #{bottleneck_forward.1}
  #allocation0 [shape = 'u32[]', space=smem, size = 0x4, offset = 0x4, fixed_abs, tag = 'smem constant byte address 0x4 - core index']
  #allocation1 [shape = 'u32[144,128]{1,0:T(1,128)}', space=vmem, size = 0x12000, scoped, tag = 'internal scratch']
  #allocation2 [shape = 'f32[18,16,384]{2,1,0:T(8,128)}', space=vmem, size = 0x6c000, scoped, tag = 'scratch operand']
  %s0 = inlined_call_operand.vmem [shape: f32[2,256,128], index: 0, kind: input, shape index: {}]
  %s1 = inlined_call_operand.vmem [shape: f32[128,128], index: 1, kind: input, shape index: {}]
  %s2 = inlined_call_operand.vmem [shape: f32[3,384,128], index: 2, kind: input, shape index: {}]
  %s3 = inlined_call_operand.vmem [shape: f32[128,128], index: 3, kind: input, shape index: {}]
  %s4 = inlined_call_operand.vmem [shape: f32[1,128], index: 4, kind: input, shape index: {}]
  %s5 = inlined_call_operand.vmem [shape: f32[1,128], index: 5, kind: input, shape index: {}]
  %s6 = inlined_call_operand.vmem [shape: f32[1,128], index: 6, kind: input, shape index: {}]
  %s7 = inlined_call_operand.vmem [shape: f32[2,256,128], index: 7, kind: output, shape index: {}]
  %s8 = sld [smem:[#allocation0]]
  $region61: #{bottleneck_forward.1} parent=0
    _
  %s10 = ssub.s32 1, %s8
  %s11 = scalar_select 0, %s10, %s8
  loop: start=0, step=1, limit=4
  $region2: #{bottleneck_forward.1} parent=0 // loop_pre_header
    _
  $region3: #{bottleneck_forward.1} parent=0 // loop_header
    %s13 = sphi 0, %s17
    %p14 = scmp.ge.s32.totalorder %s13, 4
    %s23 = sphi 0, %s25
    %s26 = sphi 0, %s23
    %s27 = sphi 0, %s26
    %s43 = sphi 0, %s27
    %s47 = sphi 0, %s47
    %s49 = sphi 0, %s47
    %s50 = sphi 0, %s49
    %s64 = sphi 0, %s50
    %s68 = sphi 0, %s68
    %s70 = sphi 0, %s68
    %s71 = sphi 0, %s70
    %s85 = sphi 0, %s71
    %s89 = sphi 0, %s89
    %s91 = sphi 0, %s89
    %s92 = sphi 0, %s91
    %s106 = sphi 0, %s92
    %s110 = sphi 0, %s110
    %s112 = sphi 0, %s110
    %s113 = sphi 0, %s112
    %s127 = sphi 0, %s113
    %s131 = sphi 0, %s131
    %s133 = sphi 0, %s131
    %s134 = sphi 0, %s133
    %s148 = sphi 0, %s134
    %s152 = sphi 0, %s152
    %s154 = sphi 0, %s152
    %s155 = sphi 0, %s154
    %s169 = sphi 0, %s155
    %s175 = sphi 0, %s177
    %s178 = sphi 0, %s175
    %s179 = sphi 0, %s178
    %s195 = sphi 0, %s179
  $region4: #{bottleneck_forward.1} parent=0 // loop_header_branch
    %16 = sbr.rel (%p14) target = $region8
  $region5: #{bottleneck_forward.1} parent=0 // loop_body
    %s18 = ssub.s32 %s13, 1
    %s19 = ssub.s32 %s13, 2
    %s20 = sadd.s32 %s13, 1
    %s21 = ssub.s32 %s13, %s20
    %p22 = scmp.eq.s32.totalorder %s21, 0
    %s24 = sadd.s32 %s23, 1
    %s25 = scalar_select %p22, %s23, %s24
    %p28 = pneg %p22
    %p29 = scmp.eq.s32.totalorder %s13, 1
    %p30 = por %p28, %p29
    %p31 = scmp.ne.s32.totalorder %s23, %s26
    %p32 = scmp.eq.s32.totalorder %s13, 0
    %p33 = por %p31, %p32
    %p34 = scmp.ne.s32.totalorder %s23, %s26
    %p35 = scmp.eq.s32.totalorder %s18, 1
    %p36 = por %p34, %p35
    %p37 = scmp.ne.s32.totalorder %s26, %s27
    %p38 = scmp.eq.s32.totalorder %s18, 0
    %p39 = por %p37, %p38
    %p40 = scmp.ne.s32.totalorder %s26, %s27
    %p41 = scmp.eq.s32.totalorder %s19, 1
    %p42 = por %p40, %p41
    %p44 = scmp.ne.s32.totalorder %s27, %s43
    %p45 = scmp.eq.s32.totalorder %s19, 0
    %p46 = por %p44, %p45
    %s48 = sadd.s32 %s47, 1
    %p51 = scmp.eq.s32.totalorder %s13, 1
    %p52 = scmp.ne.s32.totalorder %s47, %s49
    %p53 = scmp.eq.s32.totalorder %s13, 0
    %p54 = por %p52, %p53
    %p55 = scmp.ne.s32.totalorder %s47, %s49
    %p56 = scmp.eq.s32.totalorder %s18, 1
    %p57 = por %p55, %p56
    %p58 = scmp.ne.s32.totalorder %s49, %s50
    %p59 = scmp.eq.s32.totalorder %s18, 0
    %p60 = por %p58, %p59
    %p61 = scmp.ne.s32.totalorder %s49, %s50
    %p62 = scmp.eq.s32.totalorder %s19, 1
    %p63 = por %p61, %p62
    %p65 = scmp.ne.s32.totalorder %s50, %s64
    %p66 = scmp.eq.s32.totalorder %s19, 0
    %p67 = por %p65, %p66
    %s69 = sadd.s32 %s68, 1
    %p72 = scmp.eq.s32.totalorder %s13, 1
    %p73 = scmp.ne.s32.totalorder %s68, %s70
    %p74 = scmp.eq.s32.totalorder %s13, 0
    %p75 = por %p73, %p74
    %p76 = scmp.ne.s32.totalorder %s68, %s70
    %p77 = scmp.eq.s32.totalorder %s18, 1
    %p78 = por %p76, %p77
    %p79 = scmp.ne.s32.totalorder %s70, %s71
    %p80 = scmp.eq.s32.totalorder %s18, 0
    %p81 = por %p79, %p80
    %p82 = scmp.ne.s32.totalorder %s70, %s71
    %p83 = scmp.eq.s32.totalorder %s19, 1
    %p84 = por %p82, %p83
    %p86 = scmp.ne.s32.totalorder %s71, %s85
    %p87 = scmp.eq.s32.totalorder %s19, 0
    %p88 = por %p86, %p87
    %s90 = sadd.s32 %s89, 1
    %p93 = scmp.eq.s32.totalorder %s13, 1
    %p94 = scmp.ne.s32.totalorder %s89, %s91
    %p95 = scmp.eq.s32.totalorder %s13, 0
    %p96 = por %p94, %p95
    %p97 = scmp.ne.s32.totalorder %s89, %s91
    %p98 = scmp.eq.s32.totalorder %s18, 1
    %p99 = por %p97, %p98
    %p100 = scmp.ne.s32.totalorder %s91, %s92
    %p101 = scmp.eq.s32.totalorder %s18, 0
    %p102 = por %p100, %p101
    %p103 = scmp.ne.s32.totalorder %s91, %s92
    %p104 = scmp.eq.s32.totalorder %s19, 1
    %p105 = por %p103, %p104
    %p107 = scmp.ne.s32.totalorder %s92, %s106
    %p108 = scmp.eq.s32.totalorder %s19, 0
    %p109 = por %p107, %p108
    %s111 = sadd.s32 %s110, 1
    %p114 = scmp.eq.s32.totalorder %s13, 1
    %p115 = scmp.ne.s32.totalorder %s110, %s112
    %p116 = scmp.eq.s32.totalorder %s13, 0
    %p117 = por %p115, %p116
    %p118 = scmp.ne.s32.totalorder %s110, %s112
    %p119 = scmp.eq.s32.totalorder %s18, 1
    %p120 = por %p118, %p119
    %p121 = scmp.ne.s32.totalorder %s112, %s113
    %p122 = scmp.eq.s32.totalorder %s18, 0
    %p123 = por %p121, %p122
    %p124 = scmp.ne.s32.totalorder %s112, %s113
    %p125 = scmp.eq.s32.totalorder %s19, 1
    %p126 = por %p124, %p125
    %p128 = scmp.ne.s32.totalorder %s113, %s127
    %p129 = scmp.eq.s32.totalorder %s19, 0
    %p130 = por %p128, %p129
    %s132 = sadd.s32 %s131, 1
    %p135 = scmp.eq.s32.totalorder %s13, 1
    %p136 = scmp.ne.s32.totalorder %s131, %s133
    %p137 = scmp.eq.s32.totalorder %s13, 0
    %p138 = por %p136, %p137
    %p139 = scmp.ne.s32.totalorder %s131, %s133
    %p140 = scmp.eq.s32.totalorder %s18, 1
    %p141 = por %p139, %p140
    %p142 = scmp.ne.s32.totalorder %s133, %s134
    %p143 = scmp.eq.s32.totalorder %s18, 0
    %p144 = por %p142, %p143
    %p145 = scmp.ne.s32.totalorder %s133, %s134
    %p146 = scmp.eq.s32.totalorder %s19, 1
    %p147 = por %p145, %p146
    %p149 = scmp.ne.s32.totalorder %s134, %s148
    %p150 = scmp.eq.s32.totalorder %s19, 0
    %p151 = por %p149, %p150
    %s153 = sadd.s32 %s152, 1
    %p156 = scmp.eq.s32.totalorder %s13, 1
    %p157 = scmp.ne.s32.totalorder %s152, %s154
    %p158 = scmp.eq.s32.totalorder %s13, 0
    %p159 = por %p157, %p158
    %p160 = scmp.ne.s32.totalorder %s152, %s154
    %p161 = scmp.eq.s32.totalorder %s18, 1
    %p162 = por %p160, %p161
    %p163 = scmp.ne.s32.totalorder %s154, %s155
    %p164 = scmp.eq.s32.totalorder %s18, 0
    %p165 = por %p163, %p164
    %p166 = scmp.ne.s32.totalorder %s154, %s155
    %p167 = scmp.eq.s32.totalorder %s19, 1
    %p168 = por %p166, %p167
    %p170 = scmp.ne.s32.totalorder %s155, %s169
    %p171 = scmp.eq.s32.totalorder %s19, 0
    %p172 = por %p170, %p171
    %s173 = ssub.s32 %s13, %s20
    %p174 = scmp.eq.s32.totalorder %s173, 0
    %s176 = sadd.s32 %s175, 1
    %s177 = scalar_select %p174, %s175, %s176
    %p180 = pneg %p174
    %p181 = scmp.eq.s32.totalorder %s13, 1
    %p182 = por %p180, %p181
    %p183 = scmp.ne.s32.totalorder %s175, %s178
    %p184 = scmp.eq.s32.totalorder %s13, 0
    %p185 = por %p183, %p184
    %p186 = scmp.ne.s32.totalorder %s175, %s178
    %p187 = scmp.eq.s32.totalorder %s18, 1
    %p188 = por %p186, %p187
    %p189 = scmp.ne.s32.totalorder %s178, %s179
    %p190 = scmp.eq.s32.totalorder %s18, 0
    %p191 = por %p189, %p190
    %p192 = scmp.ne.s32.totalorder %s178, %s179
    %p193 = scmp.eq.s32.totalorder %s19, 1
    %p194 = por %p192, %p193
    %p196 = scmp.ne.s32.totalorder %s179, %s195
    %p197 = scmp.eq.s32.totalorder %s19, 0
    %p198 = por %p196, %p197
    %p199 = scmp.le.s32.totalorder 1, %s13
    %p200 = scmp.lt.s32.totalorder %s13, 3
    %p201 = pnand %p199, %p200
    %p202 = pneg %p201
    // Predicated region
    $region9: #{bottleneck_forward.1} parent=5 // pred_check
      _
    $region10: #{bottleneck_forward.1} parent=5 // pred_check_branch
      %204 = sbr.rel (%p201) target = $region12
    $region11: #{bottleneck_forward.1} parent=5 // pred_region
      %s205 = ssub.s32 %s13, 1
      // Predicated region
      $region13: #{bottleneck_forward.1} parent=11 // pred_check
        %p206 = pneg %p60
      $region14: #{bottleneck_forward.1} parent=11 // pred_check_branch
        %208 = sbr.rel (%p206) target = $region16
      $region15: #{bottleneck_forward.1} parent=11 // pred_region
        _
      $region16: #{bottleneck_forward.1} parent=11 // pred_fallthru
        _
      // Predicated region
      $region17: #{bottleneck_forward.1} parent=11 // pred_check
        %p209 = pneg %p81
      $region18: #{bottleneck_forward.1} parent=11 // pred_check_branch
        %211 = sbr.rel (%p209) target = $region20
      $region19: #{bottleneck_forward.1} parent=11 // pred_region
        _
      $region20: #{bottleneck_forward.1} parent=11 // pred_fallthru
        _
      // Predicated region
      $region21: #{bottleneck_forward.1} parent=11 // pred_check
        %p212 = pneg %p102
      $region22: #{bottleneck_forward.1} parent=11 // pred_check_branch
        %214 = sbr.rel (%p212) target = $region24
      $region23: #{bottleneck_forward.1} parent=11 // pred_region
        _
      $region24: #{bottleneck_forward.1} parent=11 // pred_fallthru
        _
      // Predicated region
      $region25: #{bottleneck_forward.1} parent=11 // pred_check
        %p215 = pneg %p123
      $region26: #{bottleneck_forward.1} parent=11 // pred_check_branch
        %217 = sbr.rel (%p215) target = $region28
      $region27: #{bottleneck_forward.1} parent=11 // pred_region
        _
      $region28: #{bottleneck_forward.1} parent=11 // pred_fallthru
        _
      // Predicated region
      $region29: #{bottleneck_forward.1} parent=11 // pred_check
        %p218 = pneg %p144
      $region30: #{bottleneck_forward.1} parent=11 // pred_check_branch
        %220 = sbr.rel (%p218) target = $region32
      $region31: #{bottleneck_forward.1} parent=11 // pred_region
        _
      $region32: #{bottleneck_forward.1} parent=11 // pred_fallthru
        _
      // Predicated region
      $region33: #{bottleneck_forward.1} parent=11 // pred_check
        %p221 = pneg %p165
      $region34: #{bottleneck_forward.1} parent=11 // pred_check_branch
        %223 = sbr.rel (%p221) target = $region36
      $region35: #{bottleneck_forward.1} parent=11 // pred_region
        _
      $region36: #{bottleneck_forward.1} parent=11 // pred_fallthru
        _
    $region12: #{bottleneck_forward.1} parent=5 // pred_fallthru
      _
    %p224 = scmp.lt.s32.totalorder %s13, 2
    // Predicated region
    $region37: #{bottleneck_forward.1} parent=5 // pred_check
      %p225 = pneg %p224
    $region38: #{bottleneck_forward.1} parent=5 // pred_check_branch
      %227 = sbr.rel (%p225) target = $region40
    $region39: #{bottleneck_forward.1} parent=5 // pred_region
      // Predicated region
      $region41: #{bottleneck_forward.1} parent=39 // pred_check
        %p228 = pneg %p33
      $region42: #{bottleneck_forward.1} parent=39 // pred_check_branch
        %230 = sbr.rel (%p228) target = $region44
      $region43: #{bottleneck_forward.1} parent=39 // pred_region
        %p231 = scmp.lt.s32.totalorder %s13, 1
        %s232 = scalar_select %p231, %s13, 1
        %s233 = smul.addr %s232, 32
        %s234 = smul.addr %s233, 8
        %s235 = scalar_lea.vmem %s0, %s234
      $region44: #{bottleneck_forward.1} parent=39 // pred_fallthru
        _
    $region40: #{bottleneck_forward.1} parent=5 // pred_fallthru
      _
    %p236 = scmp.le.s32.totalorder 1, %s13
    %p237 = scmp.lt.s32.totalorder %s13, 3
    %p238 = pnand %p236, %p237
    %p239 = pneg %p238
    // Predicated region
    $region45: #{bottleneck_forward.1} parent=5 // pred_check
      _
    $region46: #{bottleneck_forward.1} parent=5 // pred_check_branch
      %241 = sbr.rel (%p238) target = $region48
    $region47: #{bottleneck_forward.1} parent=5 // pred_region
      %s242 = ssub.s32 %s13, 1
      %p243 = scmp.lt.s32.totalorder %s18, 1
      %s244 = scalar_select %p243, %s18, 1
      %s245 = smul.addr %s244, 32
      %s246 = smul.addr %s245, 8
      %s247 = scalar_lea.vmem %s0, %s246
      %p248 = pneg %p39
      %p249 = pneg %p36
      %p250 = pneg %p60
      %p251 = pneg %p57
      %p252 = pneg %p81
      %p253 = pneg %p78
      %p254 = pneg %p102
      %p255 = pneg %p99
      %p256 = pneg %p123
      %p257 = pneg %p120
      %p258 = pneg %p144
      %p259 = pneg %p141
      %p260 = pneg %p165
      %p261 = pneg %p162
      %p262 = pneg %p191
      %p263 = pneg %p188
      %p264 = scmp.lt.s32.totalorder %s18, 1
      %s265 = scalar_select %p264, %s18, 1
      %s266 = smul.addr %s265, 32
      %s267 = smul.addr %s266, 8
      %s268 = scalar_lea.vmem %s7, %s267
      %p269 = scmp.lt.s32.totalorder %s18, 1
      %s270 = scalar_select %p269, %s18, 1
      %s271 = smul.addr %s270, 32
      %s272 = smul.addr %s271, 8
      %s273 = scalar_lea.vmem %s0, %s272
      %p274 = scmp.lt.s32.totalorder %s18, 1
      %s275 = scalar_select %p274, %s18, 1
      %s276 = smul.addr %s275, 32
      %s277 = smul.addr %s276, 8
      %s278 = scalar_lea.vmem %s7, %s277
      %v279 = vld [vmem:[%s273] sm:$0xff]
      %v280 = vld [vmem:[%s273 + $0x8] sm:$0xff]
      %v281 = vld [vmem:[%s273 + $0x10] sm:$0xff]
      %v282 = vld [vmem:[%s273 + $0x18] sm:$0xff]
      %v283 = vld [vmem:[%s273 + $0x20] sm:$0xff]
      %v284 = vld [vmem:[%s273 + $0x28] sm:$0xff]
      %v285 = vld [vmem:[%s273 + $0x30] sm:$0xff]
      %v286 = vld [vmem:[%s273 + $0x38] sm:$0xff]
      %v287 = vld [vmem:[%s273 + $0x40] sm:$0xff]
      %v288 = vld [vmem:[%s273 + $0x48] sm:$0xff]
      %v289 = vld [vmem:[%s273 + $0x50] sm:$0xff]
      %v290 = vld [vmem:[%s273 + $0x58] sm:$0xff]
      %v291 = vld [vmem:[%s273 + $0x60] sm:$0xff]
      %v292 = vld [vmem:[%s273 + $0x68] sm:$0xff]
      %v293 = vld [vmem:[%s273 + $0x70] sm:$0xff]
      %v294 = vld [vmem:[%s273 + $0x78] sm:$0xff]
      %v295 = vld [vmem:[%s273 + $0x80] sm:$0xff]
      %v296 = vld [vmem:[%s273 + $0x88] sm:$0xff]
      %v297 = vld [vmem:[%s273 + $0x90] sm:$0xff]
      %v298 = vld [vmem:[%s273 + $0x98] sm:$0xff]
      %v299 = vld [vmem:[%s273 + $0xa0] sm:$0xff]
      %v300 = vld [vmem:[%s273 + $0xa8] sm:$0xff]
      %v301 = vld [vmem:[%s273 + $0xb0] sm:$0xff]
      %v302 = vld [vmem:[%s273 + $0xb8] sm:$0xff]
      %v303 = vld [vmem:[%s273 + $0xc0] sm:$0xff]
      %v304 = vld [vmem:[%s273 + $0xc8] sm:$0xff]
      %v305 = vld [vmem:[%s273 + $0xd0] sm:$0xff]
      %v306 = vld [vmem:[%s273 + $0xd8] sm:$0xff]
      %v307 = vld [vmem:[%s273 + $0xe0] sm:$0xff]
      %v308 = vld [vmem:[%s273 + $0xe8] sm:$0xff]
      %v309 = vld [vmem:[%s273 + $0xf0] sm:$0xff]
      %v310 = vld [vmem:[%s273 + $0xf8] sm:$0xff]
      %v311 = vld [vmem:[%s1] sm:$0xff]
      %v312 = vld [vmem:[%s1 + $0x8] sm:$0xff]
      %v313 = vld [vmem:[%s1 + $0x10] sm:$0xff]
      %v314 = vld [vmem:[%s1 + $0x18] sm:$0xff]
      %v315 = vld [vmem:[%s1 + $0x20] sm:$0xff]
      %v316 = vld [vmem:[%s1 + $0x28] sm:$0xff]
      %v317 = vld [vmem:[%s1 + $0x30] sm:$0xff]
      %v318 = vld [vmem:[%s1 + $0x38] sm:$0xff]
      %v319 = vld [vmem:[%s1 + $0x40] sm:$0xff]
      %v320 = vld [vmem:[%s1 + $0x48] sm:$0xff]
      %v321 = vld [vmem:[%s1 + $0x50] sm:$0xff]
      %v322 = vld [vmem:[%s1 + $0x58] sm:$0xff]
      %v323 = vld [vmem:[%s1 + $0x60] sm:$0xff]
      %v324 = vld [vmem:[%s1 + $0x68] sm:$0xff]
      %v325 = vld [vmem:[%s1 + $0x70] sm:$0xff]
      %v326 = vld [vmem:[%s1 + $0x78] sm:$0xff]
      %v327 = vld [vmem:[%s4] sm:$0x1]
      %v329 = vlaneseq
      %v330 = vshrl.u32 %v329, 7
      %v331 = vsub.s32 0, %v330
      %v332 = vrot.slane %v327, %v331
      %334 = vmatprep.subr.mxu0 0.0
      %335 = vmatpush1.msra.mxu0 %v311
      %336 = vmatprep.subr.mxu0 0.0
      %337 = vmatpush1.msra.mxu0 %v312
      %338 = vmatprep.subr.mxu0 0.0
      %339 = vmatpush1.msra.mxu0 %v313
      %340 = vmatprep.subr.mxu0 0.0
      %341 = vmatpush1.msra.mxu0 %v314
      %342 = vmatprep.subr.mxu0 0.0
      %343 = vmatpush1.msra.mxu0 %v315
      %344 = vmatprep.subr.mxu0 0.0
      %345 = vmatpush1.msra.mxu0 %v316
      %346 = vmatprep.subr.mxu0 0.0
      %347 = vmatpush1.msra.mxu0 %v317
      %348 = vmatprep.subr.mxu0 0.0
      %349 = vmatpush1.msra.mxu0 %v318
      %350 = vmatprep.subr.mxu0 0.0
      %351 = vmatpush1.msra.mxu0 %v319
      %352 = vmatprep.subr.mxu0 0.0
      %353 = vmatpush1.msra.mxu0 %v320
      %354 = vmatprep.subr.mxu0 0.0
      %355 = vmatpush1.msra.mxu0 %v321
      %356 = vmatprep.subr.mxu0 0.0
      %357 = vmatpush1.msra.mxu0 %v322
      %358 = vmatprep.subr.mxu0 0.0
      %359 = vmatpush1.msra.mxu0 %v323
      %360 = vmatprep.subr.mxu0 0.0
      %361 = vmatpush1.msra.mxu0 %v324
      %362 = vmatprep.subr.mxu0 0.0
      %363 = vmatpush1.msra.mxu0 %v325
      %364 = vmatprep.subr.mxu0 0.0
      %365 = vmatpush1.msra.mxu0 %v326
      %366 = vmatprep.subr.mxu0 0.0
      %367 = vmatpush1.msra.mxu0 0.0
      %368 = vmatprep.subr.mxu0 0.0
      %369 = vmatpush1.msra.mxu0 0.0
      %370 = vmatprep.subr.mxu0 0.0
      %371 = vmatpush1.msra.mxu0 0.0
      %372 = vmatprep.subr.mxu0 0.0
      %373 = vmatpush1.msra.mxu0 0.0
      %374 = vmatprep.subr.mxu0 0.0
      %375 = vmatpush1.msra.mxu0 0.0
      %376 = vmatprep.subr.mxu0 0.0
      %377 = vmatpush1.msra.mxu0 0.0
      %378 = vmatprep.subr.mxu0 0.0
      %379 = vmatpush1.msra.mxu0 0.0
      %380 = vmatprep.subr.mxu0 0.0
      %381 = vmatpush1.msra.mxu0 0.0
      %382 = vmatprep.subr.mxu0 0.0
      %383 = vmatpush1.msra.mxu0 0.0
      %384 = vmatprep.subr.mxu0 0.0
      %385 = vmatpush1.msra.mxu0 0.0
      %386 = vmatprep.subr.mxu0 0.0
      %387 = vmatpush1.msra.mxu0 0.0
      %388 = vmatprep.subr.mxu0 0.0
      %389 = vmatpush1.msra.mxu0 0.0
      %390 = vmatprep.subr.mxu0 0.0
      %391 = vmatpush1.msra.mxu0 0.0
      %392 = vmatprep.subr.mxu0 0.0
      %393 = vmatpush1.msra.mxu0 0.0
      %394 = vmatprep.subr.mxu0 0.0
      %395 = vmatpush1.msra.mxu0 0.0
      %396 = vmatprep.subr.mxu0 0.0
      %397 = vmatpush1.msra.mxu0 0.0
      %398 = vmatprep.mubr.f32.mxu0 0.0
      %399 = vmatmul.mubr.f32.gmra.mrb[0].mxu0 %v279
      %v400 = vpop.f32.mrb[0].mxu0
      %v401 = vadd.f32 %v332, %v400
      %v402 = vpop.f32.mrb[0].mxu0
      %403 = vmatprep.mubr.f32.mxu0 0.0
      %404 = vmatmul.mubr.f32.gmra.mrb[0].mxu0 %v280
      %v405 = vpop.f32.mrb[0].mxu0
      %v406 = vadd.f32 %v332, %v405
      %v407 = vpop.f32.mrb[0].mxu0
      %408 = vmatprep.mubr.f32.mxu0 0.0
      %409 = vmatmul.mubr.f32.gmra.mrb[0].mxu0 %v281
      %v410 = vpop.f32.mrb[0].mxu0
      %v411 = vadd.f32 %v332, %v410
      %v412 = vpop.f32.mrb[0].mxu0
      %413 = vmatprep.mubr.f32.mxu0 0.0
      %414 = vmatmul.mubr.f32.gmra.mrb[0].mxu0 %v282
      %v415 = vpop.f32.mrb[0].mxu0
      %v416 = vadd.f32 %v332, %v415
      %v417 = vpop.f32.mrb[0].mxu0
      %418 = vmatprep.mubr.f32.mxu0 0.0
      %419 = vmatmul.mubr.f32.gmra.mrb[0].mxu0 %v283
      %v420 = vpop.f32.mrb[0].mxu0
      %v421 = vadd.f32 %v332, %v420
      %v422 = vpop.f32.mrb[0].mxu0
      %423 = vmatprep.mubr.f32.mxu0 0.0
      %424 = vmatmul.mubr.f32.gmra.mrb[0].mxu0 %v284
      %v425 = vpop.f32.mrb[0].mxu0
      %v426 = vadd.f32 %v332, %v425
      %v427 = vpop.f32.mrb[0].mxu0
      %428 = vmatprep.mubr.f32.mxu0 0.0
      %429 = vmatmul.mubr.f32.gmra.mrb[0].mxu0 %v285
      %v430 = vpop.f32.mrb[0].mxu0
      %v431 = vadd.f32 %v332, %v430
      %v432 = vpop.f32.mrb[0].mxu0
      %433 = vmatprep.mubr.f32.mxu0 0.0
      %434 = vmatmul.mubr.f32.gmra.mrb[0].mxu0 %v286
      %v435 = vpop.f32.mrb[0].mxu0
      %v436 = vadd.f32 %v332, %v435
      %v437 = vpop.f32.mrb[0].mxu0
      %438 = vmatprep.mubr.f32.mxu0 0.0
      %439 = vmatmul.mubr.f32.gmra.mrb[0].mxu0 %v287
      %v440 = vpop.f32.mrb[0].mxu0
      %v441 = vadd.f32 %v332, %v440
      %v442 = vpop.f32.mrb[0].mxu0
      %443 = vmatprep.mubr.f32.mxu0 0.0
      %444 = vmatmul.mubr.f32.gmra.mrb[0].mxu0 %v288
      %v445 = vpop.f32.mrb[0].mxu0
      %v446 = vadd.f32 %v332, %v445
      %v447 = vpop.f32.mrb[0].mxu0
      %448 = vmatprep.mubr.f32.mxu0 0.0
      %449 = vmatmul.mubr.f32.gmra.mrb[0].mxu0 %v289
      %v450 = vpop.f32.mrb[0].mxu0
      %v451 = vadd.f32 %v332, %v450
      %v452 = vpop.f32.mrb[0].mxu0
      %453 = vmatprep.mubr.f32.mxu0 0.0
      %454 = vmatmul.mubr.f32.gmra.mrb[0].mxu0 %v290
      %v455 = vpop.f32.mrb[0].mxu0
      %v456 = vadd.f32 %v332, %v455
      %v457 = vpop.f32.mrb[0].mxu0
      %458 = vmatprep.mubr.f32.mxu0 0.0
      %459 = vmatmul.mubr.f32.gmra.mrb[0].mxu0 %v291
      %v460 = vpop.f32.mrb[0].mxu0
      %v461 = vadd.f32 %v332, %v460
      %v462 = vpop.f32.mrb[0].mxu0
      %463 = vmatprep.mubr.f32.mxu0 0.0
      %464 = vmatmul.mubr.f32.gmra.mrb[0].mxu0 %v292
      %v465 = vpop.f32.mrb[0].mxu0
      %v466 = vadd.f32 %v332, %v465
      %v467 = vpop.f32.mrb[0].mxu0
      %468 = vmatprep.mubr.f32.mxu0 0.0
      %469 = vmatmul.mubr.f32.gmra.mrb[0].mxu0 %v293
      %v470 = vpop.f32.mrb[0].mxu0
      %v471 = vadd.f32 %v332, %v470
      %v472 = vpop.f32.mrb[0].mxu0
      %473 = vmatprep.mubr.f32.mxu0 0.0
      %474 = vmatmul.mubr.f32.gmra.mrb[0].mxu0 %v294
      %v475 = vpop.f32.mrb[0].mxu0
      %v476 = vadd.f32 %v332, %v475
      %v477 = vpop.f32.mrb[0].mxu0
      %478 = vmatprep.mubr.f32.mxu0 0.0
      %479 = vmatmul.mubr.f32.gmra.mrb[0].mxu0 %v295
      %v480 = vpop.f32.mrb[0].mxu0
      %v481 = vadd.f32 %v332, %v480
      %v482 = vpop.f32.mrb[0].mxu0
      %483 = vmatprep.mubr.f32.mxu0 0.0
      %484 = vmatmul.mubr.f32.gmra.mrb[0].mxu0 %v296
      %v485 = vpop.f32.mrb[0].mxu0
      %v486 = vadd.f32 %v332, %v485
      %v487 = vpop.f32.mrb[0].mxu0
      %488 = vmatprep.mubr.f32.mxu0 0.0
      %489 = vmatmul.mubr.f32.gmra.mrb[0].mxu0 %v297
      %v490 = vpop.f32.mrb[0].mxu0
      %v491 = vadd.f32 %v332, %v490
      %v492 = vpop.f32.mrb[0].mxu0
      %493 = vmatprep.mubr.f32.mxu0 0.0
      %494 = vmatmul.mubr.f32.gmra.mrb[0].mxu0 %v298
      %v495 = vpop.f32.mrb[0].mxu0
      %v496 = vadd.f32 %v332, %v495
      %v497 = vpop.f32.mrb[0].mxu0
      %498 = vmatprep.mubr.f32.mxu0 0.0
      %499 = vmatmul.mubr.f32.gmra.mrb[0].mxu0 %v299
      %v500 = vpop.f32.mrb[0].mxu0
      %v501 = vadd.f32 %v332, %v500
      %v502 = vpop.f32.mrb[0].mxu0
      %503 = vmatprep.mubr.f32.mxu0 0.0
      %504 = vmatmul.mubr.f32.gmra.mrb[0].mxu0 %v300
      %v505 = vpop.f32.mrb[0].mxu0
      %v506 = vadd.f32 %v332, %v505
      %v507 = vpop.f32.mrb[0].mxu0
      %508 = vmatprep.mubr.f32.mxu0 0.0
      %509 = vmatmul.mubr.f32.gmra.mrb[0].mxu0 %v301
      %v510 = vpop.f32.mrb[0].mxu0
      %v511 = vadd.f32 %v332, %v510
      %v512 = vpop.f32.mrb[0].mxu0
      %513 = vmatprep.mubr.f32.mxu0 0.0
      %514 = vmatmul.mubr.f32.gmra.mrb[0].mxu0 %v302
      %v515 = vpop.f32.mrb[0].mxu0
      %v516 = vadd.f32 %v332, %v515
      %v517 = vpop.f32.mrb[0].mxu0
      %518 = vmatprep.mubr.f32.mxu0 0.0
      %519 = vmatmul.mubr.f32.gmra.mrb[0].mxu0 %v303
      %v520 = vpop.f32.mrb[0].mxu0
      %v521 = vadd.f32 %v332, %v520
      %v522 = vpop.f32.mrb[0].mxu0
      %523 = vmatprep.mubr.f32.mxu0 0.0
      %524 = vmatmul.mubr.f32.gmra.mrb[0].mxu0 %v304
      %v525 = vpop.f32.mrb[0].mxu0
      %v526 = vadd.f32 %v332, %v525
      %v527 = vpop.f32.mrb[0].mxu0
      %528 = vmatprep.mubr.f32.mxu0 0.0
      %529 = vmatmul.mubr.f32.gmra.mrb[0].mxu0 %v305
      %v530 = vpop.f32.mrb[0].mxu0
      %v531 = vadd.f32 %v332, %v530
      %v532 = vpop.f32.mrb[0].mxu0
      %533 = vmatprep.mubr.f32.mxu0 0.0
      %534 = vmatmul.mubr.f32.gmra.mrb[0].mxu0 %v306
      %v535 = vpop.f32.mrb[0].mxu0
      %v536 = vadd.f32 %v332, %v535
      %v537 = vpop.f32.mrb[0].mxu0
      %538 = vmatprep.mubr.f32.mxu0 0.0
      %539 = vmatmul.mubr.f32.gmra.mrb[0].mxu0 %v307
      %v540 = vpop.f32.mrb[0].mxu0
      %v541 = vadd.f32 %v332, %v540
      %v542 = vpop.f32.mrb[0].mxu0
      %543 = vmatprep.mubr.f32.mxu0 0.0
      %544 = vmatmul.mubr.f32.gmra.mrb[0].mxu0 %v308
      %v545 = vpop.f32.mrb[0].mxu0
      %v546 = vadd.f32 %v332, %v545
      %v547 = vpop.f32.mrb[0].mxu0
      %548 = vmatprep.mubr.f32.mxu0 0.0
      %549 = vmatmul.mubr.f32.gmra.mrb[0].mxu0 %v309
      %v550 = vpop.f32.mrb[0].mxu0
      %v551 = vadd.f32 %v332, %v550
      %v552 = vpop.f32.mrb[0].mxu0
      %553 = vmatprep.mubr.f32.mxu0 0.0
      %554 = vmatmul.mubr.f32.gmra.mrb[0].mxu0 %v310
      %v555 = vpop.f32.mrb[0].mxu0
      %v556 = vadd.f32 %v332, %v555
      %v557 = vpop.f32.mrb[0].mxu0
      %558 = vdwg.mxu0
      %v559 = vmax.f32 %v401, 0.0
      %v560 = vmax.f32 %v406, 0.0
      %v561 = vmax.f32 %v411, 0.0
      %v562 = vmax.f32 %v416, 0.0
      %v563 = vmax.f32 %v421, 0.0
      %v564 = vmax.f32 %v426, 0.0
      %v565 = vmax.f32 %v431, 0.0
      %v566 = vmax.f32 %v436, 0.0
      %v567 = vmax.f32 %v441, 0.0
      %v568 = vmax.f32 %v446, 0.0
      %v569 = vmax.f32 %v451, 0.0
      %v570 = vmax.f32 %v456, 0.0
      %v571 = vmax.f32 %v461, 0.0
      %v572 = vmax.f32 %v466, 0.0
      %v573 = vmax.f32 %v471, 0.0
      %v574 = vmax.f32 %v476, 0.0
      %v575 = vmax.f32 %v481, 0.0
      %v576 = vmax.f32 %v486, 0.0
      %v577 = vmax.f32 %v491, 0.0
      %v578 = vmax.f32 %v496, 0.0
      %v579 = vmax.f32 %v501, 0.0
      %v580 = vmax.f32 %v506, 0.0
      %v581 = vmax.f32 %v511, 0.0
      %v582 = vmax.f32 %v516, 0.0
      %v583 = vmax.f32 %v521, 0.0
      %v584 = vmax.f32 %v526, 0.0
      %v585 = vmax.f32 %v531, 0.0
      %v586 = vmax.f32 %v536, 0.0
      %v587 = vmax.f32 %v541, 0.0
      %v588 = vmax.f32 %v546, 0.0
      %v589 = vmax.f32 %v551, 0.0
      %v590 = vmax.f32 %v556, 0.0
      %v591 = vrot.slane %v559, 7
      %v592 = vrot.slane %v560, 7
      %v593 = vrot.slane %v561, 7
      %v594 = vrot.slane %v562, 7
      %v595 = vrot.slane %v563, 7
      %v596 = vrot.slane %v564, 7
      %v597 = vrot.slane %v565, 7
      %v598 = vrot.slane %v566, 7
      %v599 = vrot.slane %v567, 7
      %v600 = vrot.slane %v568, 7
      %v601 = vrot.slane %v569, 7
      %v602 = vrot.slane %v570, 7
      %v603 = vrot.slane %v571, 7
      %v604 = vrot.slane %v572, 7
      %v605 = vrot.slane %v573, 7
      %v606 = vrot.slane %v574, 7
      %v607 = vrot.slane %v575, 7
      %v608 = vrot.slane %v576, 7
      %v609 = vrot.slane %v577, 7
      %v610 = vrot.slane %v578, 7
      %v611 = vrot.slane %v579, 7
      %v612 = vrot.slane %v580, 7
      %v613 = vrot.slane %v581, 7
      %v614 = vrot.slane %v582, 7
      %v615 = vrot.slane %v583, 7
      %v616 = vrot.slane %v584, 7
      %v617 = vrot.slane %v585, 7
      %v618 = vrot.slane %v586, 7
      %v619 = vrot.slane %v587, 7
      %v620 = vrot.slane %v588, 7
      %v621 = vrot.slane %v589, 7
      %v622 = vrot.slane %v590, 7
      %v623 = vlaneseq
      %v624 = vshrl.u32 %v623, 7
      %vm625 = vcmp.lt.s32.totalorder %v624, 1
      %v626 = vsel %vm625, %v621, %v622
      %v627 = vsel %vm625, %v620, %v621
      %v628 = vsel %vm625, %v619, %v620
      %v629 = vsel %vm625, %v618, %v619
      %v630 = vsel %vm625, %v617, %v618
      %v631 = vsel %vm625, %v616, %v617
      %v632 = vsel %vm625, %v615, %v616
      %v633 = vsel %vm625, %v614, %v615
      %v634 = vsel %vm625, %v613, %v614
      %v635 = vsel %vm625, %v612, %v613
      %v636 = vsel %vm625, %v611, %v612
      %v637 = vsel %vm625, %v610, %v611
      %v638 = vsel %vm625, %v609, %v610
      %v639 = vsel %vm625, %v608, %v609
      %v640 = vsel %vm625, %v607, %v608
      %v641 = vsel %vm625, %v606, %v607
      %v642 = vsel %vm625, %v605, %v606
      %v643 = vsel %vm625, %v604, %v605
      %v644 = vsel %vm625, %v603, %v604
      %v645 = vsel %vm625, %v602, %v603
      %v646 = vsel %vm625, %v601, %v602
      %v647 = vsel %vm625, %v600, %v601
      %v648 = vsel %vm625, %v599, %v600
      %v649 = vsel %vm625, %v598, %v599
      %v650 = vsel %vm625, %v597, %v598
      %v651 = vsel %vm625, %v596, %v597
      %v652 = vsel %vm625, %v595, %v596
      %v653 = vsel %vm625, %v594, %v595
      %v654 = vsel %vm625, %v593, %v594
      %v655 = vsel %vm625, %v592, %v593
      %v656 = vsel %vm625, %v591, %v592
      %v657 = vsel %vm625, %v622, %v591
      %v658 = vrot.slane %v559, 1
      %v659 = vrot.slane %v560, 1
      %v660 = vrot.slane %v561, 1
      %v661 = vrot.slane %v562, 1
      %v662 = vrot.slane %v563, 1
      %v663 = vrot.slane %v564, 1
      %v664 = vrot.slane %v565, 1
      %v665 = vrot.slane %v566, 1
      %v666 = vrot.slane %v567, 1
      %v667 = vrot.slane %v568, 1
      %v668 = vrot.slane %v569, 1
      %v669 = vrot.slane %v570, 1
      %v670 = vrot.slane %v571, 1
      %v671 = vrot.slane %v572, 1
      %v672 = vrot.slane %v573, 1
      %v673 = vrot.slane %v574, 1
      %v674 = vrot.slane %v575, 1
      %v675 = vrot.slane %v576, 1
      %v676 = vrot.slane %v577, 1
      %v677 = vrot.slane %v578, 1
      %v678 = vrot.slane %v579, 1
      %v679 = vrot.slane %v580, 1
      %v680 = vrot.slane %v581, 1
      %v681 = vrot.slane %v582, 1
      %v682 = vrot.slane %v583, 1
      %v683 = vrot.slane %v584, 1
      %v684 = vrot.slane %v585, 1
      %v685 = vrot.slane %v586, 1
      %v686 = vrot.slane %v587, 1
      %v687 = vrot.slane %v588, 1
      %v688 = vrot.slane %v589, 1
      %v689 = vrot.slane %v590, 1
      %vm690 = vcmp.lt.s32.totalorder %v624, 7
      %v691 = vsel %vm690, %v688, %v689
      %v692 = vsel %vm690, %v687, %v688
      %v693 = vsel %vm690, %v686, %v687
      %v694 = vsel %vm690, %v685, %v686
      %v695 = vsel %vm690, %v684, %v685
      %v696 = vsel %vm690, %v683, %v684
      %v697 = vsel %vm690, %v682, %v683
      %v698 = vsel %vm690, %v681, %v682
      %v699 = vsel %vm690, %v680, %v681
      %v700 = vsel %vm690, %v679, %v680
      %v701 = vsel %vm690, %v678, %v679
      %v702 = vsel %vm690, %v677, %v678
      %v703 = vsel %vm690, %v676, %v677
      %v704 = vsel %vm690, %v675, %v676
      %v705 = vsel %vm690, %v674, %v675
      %v706 = vsel %vm690, %v673, %v674
      %v707 = vsel %vm690, %v672, %v673
      %v708 = vsel %vm690, %v671, %v672
      %v709 = vsel %vm690, %v670, %v671
      %v710 = vsel %vm690, %v669, %v670
      %v711 = vsel %vm690, %v668, %v669
      %v712 = vsel %vm690, %v667, %v668
      %v713 = vsel %vm690, %v666, %v667
      %v714 = vsel %vm690, %v665, %v666
      %v715 = vsel %vm690, %v664, %v665
      %v716 = vsel %vm690, %v663, %v664
      %v717 = vsel %vm690, %v662, %v663
      %v718 = vsel %vm690, %v661, %v662
      %v719 = vsel %vm690, %v660, %v661
      %v720 = vsel %vm690, %v659, %v660
      %v721 = vsel %vm690, %v658, %v659
      %v722 = vsel %vm690, %v689, %v658
      %723 = vst [vmem:[#allocation2] sm:$0xff] 0.0
      %724 = vst [vmem:[#allocation2 + $0x8] sm:$0xff] 0.0
      %725 = vst [vmem:[#allocation2 + $0x10] sm:$0xff] 0.0
      %726 = vst [vmem:[#allocation2 + $0x18] sm:$0xff] 0.0
      %727 = vst [vmem:[#allocation2 + $0x20] sm:$0xff] 0.0
      %728 = vst [vmem:[#allocation2 + $0x28] sm:$0xff] 0.0
      %s729 = scalar_lea.vmem [#allocation2], 816
      %730 = vst [vmem:[%s729] sm:$0xff] 0.0
      %731 = vst [vmem:[%s729 + $0x8] sm:$0xff] 0.0
      %732 = vst [vmem:[%s729 + $0x10] sm:$0xff] 0.0
      %733 = vst [vmem:[%s729 + $0x18] sm:$0xff] 0.0
      %734 = vst [vmem:[%s729 + $0x20] sm:$0xff] 0.0
      %735 = vst [vmem:[%s729 + $0x28] sm:$0xff] 0.0
      %s736 = scalar_lea.vmem [#allocation2], 48
      %737 = vst [vmem:[%s736] sm:$0xff] %v657
      %738 = vst [vmem:[%s736 + $0x18] sm:$0xff] %v656
      %739 = vst [vmem:[%s736 + $0x30] sm:$0xff] %v655
      %740 = vst [vmem:[%s736 + $0x48] sm:$0xff] %v654
      %741 = vst [vmem:[%s736 + $0x60] sm:$0xff] %v653
      %742 = vst [vmem:[%s736 + $0x78] sm:$0xff] %v652
      %743 = vst [vmem:[%s736 + $0x90] sm:$0xff] %v651
      %744 = vst [vmem:[%s736 + $0xa8] sm:$0xff] %v650
      %745 = vst [vmem:[%s736 + $0xc0] sm:$0xff] %v649
      %746 = vst [vmem:[%s736 + $0xd8] sm:$0xff] %v648
      %747 = vst [vmem:[%s736 + $0xf0] sm:$0xff] %v647
      %748 = vst [vmem:[%s736 + $0x108] sm:$0xff] %v646
      %749 = vst [vmem:[%s736 + $0x120] sm:$0xff] %v645
      %750 = vst [vmem:[%s736 + $0x138] sm:$0xff] %v644
      %751 = vst [vmem:[%s736 + $0x150] sm:$0xff] %v643
      %752 = vst [vmem:[%s736 + $0x168] sm:$0xff] %v642
      %753 = vst [vmem:[%s736 + $0x180] sm:$0xff] %v641
      %754 = vst [vmem:[%s736 + $0x198] sm:$0xff] %v640
      %755 = vst [vmem:[%s736 + $0x1b0] sm:$0xff] %v639
      %756 = vst [vmem:[%s736 + $0x1c8] sm:$0xff] %v638
      %757 = vst [vmem:[%s736 + $0x1e0] sm:$0xff] %v637
      %758 = vst [vmem:[%s736 + $0x1f8] sm:$0xff] %v636
      %759 = vst [vmem:[%s736 + $0x210] sm:$0xff] %v635
      %760 = vst [vmem:[%s736 + $0x228] sm:$0xff] %v634
      %761 = vst [vmem:[%s736 + $0x240] sm:$0xff] %v633
      %762 = vst [vmem:[%s736 + $0x258] sm:$0xff] %v632
      %763 = vst [vmem:[%s736 + $0x270] sm:$0xff] %v631
      %764 = vst [vmem:[%s736 + $0x288] sm:$0xff] %v630
      %765 = vst [vmem:[%s736 + $0x2a0] sm:$0xff] %v629
      %766 = vst [vmem:[%s736 + $0x2b8] sm:$0xff] %v628
      %767 = vst [vmem:[%s736 + $0x2d0] sm:$0xff] %v627
      %768 = vst [vmem:[%s736 + $0x2e8] sm:$0xff] %v626
      %769 = vst [vmem:[%s736 + $0x8] sm:$0xff] %v559
      %770 = vst [vmem:[%s736 + $0x20] sm:$0xff] %v560
      %771 = vst [vmem:[%s736 + $0x38] sm:$0xff] %v561
      %772 = vst [vmem:[%s736 + $0x50] sm:$0xff] %v562
      %773 = vst [vmem:[%s736 + $0x68] sm:$0xff] %v563
      %774 = vst [vmem:[%s736 + $0x80] sm:$0xff] %v564
      %775 = vst [vmem:[%s736 + $0x98] sm:$0xff] %v565
      %776 = vst [vmem:[%s736 + $0xb0] sm:$0xff] %v566
      %777 = vst [vmem:[%s736 + $0xc8] sm:$0xff] %v567
      %778 = vst [vmem:[%s736 + $0xe0] sm:$0xff] %v568
      %779 = vst [vmem:[%s736 + $0xf8] sm:$0xff] %v569
      %780 = vst [vmem:[%s736 + $0x110] sm:$0xff] %v570
      %781 = vst [vmem:[%s736 + $0x128] sm:$0xff] %v571
      %782 = vst [vmem:[%s736 + $0x140] sm:$0xff] %v572
      %783 = vst [vmem:[%s736 + $0x158] sm:$0xff] %v573
      %784 = vst [vmem:[%s736 + $0x170] sm:$0xff] %v574
      %785 = vst [vmem:[%s736 + $0x188] sm:$0xff] %v575
      %786 = vst [vmem:[%s736 + $0x1a0] sm:$0xff] %v576
      %787 = vst [vmem:[%s736 + $0x1b8] sm:$0xff] %v577
      %788 = vst [vmem:[%s736 + $0x1d0] sm:$0xff] %v578
      %789 = vst [vmem:[%s736 + $0x1e8] sm:$0xff] %v579
      %790 = vst [vmem:[%s736 + $0x200] sm:$0xff] %v580
      %791 = vst [vmem:[%s736 + $0x218] sm:$0xff] %v581
      %792 = vst [vmem:[%s736 + $0x230] sm:$0xff] %v582
      %793 = vst [vmem:[%s736 + $0x248] sm:$0xff] %v583
      %794 = vst [vmem:[%s736 + $0x260] sm:$0xff] %v584
      %795 = vst [vmem:[%s736 + $0x278] sm:$0xff] %v585
      %796 = vst [vmem:[%s736 + $0x290] sm:$0xff] %v586
      %797 = vst [vmem:[%s736 + $0x2a8] sm:$0xff] %v587
      %798 = vst [vmem:[%s736 + $0x2c0] sm:$0xff] %v588
      %799 = vst [vmem:[%s736 + $0x2d8] sm:$0xff] %v589
      %800 = vst [vmem:[%s736 + $0x2f0] sm:$0xff] %v590
      %801 = vst [vmem:[%s736 + $0x10] sm:$0xff] %v721
      %802 = vst [vmem:[%s736 + $0x28] sm:$0xff] %v720
      %803 = vst [vmem:[%s736 + $0x40] sm:$0xff] %v719
      %804 = vst [vmem:[%s736 + $0x58] sm:$0xff] %v718
      %805 = vst [vmem:[%s736 + $0x70] sm:$0xff] %v717
      %806 = vst [vmem:[%s736 + $0x88] sm:$0xff] %v716
      %807 = vst [vmem:[%s736 + $0xa0] sm:$0xff] %v715
      %808 = vst [vmem:[%s736 + $0xb8] sm:$0xff] %v714
      %809 = vst [vmem:[%s736 + $0xd0] sm:$0xff] %v713
      %810 = vst [vmem:[%s736 + $0xe8] sm:$0xff] %v712
      %811 = vst [vmem:[%s736 + $0x100] sm:$0xff] %v711
      %812 = vst [vmem:[%s736 + $0x118] sm:$0xff] %v710
      %813 = vst [vmem:[%s736 + $0x130] sm:$0xff] %v709
      %814 = vst [vmem:[%s736 + $0x148] sm:$0xff] %v708
      %815 = vst [vmem:[%s736 + $0x160] sm:$0xff] %v707
      %816 = vst [vmem:[%s736 + $0x178] sm:$0xff] %v706
      %817 = vst [vmem:[%s736 + $0x190] sm:$0xff] %v705
      %818 = vst [vmem:[%s736 + $0x1a8] sm:$0xff] %v704
      %819 = vst [vmem:[%s736 + $0x1c0] sm:$0xff] %v703
      %820 = vst [vmem:[%s736 + $0x1d8] sm:$0xff] %v702
      %821 = vst [vmem:[%s736 + $0x1f0] sm:$0xff] %v701
      %822 = vst [vmem:[%s736 + $0x208] sm:$0xff] %v700
      %823 = vst [vmem:[%s736 + $0x220] sm:$0xff] %v699
      %824 = vst [vmem:[%s736 + $0x238] sm:$0xff] %v698
      %825 = vst [vmem:[%s736 + $0x250] sm:$0xff] %v697
      %826 = vst [vmem:[%s736 + $0x268] sm:$0xff] %v696
      %827 = vst [vmem:[%s736 + $0x280] sm:$0xff] %v695
      %828 = vst [vmem:[%s736 + $0x298] sm:$0xff] %v694
      %829 = vst [vmem:[%s736 + $0x2b0] sm:$0xff] %v693
      %830 = vst [vmem:[%s736 + $0x2c8] sm:$0xff] %v692
      %831 = vst [vmem:[%s736 + $0x2e0] sm:$0xff] %v691
      %832 = vst [vmem:[%s736 + $0x2f8] sm:$0xff] %v722
      %833 = vst [vmem:[%s736] sm:$0x1] 0.0
      %834 = vst [vmem:[%s736 + $0x30] sm:$0x1] 0.0
      %835 = vst [vmem:[%s736 + $0x60] sm:$0x1] 0.0
      %836 = vst [vmem:[%s736 + $0x90] sm:$0x1] 0.0
      %837 = vst [vmem:[%s736 + $0xc0] sm:$0x1] 0.0
      %838 = vst [vmem:[%s736 + $0xf0] sm:$0x1] 0.0
      %839 = vst [vmem:[%s736 + $0x120] sm:$0x1] 0.0
      %840 = vst [vmem:[%s736 + $0x150] sm:$0x1] 0.0
      %841 = vst [vmem:[%s736 + $0x180] sm:$0x1] 0.0
      %842 = vst [vmem:[%s736 + $0x1b0] sm:$0x1] 0.0
      %843 = vst [vmem:[%s736 + $0x1e0] sm:$0x1] 0.0
      %844 = vst [vmem:[%s736 + $0x210] sm:$0x1] 0.0
      %845 = vst [vmem:[%s736 + $0x240] sm:$0x1] 0.0
      %846 = vst [vmem:[%s736 + $0x270] sm:$0x1] 0.0
      %847 = vst [vmem:[%s736 + $0x2a0] sm:$0x1] 0.0
      %848 = vst [vmem:[%s736 + $0x2d0] sm:$0x1] 0.0
      %849 = vst [vmem:[%s736 + $0x2f] sm:$0x1] 0.0
      %850 = vst [vmem:[%s736 + $0x5f] sm:$0x1] 0.0
      %851 = vst [vmem:[%s736 + $0x8f] sm:$0x1] 0.0
      %852 = vst [vmem:[%s736 + $0xbf] sm:$0x1] 0.0
      %853 = vst [vmem:[%s736 + $0xef] sm:$0x1] 0.0
      %854 = vst [vmem:[%s736 + $0x11f] sm:$0x1] 0.0
      %855 = vst [vmem:[%s736 + $0x14f] sm:$0x1] 0.0
      %856 = vst [vmem:[%s736 + $0x17f] sm:$0x1] 0.0
      %857 = vst [vmem:[%s736 + $0x1af] sm:$0x1] 0.0
      %858 = vst [vmem:[%s736 + $0x1df] sm:$0x1] 0.0
      %859 = vst [vmem:[%s736 + $0x20f] sm:$0x1] 0.0
      %860 = vst [vmem:[%s736 + $0x23f] sm:$0x1] 0.0
      %861 = vst [vmem:[%s736 + $0x26f] sm:$0x1] 0.0
      %862 = vst [vmem:[%s736 + $0x29f] sm:$0x1] 0.0
      %863 = vst [vmem:[%s736 + $0x2cf] sm:$0x1] 0.0
      %864 = vst [vmem:[%s736 + $0x2ff] sm:$0x1] 0.0
      %v865 = vld [vmem:[#allocation2] sm:$0xff]
      %v866 = vld [vmem:[#allocation2 + $0x8] sm:$0xff]
      %v867 = vld [vmem:[#allocation2 + $0x10] sm:$0xff]
      %v868 = vld [vmem:[#allocation2 + $0x18] sm:$0xff]
      %v869 = vld [vmem:[#allocation2 + $0x20] sm:$0xff]
      %v870 = vld [vmem:[#allocation2 + $0x28] sm:$0xff]
      %v871 = vld [vmem:[#allocation2 + $0x30] sm:$0xff]
      %v872 = vld [vmem:[#allocation2 + $0x38] sm:$0xff]
      %v873 = vld [vmem:[#allocation2 + $0x40] sm:$0xff]
      %v874 = vld [vmem:[#allocation2 + $0x48] sm:$0xff]
      %v875 = vld [vmem:[#allocation2 + $0x50] sm:$0xff]
      %v876 = vld [vmem:[#allocation2 + $0x58] sm:$0xff]
      %v877 = vld [vmem:[#allocation2 + $0x60] sm:$0xff]
      %v878 = vld [vmem:[#allocation2 + $0x68] sm:$0xff]
      %v879 = vld [vmem:[#allocation2 + $0x70] sm:$0xff]
      %v880 = vld [vmem:[#allocation2 + $0x78] sm:$0xff]
      %v881 = vld [vmem:[#allocation2 + $0x80] sm:$0xff]
      %v882 = vld [vmem:[#allocation2 + $0x88] sm:$0xff]
      %v883 = vld [vmem:[#allocation2 + $0x90] sm:$0xff]
      %v884 = vld [vmem:[#allocation2 + $0x98] sm:$0xff]
      %v885 = vld [vmem:[#allocation2 + $0xa0] sm:$0xff]
      %v886 = vld [vmem:[#allocation2 + $0xa8] sm:$0xff]
      %v887 = vld [vmem:[#allocation2 + $0xb0] sm:$0xff]
      %v888 = vld [vmem:[#allocation2 + $0xb8] sm:$0xff]
      %v889 = vld [vmem:[#allocation2 + $0xc0] sm:$0xff]
      %v890 = vld [vmem:[#allocation2 + $0xc8] sm:$0xff]
      %v891 = vld [vmem:[#allocation2 + $0xd0] sm:$0xff]
      %v892 = vld [vmem:[#allocation2 + $0xd8] sm:$0xff]
      %v893 = vld [vmem:[#allocation2 + $0xe0] sm:$0xff]
      %v894 = vld [vmem:[#allocation2 + $0xe8] sm:$0xff]
      %v895 = vld [vmem:[#allocation2 + $0xf0] sm:$0xff]
      %v896 = vld [vmem:[#allocation2 + $0xf8] sm:$0xff]
      %v897 = vld [vmem:[#allocation2 + $0x100] sm:$0xff]
      %v898 = vld [vmem:[#allocation2 + $0x108] sm:$0xff]
      %v899 = vld [vmem:[#allocation2 + $0x110] sm:$0xff]
      %v900 = vld [vmem:[#allocation2 + $0x118] sm:$0xff]
      %v901 = vld [vmem:[#allocation2 + $0x120] sm:$0xff]
      %v902 = vld [vmem:[#allocation2 + $0x128] sm:$0xff]
      %v903 = vld [vmem:[#allocation2 + $0x130] sm:$0xff]
      %v904 = vld [vmem:[#allocation2 + $0x138] sm:$0xff]
      %v905 = vld [vmem:[#allocation2 + $0x140] sm:$0xff]
      %v906 = vld [vmem:[#allocation2 + $0x148] sm:$0xff]
      %v907 = vld [vmem:[#allocation2 + $0x150] sm:$0xff]
      %v908 = vld [vmem:[#allocation2 + $0x158] sm:$0xff]
      %v909 = vld [vmem:[#allocation2 + $0x160] sm:$0xff]
      %v910 = vld [vmem:[#allocation2 + $0x168] sm:$0xff]
      %v911 = vld [vmem:[#allocation2 + $0x170] sm:$0xff]
      %v912 = vld [vmem:[#allocation2 + $0x178] sm:$0xff]
      %v913 = vld [vmem:[#allocation2 + $0x180] sm:$0xff]
      %v914 = vld [vmem:[#allocation2 + $0x188] sm:$0xff]
      %v915 = vld [vmem:[#allocation2 + $0x190] sm:$0xff]
      %v916 = vld [vmem:[#allocation2 + $0x198] sm:$0xff]
      %v917 = vld [vmem:[#allocation2 + $0x1a0] sm:$0xff]
      %v918 = vld [vmem:[#allocation2 + $0x1a8] sm:$0xff]
      %v919 = vld [vmem:[#allocation2 + $0x1b0] sm:$0xff]
      %v920 = vld [vmem:[#allocation2 + $0x1b8] sm:$0xff]
      %v921 = vld [vmem:[#allocation2 + $0x1c0] sm:$0xff]
      %v922 = vld [vmem:[#allocation2 + $0x1c8] sm:$0xff]
      %v923 = vld [vmem:[#allocation2 + $0x1d0] sm:$0xff]
      %v924 = vld [vmem:[#allocation2 + $0x1d8] sm:$0xff]
      %v925 = vld [vmem:[#allocation2 + $0x1e0] sm:$0xff]
      %v926 = vld [vmem:[#allocation2 + $0x1e8] sm:$0xff]
      %v927 = vld [vmem:[#allocation2 + $0x1f0] sm:$0xff]
      %v928 = vld [vmem:[#allocation2 + $0x1f8] sm:$0xff]
      %v929 = vld [vmem:[#allocation2 + $0x200] sm:$0xff]
      %v930 = vld [vmem:[#allocation2 + $0x208] sm:$0xff]
      %v931 = vld [vmem:[#allocation2 + $0x210] sm:$0xff]
      %v932 = vld [vmem:[#allocation2 + $0x218] sm:$0xff]
      %v933 = vld [vmem:[#allocation2 + $0x220] sm:$0xff]
      %v934 = vld [vmem:[#allocation2 + $0x228] sm:$0xff]
      %v935 = vld [vmem:[#allocation2 + $0x230] sm:$0xff]
      %v936 = vld [vmem:[#allocation2 + $0x238] sm:$0xff]
      %v937 = vld [vmem:[#allocation2 + $0x240] sm:$0xff]
      %v938 = vld [vmem:[#allocation2 + $0x248] sm:$0xff]
      %v939 = vld [vmem:[#allocation2 + $0x250] sm:$0xff]
      %v940 = vld [vmem:[#allocation2 + $0x258] sm:$0xff]
      %v941 = vld [vmem:[#allocation2 + $0x260] sm:$0xff]
      %v942 = vld [vmem:[#allocation2 + $0x268] sm:$0xff]
      %v943 = vld [vmem:[#allocation2 + $0x270] sm:$0xff]
      %v944 = vld [vmem:[#allocation2 + $0x278] sm:$0xff]
      %v945 = vld [vmem:[#allocation2 + $0x280] sm:$0xff]
      %v946 = vld [vmem:[#allocation2 + $0x288] sm:$0xff]
      %v947 = vld [vmem:[#allocation2 + $0x290] sm:$0xff]
      %v948 = vld [vmem:[#allocation2 + $0x298] sm:$0xff]
      %v949 = vld [vmem:[#allocation2 + $0x2a0] sm:$0xff]
      %v950 = vld [vmem:[#allocation2 + $0x2a8] sm:$0xff]
      %v951 = vld [vmem:[#allocation2 + $0x2b0] sm:$0xff]
      %v952 = vld [vmem:[#allocation2 + $0x2b8] sm:$0xff]
      %v953 = vld [vmem:[#allocation2 + $0x2c0] sm:$0xff]
      %v954 = vld [vmem:[#allocation2 + $0x2c8] sm:$0xff]
      %v955 = vld [vmem:[#allocation2 + $0x2d0] sm:$0xff]
      %v956 = vld [vmem:[#allocation2 + $0x2d8] sm:$0xff]
      %v957 = vld [vmem:[#allocation2 + $0x2e0] sm:$0xff]
      %v958 = vld [vmem:[#allocation2 + $0x2e8] sm:$0xff]
      %v959 = vld [vmem:[#allocation2 + $0x2f0] sm:$0xff]
      %v960 = vld [vmem:[#allocation2 + $0x2f8] sm:$0xff]
      %v961 = vld [vmem:[%s2] sm:$0xff]
      %v962 = vld [vmem:[%s2 + $0x8] sm:$0xff]
      %v963 = vld [vmem:[%s2 + $0x10] sm:$0xff]
      %v964 = vld [vmem:[%s2 + $0x18] sm:$0xff]
      %v965 = vld [vmem:[%s2 + $0x20] sm:$0xff]
      %v966 = vld [vmem:[%s2 + $0x28] sm:$0xff]
      %v967 = vld [vmem:[%s2 + $0x30] sm:$0xff]
      %v968 = vld [vmem:[%s2 + $0x38] sm:$0xff]
      %v969 = vld [vmem:[%s2 + $0x40] sm:$0xff]
      %v970 = vld [vmem:[%s2 + $0x48] sm:$0xff]
      %v971 = vld [vmem:[%s2 + $0x50] sm:$0xff]
      %v972 = vld [vmem:[%s2 + $0x58] sm:$0xff]
      %v973 = vld [vmem:[%s2 + $0x60] sm:$0xff]
      %v974 = vld [vmem:[%s2 + $0x68] sm:$0xff]
      %v975 = vld [vmem:[%s2 + $0x70] sm:$0xff]
      %v976 = vld [vmem:[%s2 + $0x78] sm:$0xff]
      %v977 = vld [vmem:[%s2 + $0x80] sm:$0xff]
      %v978 = vld [vmem:[%s2 + $0x88] sm:$0xff]
      %v979 = vld [vmem:[%s2 + $0x90] sm:$0xff]
      %v980 = vld [vmem:[%s2 + $0x98] sm:$0xff]
      %v981 = vld [vmem:[%s2 + $0xa0] sm:$0xff]
      %v982 = vld [vmem:[%s2 + $0xa8] sm:$0xff]
      %v983 = vld [vmem:[%s2 + $0xb0] sm:$0xff]
      %v984 = vld [vmem:[%s2 + $0xb8] sm:$0xff]
      %v985 = vld [vmem:[%s2 + $0xc0] sm:$0xff]
      %v986 = vld [vmem:[%s2 + $0xc8] sm:$0xff]
      %v987 = vld [vmem:[%s2 + $0xd0] sm:$0xff]
      %v988 = vld [vmem:[%s2 + $0xd8] sm:$0xff]
      %v989 = vld [vmem:[%s2 + $0xe0] sm:$0xff]
      %v990 = vld [vmem:[%s2 + $0xe8] sm:$0xff]
      %v991 = vld [vmem:[%s2 + $0xf0] sm:$0xff]
      %v992 = vld [vmem:[%s2 + $0xf8] sm:$0xff]
      %v993 = vld [vmem:[%s2 + $0x100] sm:$0xff]
      %v994 = vld [vmem:[%s2 + $0x108] sm:$0xff]
      %v995 = vld [vmem:[%s2 + $0x110] sm:$0xff]
      %v996 = vld [vmem:[%s2 + $0x118] sm:$0xff]
      %v997 = vld [vmem:[%s2 + $0x120] sm:$0xff]
      %v998 = vld [vmem:[%s2 + $0x128] sm:$0xff]
      %v999 = vld [vmem:[%s2 + $0x130] sm:$0xff]
      %v1000 = vld [vmem:[%s2 + $0x138] sm:$0xff]
      %v1001 = vld [vmem:[%s2 + $0x140] sm:$0xff]
      %v1002 = vld [vmem:[%s2 + $0x148] sm:$0xff]
      %v1003 = vld [vmem:[%s2 + $0x150] sm:$0xff]
      %v1004 = vld [vmem:[%s2 + $0x158] sm:$0xff]
      %v1005 = vld [vmem:[%s2 + $0x160] sm:$0xff]
      %v1006 = vld [vmem:[%s2 + $0x168] sm:$0xff]
      %v1007 = vld [vmem:[%s2 + $0x170] sm:$0xff]
      %v1008 = vld [vmem:[%s2 + $0x178] sm:$0xff]
      %v1009 = vld [vmem:[%s736] sm:$0xff]
      %v1010 = vld [vmem:[%s736 + $0x8] sm:$0xff]
      %v1011 = vld [vmem:[%s736 + $0x10] sm:$0xff]
      %v1012 = vld [vmem:[%s736 + $0x18] sm:$0xff]
      %v1013 = vld [vmem:[%s736 + $0x20] sm:$0xff]
      %v1014 = vld [vmem:[%s736 + $0x28] sm:$0xff]
      %v1015 = vld [vmem:[%s736 + $0x30] sm:$0xff]
      %v1016 = vld [vmem:[%s736 + $0x38] sm:$0xff]
      %v1017 = vld [vmem:[%s736 + $0x40] sm:$0xff]
      %v1018 = vld [vmem:[%s736 + $0x48] sm:$0xff]
      %v1019 = vld [vmem:[%s736 + $0x50] sm:$0xff]
      %v1020 = vld [vmem:[%s736 + $0x58] sm:$0xff]
      %v1021 = vld [vmem:[%s736 + $0x60] sm:$0xff]
      %v1022 = vld [vmem:[%s736 + $0x68] sm:$0xff]
      %v1023 = vld [vmem:[%s736 + $0x70] sm:$0xff]
      %v1024 = vld [vmem:[%s736 + $0x78] sm:$0xff]
      %v1025 = vld [vmem:[%s736 + $0x80] sm:$0xff]
      %v1026 = vld [vmem:[%s736 + $0x88] sm:$0xff]
      %v1027 = vld [vmem:[%s736 + $0x90] sm:$0xff]
      %v1028 = vld [vmem:[%s736 + $0x98] sm:$0xff]
      %v1029 = vld [vmem:[%s736 + $0xa0] sm:$0xff]
      %v1030 = vld [vmem:[%s736 + $0xa8] sm:$0xff]
      %v1031 = vld [vmem:[%s736 + $0xb0] sm:$0xff]
      %v1032 = vld [vmem:[%s736 + $0xb8] sm:$0xff]
      %v1033 = vld [vmem:[%s736 + $0xc0] sm:$0xff]
      %v1034 = vld [vmem:[%s736 + $0xc8] sm:$0xff]
      %v1035 = vld [vmem:[%s736 + $0xd0] sm:$0xff]
      %v1036 = vld [vmem:[%s736 + $0xd8] sm:$0xff]
      %v1037 = vld [vmem:[%s736 + $0xe0] sm:$0xff]
      %v1038 = vld [vmem:[%s736 + $0xe8] sm:$0xff]
      %v1039 = vld [vmem:[%s736 + $0xf0] sm:$0xff]
      %v1040 = vld [vmem:[%s736 + $0xf8] sm:$0xff]
      %v1041 = vld [vmem:[%s736 + $0x100] sm:$0xff]
      %v1042 = vld [vmem:[%s736 + $0x108] sm:$0xff]
      %v1043 = vld [vmem:[%s736 + $0x110] sm:$0xff]
      %v1044 = vld [vmem:[%s736 + $0x118] sm:$0xff]
      %v1045 = vld [vmem:[%s736 + $0x120] sm:$0xff]
      %v1046 = vld [vmem:[%s736 + $0x128] sm:$0xff]
      %v1047 = vld [vmem:[%s736 + $0x130] sm:$0xff]
      %v1048 = vld [vmem:[%s736 + $0x138] sm:$0xff]
      %v1049 = vld [vmem:[%s736 + $0x140] sm:$0xff]
      %v1050 = vld [vmem:[%s736 + $0x148] sm:$0xff]
      %v1051 = vld [vmem:[%s736 + $0x150] sm:$0xff]
      %v1052 = vld [vmem:[%s736 + $0x158] sm:$0xff]
      %v1053 = vld [vmem:[%s736 + $0x160] sm:$0xff]
      %v1054 = vld [vmem:[%s736 + $0x168] sm:$0xff]
      %v1055 = vld [vmem:[%s736 + $0x170] sm:$0xff]
      %v1056 = vld [vmem:[%s736 + $0x178] sm:$0xff]
      %v1057 = vld [vmem:[%s736 + $0x180] sm:$0xff]
      %v1058 = vld [vmem:[%s736 + $0x188] sm:$0xff]
      %v1059 = vld [vmem:[%s736 + $0x190] sm:$0xff]
      %v1060 = vld [vmem:[%s736 + $0x198] sm:$0xff]
      %v1061 = vld [vmem:[%s736 + $0x1a0] sm:$0xff]
      %v1062 = vld [vmem:[%s736 + $0x1a8] sm:$0xff]
      %v1063 = vld [vmem:[%s736 + $0x1b0] sm:$0xff]
      %v1064 = vld [vmem:[%s736 + $0x1b8] sm:$0xff]
      %v1065 = vld [vmem:[%s736 + $0x1c0] sm:$0xff]
      %v1066 = vld [vmem:[%s736 + $0x1c8] sm:$0xff]
      %v1067 = vld [vmem:[%s736 + $0x1d0] sm:$0xff]
      %v1068 = vld [vmem:[%s736 + $0x1d8] sm:$0xff]
      %v1069 = vld [vmem:[%s736 + $0x1e0] sm:$0xff]
      %v1070 = vld [vmem:[%s736 + $0x1e8] sm:$0xff]
      %v1071 = vld [vmem:[%s736 + $0x1f0] sm:$0xff]
      %v1072 = vld [vmem:[%s736 + $0x1f8] sm:$0xff]
      %v1073 = vld [vmem:[%s736 + $0x200] sm:$0xff]
      %v1074 = vld [vmem:[%s736 + $0x208] sm:$0xff]
      %v1075 = vld [vmem:[%s736 + $0x210] sm:$0xff]
      %v1076 = vld [vmem:[%s736 + $0x218] sm:$0xff]
      %v1077 = vld [vmem:[%s736 + $0x220] sm:$0xff]
      %v1078 = vld [vmem:[%s736 + $0x228] sm:$0xff]
      %v1079 = vld [vmem:[%s736 + $0x230] sm:$0xff]
      %v1080 = vld [vmem:[%s736 + $0x238] sm:$0xff]
      %v1081 = vld [vmem:[%s736 + $0x240] sm:$0xff]
      %v1082 = vld [vmem:[%s736 + $0x248] sm:$0xff]
      %v1083 = vld [vmem:[%s736 + $0x250] sm:$0xff]
      %v1084 = vld [vmem:[%s736 + $0x258] sm:$0xff]
      %v1085 = vld [vmem:[%s736 + $0x260] sm:$0xff]
      %v1086 = vld [vmem:[%s736 + $0x268] sm:$0xff]
      %v1087 = vld [vmem:[%s736 + $0x270] sm:$0xff]
      %v1088 = vld [vmem:[%s736 + $0x278] sm:$0xff]
      %v1089 = vld [vmem:[%s736 + $0x280] sm:$0xff]
      %v1090 = vld [vmem:[%s736 + $0x288] sm:$0xff]
      %v1091 = vld [vmem:[%s736 + $0x290] sm:$0xff]
      %v1092 = vld [vmem:[%s736 + $0x298] sm:$0xff]
      %v1093 = vld [vmem:[%s736 + $0x2a0] sm:$0xff]
      %v1094 = vld [vmem:[%s736 + $0x2a8] sm:$0xff]
      %v1095 = vld [vmem:[%s736 + $0x2b0] sm:$0xff]
      %v1096 = vld [vmem:[%s736 + $0x2b8] sm:$0xff]
      %v1097 = vld [vmem:[%s736 + $0x2c0] sm:$0xff]
      %v1098 = vld [vmem:[%s736 + $0x2c8] sm:$0xff]
      %v1099 = vld [vmem:[%s736 + $0x2d0] sm:$0xff]
      %v1100 = vld [vmem:[%s736 + $0x2d8] sm:$0xff]
      %v1101 = vld [vmem:[%s736 + $0x2e0] sm:$0xff]
      %v1102 = vld [vmem:[%s736 + $0x2e8] sm:$0xff]
      %v1103 = vld [vmem:[%s736 + $0x2f0] sm:$0xff]
      %v1104 = vld [vmem:[%s736 + $0x2f8] sm:$0xff]
      %s1105 = scalar_lea.vmem %s2, 384
      %v1106 = vld [vmem:[%s1105] sm:$0xff]
      %v1107 = vld [vmem:[%s1105 + $0x8] sm:$0xff]
      %v1108 = vld [vmem:[%s1105 + $0x10] sm:$0xff]
      %v1109 = vld [vmem:[%s1105 + $0x18] sm:$0xff]
      %v1110 = vld [vmem:[%s1105 + $0x20] sm:$0xff]
      %v1111 = vld [vmem:[%s1105 + $0x28] sm:$0xff]
      %v1112 = vld [vmem:[%s1105 + $0x30] sm:$0xff]
      %v1113 = vld [vmem:[%s1105 + $0x38] sm:$0xff]
      %v1114 = vld [vmem:[%s1105 + $0x40] sm:$0xff]
      %v1115 = vld [vmem:[%s1105 + $0x48] sm:$0xff]
      %v1116 = vld [vmem:[%s1105 + $0x50] sm:$0xff]
      %v1117 = vld [vmem:[%s1105 + $0x58] sm:$0xff]
      %v1118 = vld [vmem:[%s1105 + $0x60] sm:$0xff]
      %v1119 = vld [vmem:[%s1105 + $0x68] sm:$0xff]
      %v1120 = vld [vmem:[%s1105 + $0x70] sm:$0xff]
      %v1121 = vld [vmem:[%s1105 + $0x78] sm:$0xff]
      %v1122 = vld [vmem:[%s1105 + $0x80] sm:$0xff]
      %v1123 = vld [vmem:[%s1105 + $0x88] sm:$0xff]
      %v1124 = vld [vmem:[%s1105 + $0x90] sm:$0xff]
      %v1125 = vld [vmem:[%s1105 + $0x98] sm:$0xff]
      %v1126 = vld [vmem:[%s1105 + $0xa0] sm:$0xff]
      %v1127 = vld [vmem:[%s1105 + $0xa8] sm:$0xff]
      %v1128 = vld [vmem:[%s1105 + $0xb0] sm:$0xff]
      %v1129 = vld [vmem:[%s1105 + $0xb8] sm:$0xff]
      %v1130 = vld [vmem:[%s1105 + $0xc0] sm:$0xff]
      %v1131 = vld [vmem:[%s1105 + $0xc8] sm:$0xff]
      %v1132 = vld [vmem:[%s1105 + $0xd0] sm:$0xff]
      %v1133 = vld [vmem:[%s1105 + $0xd8] sm:$0xff]
      %v1134 = vld [vmem:[%s1105 + $0xe0] sm:$0xff]
      %v1135 = vld [vmem:[%s1105 + $0xe8] sm:$0xff]
      %v1136 = vld [vmem:[%s1105 + $0xf0] sm:$0xff]
      %v1137 = vld [vmem:[%s1105 + $0xf8] sm:$0xff]
      %v1138 = vld [vmem:[%s1105 + $0x100] sm:$0xff]
      %v1139 = vld [vmem:[%s1105 + $0x108] sm:$0xff]
      %v1140 = vld [vmem:[%s1105 + $0x110] sm:$0xff]
      %v1141 = vld [vmem:[%s1105 + $0x118] sm:$0xff]
      %v1142 = vld [vmem:[%s1105 + $0x120] sm:$0xff]
      %v1143 = vld [vmem:[%s1105 + $0x128] sm:$0xff]
      %v1144 = vld [vmem:[%s1105 + $0x130] sm:$0xff]
      %v1145 = vld [vmem:[%s1105 + $0x138] sm:$0xff]
      %v1146 = vld [vmem:[%s1105 + $0x140] sm:$0xff]
      %v1147 = vld [vmem:[%s1105 + $0x148] sm:$0xff]
      %v1148 = vld [vmem:[%s1105 + $0x150] sm:$0xff]
      %v1149 = vld [vmem:[%s1105 + $0x158] sm:$0xff]
      %v1150 = vld [vmem:[%s1105 + $0x160] sm:$0xff]
      %v1151 = vld [vmem:[%s1105 + $0x168] sm:$0xff]
      %v1152 = vld [vmem:[%s1105 + $0x170] sm:$0xff]
      %v1153 = vld [vmem:[%s1105 + $0x178] sm:$0xff]
      %1154 = vmatprep.subr.mxu0 0.0
      %1155 = vmatpush1.msra.mxu0 %v1106
      %1156 = vmatprep.subr.mxu0 0.0
      %1157 = vmatpush1.msra.mxu0 %v1107
      %1158 = vmatprep.subr.mxu0 0.0
      %1159 = vmatpush1.msra.mxu0 %v1108
      %1160 = vmatprep.subr.mxu0 0.0
      %1161 = vmatpush1.msra.mxu0 %v1109
      %1162 = vmatprep.subr.mxu0 0.0
      %1163 = vmatpush1.msra.mxu0 %v1110
      %1164 = vmatprep.subr.mxu0 0.0
      %1165 = vmatpush1.msra.mxu0 %v1111
      %1166 = vmatprep.subr.mxu0 0.0
      %1167 = vmatpush1.msra.mxu0 %v1112
      %1168 = vmatprep.subr.mxu0 0.0
      %1169 = vmatpush1.msra.mxu0 %v1113
      %1170 = vmatprep.subr.mxu0 0.0
      %1171 = vmatpush1.msra.mxu0 %v1114
      %1172 = vmatprep.subr.mxu0 0.0
      %1173 = vmatpush1.msra.mxu0 %v1115
      %1174 = vmatprep.subr.mxu0 0.0
      %1175 = vmatpush1.msra.mxu0 %v1116
      %1176 = vmatprep.subr.mxu0 0.0
      %1177 = vmatpush1.msra.mxu0 %v1117
      %1178 = vmatprep.subr.mxu0 0.0
      %1179 = vmatpush1.msra.mxu0 %v1118
      %1180 = vmatprep.subr.mxu0 0.0
      %1181 = vmatpush1.msra.mxu0 %v1119
      %1182 = vmatprep.subr.mxu0 0.0
      %1183 = vmatpush1.msra.mxu0 %v1120
      %1184 = vmatprep.subr.mxu0 0.0
      %1185 = vmatpush1.msra.mxu0 %v1121
      %1186 = vmatprep.subr.mxu0 0.0
      %1187 = vmatpush1.msra.mxu0 %v1122
      %1188 = vmatprep.subr.mxu0 0.0
      %1189 = vmatpush1.msra.mxu0 %v1123
      %1190 = vmatprep.subr.mxu0 0.0
      %1191 = vmatpush1.msra.mxu0 %v1124
      %1192 = vmatprep.subr.mxu0 0.0
      %1193 = vmatpush1.msra.mxu0 %v1125
      %1194 = vmatprep.subr.mxu0 0.0
      %1195 = vmatpush1.msra.mxu0 %v1126
      %1196 = vmatprep.subr.mxu0 0.0
      %1197 = vmatpush1.msra.mxu0 %v1127
      %1198 = vmatprep.subr.mxu0 0.0
      %1199 = vmatpush1.msra.mxu0 %v1128
      %1200 = vmatprep.subr.mxu0 0.0
      %1201 = vmatpush1.msra.mxu0 %v1129
      %1202 = vmatprep.subr.mxu0 0.0
      %1203 = vmatpush1.msra.mxu0 %v1130
      %1204 = vmatprep.subr.mxu0 0.0
      %1205 = vmatpush1.msra.mxu0 %v1131
      %1206 = vmatprep.subr.mxu0 0.0
      %1207 = vmatpush1.msra.mxu0 %v1132
      %1208 = vmatprep.subr.mxu0 0.0
      %1209 = vmatpush1.msra.mxu0 %v1133
      %1210 = vmatprep.subr.mxu0 0.0
      %1211 = vmatpush1.msra.mxu0 %v1134
      %1212 = vmatprep.subr.mxu0 0.0
      %1213 = vmatpush1.msra.mxu0 %v1135
      %1214 = vmatprep.subr.mxu0 0.0
      %1215 = vmatpush1.msra.mxu0 %v1136
      %1216 = vmatprep.subr.mxu0 0.0
      %1217 = vmatpush1.msra.mxu0 %v1137
      %1218 = vmatprep.mubr.f32.mxu0 %v1010
      %1219 = vmatmul.mubr.f32.gmra.mrb[0].mxu0 %v1009
      %v1220 = vpop.f32.mrb[0].mxu0
      %v1221 = vadd.f32 0.0, %v1220
      %v1222 = vpop.f32.mrb[0].mxu0
      %1223 = vmatprep.mubr.f32.mxu0 %v1013
      %1224 = vmatmul.mubr.f32.gmra.mrb[0].mxu0 %v1012
      %v1225 = vpop.f32.mrb[0].mxu0
      %v1226 = vadd.f32 0.0, %v1225
      %v1227 = vpop.f32.mrb[0].mxu0
      %1228 = vmatprep.mubr.f32.mxu0 %v1016
      %1229 = vmatmul.mubr.f32.gmra.mrb[0].mxu0 %v1015
      %v1230 = vpop.f32.mrb[0].mxu0
      %v1231 = vadd.f32 0.0, %v1230
      %v1232 = vpop.f32.mrb[0].mxu0
      %1233 = vmatprep.mubr.f32.mxu0 %v1019
      %1234 = vmatmul.mubr.f32.gmra.mrb[0].mxu0 %v1018
      %v1235 = vpop.f32.mrb[0].mxu0
      %v1236 = vadd.f32 0.0, %v1235
      %v1237 = vpop.f32.mrb[0].mxu0
      %1238 = vmatprep.mubr.f32.mxu0 %v1022
      %1239 = vmatmul.mubr.f32.gmra.mrb[0].mxu0 %v1021
      %v1240 = vpop.f32.mrb[0].mxu0
      %v1241 = vadd.f32 0.0, %v1240
      %v1242 = vpop.f32.mrb[0].mxu0
      %1243 = vmatprep.mubr.f32.mxu0 %v1025
      %1244 = vmatmul.mubr.f32.gmra.mrb[0].mxu0 %v1024
      %v1245 = vpop.f32.mrb[0].mxu0
      %v1246 = vadd.f32 0.0, %v1245
      %v1247 = vpop.f32.mrb[0].mxu0
      %1248 = vmatprep.mubr.f32.mxu0 %v1028
      %1249 = vmatmul.mubr.f32.gmra.mrb[0].mxu0 %v1027
      %v1250 = vpop.f32.mrb[0].mxu0
      %v1251 = vadd.f32 0.0, %v1250
      %v1252 = vpop.f32.mrb[0].mxu0
      %1253 = vmatprep.mubr.f32.mxu0 %v1031
      %1254 = vmatmul.mubr.f32.gmra.mrb[0].mxu0 %v1030
      %v1255 = vpop.f32.mrb[0].mxu0
      %v1256 = vadd.f32 0.0, %v1255
      %v1257 = vpop.f32.mrb[0].mxu0
      %1258 = vmatprep.mubr.f32.mxu0 %v1034
      %1259 = vmatmul.mubr.f32.gmra.mrb[0].mxu0 %v1033
      %v1260 = vpop.f32.mrb[0].mxu0
      %v1261 = vadd.f32 0.0, %v1260
      %v1262 = vpop.f32.mrb[0].mxu0
      %1263 = vmatprep.mubr.f32.mxu0 %v1037
      %1264 = vmatmul.mubr.f32.gmra.mrb[0].mxu0 %v1036
      %v1265 = vpop.f32.mrb[0].mxu0
      %v1266 = vadd.f32 0.0, %v1265
      %v1267 = vpop.f32.mrb[0].mxu0
      %1268 = vmatprep.mubr.f32.mxu0 %v1040
      %1269 = vmatmul.mubr.f32.gmra.mrb[0].mxu0 %v1039
      %v1270 = vpop.f32.mrb[0].mxu0
      %v1271 = vadd.f32 0.0, %v1270
      %v1272 = vpop.f32.mrb[0].mxu0
      %1273 = vmatprep.mubr.f32.mxu0 %v1043
      %1274 = vmatmul.mubr.f32.gmra.mrb[0].mxu0 %v1042
      %v1275 = vpop.f32.mrb[0].mxu0
      %v1276 = vadd.f32 0.0, %v1275
      %v1277 = vpop.f32.mrb[0].mxu0
      %1278 = vmatprep.mubr.f32.mxu0 %v1046
      %1279 = vmatmul.mubr.f32.gmra.mrb[0].mxu0 %v1045
      %v1280 = vpop.f32.mrb[0].mxu0
      %v1281 = vadd.f32 0.0, %v1280
      %v1282 = vpop.f32.mrb[0].mxu0
      %1283 = vmatprep.mubr.f32.mxu0 %v1049
      %1284 = vmatmul.mubr.f32.gmra.mrb[0].mxu0 %v1048
      %v1285 = vpop.f32.mrb[0].mxu0
      %v1286 = vadd.f32 0.0, %v1285
      %v1287 = vpop.f32.mrb[0].mxu0
      %1288 = vmatprep.mubr.f32.mxu0 %v1052
      %1289 = vmatmul.mubr.f32.gmra.mrb[0].mxu0 %v1051
      %v1290 = vpop.f32.mrb[0].mxu0
      %v1291 = vadd.f32 0.0, %v1290
      %v1292 = vpop.f32.mrb[0].mxu0
      %1293 = vmatprep.mubr.f32.mxu0 %v1055
      %1294 = vmatmul.mubr.f32.gmra.mrb[0].mxu0 %v1054
      %v1295 = vpop.f32.mrb[0].mxu0
      %v1296 = vadd.f32 0.0, %v1295
      %v1297 = vpop.f32.mrb[0].mxu0
      %1298 = vmatprep.mubr.f32.mxu0 %v1058
      %1299 = vmatmul.mubr.f32.gmra.mrb[0].mxu0 %v1057
      %v1300 = vpop.f32.mrb[0].mxu0
      %v1301 = vadd.f32 0.0, %v1300
      %v1302 = vpop.f32.mrb[0].mxu0
      %1303 = vmatprep.mubr.f32.mxu0 %v1061
      %1304 = vmatmul.mubr.f32.gmra.mrb[0].mxu0 %v1060
      %v1305 = vpop.f32.mrb[0].mxu0
      %v1306 = vadd.f32 0.0, %v1305
      %v1307 = vpop.f32.mrb[0].mxu0
      %1308 = vmatprep.mubr.f32.mxu0 %v1064
      %1309 = vmatmul.mubr.f32.gmra.mrb[0].mxu0 %v1063
      %v1310 = vpop.f32.mrb[0].mxu0
      %v1311 = vadd.f32 0.0, %v1310
      %v1312 = vpop.f32.mrb[0].mxu0
      %1313 = vmatprep.mubr.f32.mxu0 %v1067
      %1314 = vmatmul.mubr.f32.gmra.mrb[0].mxu0 %v1066
      %v1315 = vpop.f32.mrb[0].mxu0
      %v1316 = vadd.f32 0.0, %v1315
      %v1317 = vpop.f32.mrb[0].mxu0
      %1318 = vmatprep.mubr.f32.mxu0 %v1070
      %1319 = vmatmul.mubr.f32.gmra.mrb[0].mxu0 %v1069
      %v1320 = vpop.f32.mrb[0].mxu0
      %v1321 = vadd.f32 0.0, %v1320
      %v1322 = vpop.f32.mrb[0].mxu0
      %1323 = vmatprep.mubr.f32.mxu0 %v1073
      %1324 = vmatmul.mubr.f32.gmra.mrb[0].mxu0 %v1072
      %v1325 = vpop.f32.mrb[0].mxu0
      %v1326 = vadd.f32 0.0, %v1325
      %v1327 = vpop.f32.mrb[0].mxu0
      %1328 = vmatprep.mubr.f32.mxu0 %v1076
      %1329 = vmatmul.mubr.f32.gmra.mrb[0].mxu0 %v1075
      %v1330 = vpop.f32.mrb[0].mxu0
      %v1331 = vadd.f32 0.0, %v1330
      %v1332 = vpop.f32.mrb[0].mxu0
      %1333 = vmatprep.mubr.f32.mxu0 %v1079
      %1334 = vmatmul.mubr.f32.gmra.mrb[0].mxu0 %v1078
      %v1335 = vpop.f32.mrb[0].mxu0
      %v1336 = vadd.f32 0.0, %v1335
      %v1337 = vpop.f32.mrb[0].mxu0
      %1338 = vmatprep.mubr.f32.mxu0 %v1082
      %1339 = vmatmul.mubr.f32.gmra.mrb[0].mxu0 %v1081
      %v1340 = vpop.f32.mrb[0].mxu0
      %v1341 = vadd.f32 0.0, %v1340
      %v1342 = vpop.f32.mrb[0].mxu0
      %1343 = vmatprep.mubr.f32.mxu0 %v1085
      %1344 = vmatmul.mubr.f32.gmra.mrb[0].mxu0 %v1084
      %v1345 = vpop.f32.mrb[0].mxu0
      %v1346 = vadd.f32 0.0, %v1345
      %v1347 = vpop.f32.mrb[0].mxu0
      %1348 = vmatprep.mubr.f32.mxu0 %v1088
      %1349 = vmatmul.mubr.f32.gmra.mrb[0].mxu0 %v1087
      %v1350 = vpop.f32.mrb[0].mxu0
      %v1351 = vadd.f32 0.0, %v1350
      %v1352 = vpop.f32.mrb[0].mxu0
      %1353 = vmatprep.mubr.f32.mxu0 %v1091
      %1354 = vmatmul.mubr.f32.gmra.mrb[0].mxu0 %v1090
      %v1355 = vpop.f32.mrb[0].mxu0
      %v1356 = vadd.f32 0.0, %v1355
      %v1357 = vpop.f32.mrb[0].mxu0
      %1358 = vmatprep.mubr.f32.mxu0 %v1094
      %1359 = vmatmul.mubr.f32.gmra.mrb[0].mxu0 %v1093
      %v1360 = vpop.f32.mrb[0].mxu0
      %v1361 = vadd.f32 0.0, %v1360
      %v1362 = vpop.f32.mrb[0].mxu0
      %1363 = vmatprep.mubr.f32.mxu0 %v1097
      %1364 = vmatmul.mubr.f32.gmra.mrb[0].mxu0 %v1096
      %v1365 = vpop.f32.mrb[0].mxu0
      %v1366 = vadd.f32 0.0, %v1365
      %v1367 = vpop.f32.mrb[0].mxu0
      %1368 = vmatprep.mubr.f32.mxu0 %v1100
      %1369 = vmatmul.mubr.f32.gmra.mrb[0].mxu0 %v1099
      %v1370 = vpop.f32.mrb[0].mxu0
      %v1371 = vadd.f32 0.0, %v1370
      %v1372 = vpop.f32.mrb[0].mxu0
      %1373 = vmatprep.mubr.f32.mxu0 %v1103
      %1374 = vmatmul.mubr.f32.gmra.mrb[0].mxu0 %v1102
      %v1375 = vpop.f32.mrb[0].mxu0
      %v1376 = vadd.f32 0.0, %v1375
      %v1377 = vpop.f32.mrb[0].mxu0
      %1378 = vdwg.mxu0
      %1379 = vmatprep.subr.mxu0 0.0
      %1380 = vmatpush1.msra.mxu0 %v1138
      %1381 = vmatprep.subr.mxu0 0.0
      %1382 = vmatpush1.msra.mxu0 %v1139
      %1383 = vmatprep.subr.mxu0 0.0
      %1384 = vmatpush1.msra.mxu0 %v1140
      %1385 = vmatprep.subr.mxu0 0.0
      %1386 = vmatpush1.msra.mxu0 %v1141
      %1387 = vmatprep.subr.mxu0 0.0
      %1388 = vmatpush1.msra.mxu0 %v1142
      %1389 = vmatprep.subr.mxu0 0.0
      %1390 = vmatpush1.msra.mxu0 %v1143
      %1391 = vmatprep.subr.mxu0 0.0
      %1392 = vmatpush1.msra.mxu0 %v1144
      %1393 = vmatprep.subr.mxu0 0.0
      %1394 = vmatpush1.msra.mxu0 %v1145
      %1395 = vmatprep.subr.mxu0 0.0
      %1396 = vmatpush1.msra.mxu0 %v1146
      %1397 = vmatprep.subr.mxu0 0.0
      %1398 = vmatpush1.msra.mxu0 %v1147
      %1399 = vmatprep.subr.mxu0 0.0
      %1400 = vmatpush1.msra.mxu0 %v1148
      %1401 = vmatprep.subr.mxu0 0.0
      %1402 = vmatpush1.msra.mxu0 %v1149
      %1403 = vmatprep.subr.mxu0 0.0
      %1404 = vmatpush1.msra.mxu0 %v1150
      %1405 = vmatprep.subr.mxu0 0.0
      %1406 = vmatpush1.msra.mxu0 %v1151
      %1407 = vmatprep.subr.mxu0 0.0
      %1408 = vmatpush1.msra.mxu0 %v1152
      %1409 = vmatprep.subr.mxu0 0.0
      %1410 = vmatpush1.msra.mxu0 %v1153
      %1411 = vmatprep.subr.mxu0 0.0
      %1412 = vmatpush1.msra.mxu0 0.0
      %1413 = vmatprep.subr.mxu0 0.0
      %1414 = vmatpush1.msra.mxu0 0.0
      %1415 = vmatprep.subr.mxu0 0.0
      %1416 = vmatpush1.msra.mxu0 0.0
      %1417 = vmatprep.subr.mxu0 0.0
      %1418 = vmatpush1.msra.mxu0 0.0
      %1419 = vmatprep.subr.mxu0 0.0
      %1420 = vmatpush1.msra.mxu0 0.0
      %1421 = vmatprep.subr.mxu0 0.0
      %1422 = vmatpush1.msra.mxu0 0.0
      %1423 = vmatprep.subr.mxu0 0.0
      %1424 = vmatpush1.msra.mxu0 0.0
      %1425 = vmatprep.subr.mxu0 0.0
      %1426 = vmatpush1.msra.mxu0 0.0
      %1427 = vmatprep.subr.mxu0 0.0
      %1428 = vmatpush1.msra.mxu0 0.0
      %1429 = vmatprep.subr.mxu0 0.0
      %1430 = vmatpush1.msra.mxu0 0.0
      %1431 = vmatprep.subr.mxu0 0.0
      %1432 = vmatpush1.msra.mxu0 0.0
      %1433 = vmatprep.subr.mxu0 0.0
      %1434 = vmatpush1.msra.mxu0 0.0
      %1435 = vmatprep.subr.mxu0 0.0
      %1436 = vmatpush1.msra.mxu0 0.0
      %1437 = vmatprep.subr.mxu0 0.0
      %1438 = vmatpush1.msra.mxu0 0.0
      %1439 = vmatprep.subr.mxu0 0.0
      %1440 = vmatpush1.msra.mxu0 0.0
      %1441 = vmatprep.subr.mxu0 0.0
      %1442 = vmatpush1.msra.mxu0 0.0
      %1443 = vmatprep.mubr.f32.mxu0 0.0
      %1444 = vmatmul.mubr.f32.gmra.mrb[0].mxu0 %v1011
      %v1445 = vpop.f32.mrb[0].mxu0
      %v1446 = vadd.f32 %v1221, %v1445
      %v1447 = vpop.f32.mrb[0].mxu0
      %1448 = vmatprep.mubr.f32.mxu0 0.0
      %1449 = vmatmul.mubr.f32.gmra.mrb[0].mxu0 %v1014
      %v1450 = vpop.f32.mrb[0].mxu0
      %v1451 = vadd.f32 %v1226, %v1450
      %v1452 = vpop.f32.mrb[0].mxu0
      %1453 = vmatprep.mubr.f32.mxu0 0.0
      %1454 = vmatmul.mubr.f32.gmra.mrb[0].mxu0 %v1017
      %v1455 = vpop.f32.mrb[0].mxu0
      %v1456 = vadd.f32 %v1231, %v1455
      %v1457 = vpop.f32.mrb[0].mxu0
      %1458 = vmatprep.mubr.f32.mxu0 0.0
      %1459 = vmatmul.mubr.f32.gmra.mrb[0].mxu0 %v1020
      %v1460 = vpop.f32.mrb[0].mxu0
      %v1461 = vadd.f32 %v1236, %v1460
      %v1462 = vpop.f32.mrb[0].mxu0
      %1463 = vmatprep.mubr.f32.mxu0 0.0
      %1464 = vmatmul.mubr.f32.gmra.mrb[0].mxu0 %v1023
      %v1465 = vpop.f32.mrb[0].mxu0
      %v1466 = vadd.f32 %v1241, %v1465
      %v1467 = vpop.f32.mrb[0].mxu0
      %1468 = vmatprep.mubr.f32.mxu0 0.0
      %1469 = vmatmul.mubr.f32.gmra.mrb[0].mxu0 %v1026
      %v1470 = vpop.f32.mrb[0].mxu0
      %v1471 = vadd.f32 %v1246, %v1470
      %v1472 = vpop.f32.mrb[0].mxu0
      %1473 = vmatprep.mubr.f32.mxu0 0.0
      %1474 = vmatmul.mubr.f32.gmra.mrb[0].mxu0 %v1029
      %v1475 = vpop.f32.mrb[0].mxu0
      %v1476 = vadd.f32 %v1251, %v1475
      %v1477 = vpop.f32.mrb[0].mxu0
      %1478 = vmatprep.mubr.f32.mxu0 0.0
      %1479 = vmatmul.mubr.f32.gmra.mrb[0].mxu0 %v1032
      %v1480 = vpop.f32.mrb[0].mxu0
      %v1481 = vadd.f32 %v1256, %v1480
      %v1482 = vpop.f32.mrb[0].mxu0
      %1483 = vmatprep.mubr.f32.mxu0 0.0
      %1484 = vmatmul.mubr.f32.gmra.mrb[0].mxu0 %v1035
      %v1485 = vpop.f32.mrb[0].mxu0
      %v1486 = vadd.f32 %v1261, %v1485
      %v1487 = vpop.f32.mrb[0].mxu0
      %1488 = vmatprep.mubr.f32.mxu0 0.0
      %1489 = vmatmul.mubr.f32.gmra.mrb[0].mxu0 %v1038
      %v1490 = vpop.f32.mrb[0].mxu0
      %v1491 = vadd.f32 %v1266, %v1490
      %v1492 = vpop.f32.mrb[0].mxu0
      %1493 = vmatprep.mubr.f32.mxu0 0.0
      %1494 = vmatmul.mubr.f32.gmra.mrb[0].mxu0 %v1041
      %v1495 = vpop.f32.mrb[0].mxu0
      %v1496 = vadd.f32 %v1271, %v1495
      %v1497 = vpop.f32.mrb[0].mxu0
      %1498 = vmatprep.mubr.f32.mxu0 0.0
      %1499 = vmatmul.mubr.f32.gmra.mrb[0].mxu0 %v1044
      %v1500 = vpop.f32.mrb[0].mxu0
      %v1501 = vadd.f32 %v1276, %v1500
      %v1502 = vpop.f32.mrb[0].mxu0
      %1503 = vmatprep.mubr.f32.mxu0 0.0
      %1504 = vmatmul.mubr.f32.gmra.mrb[0].mxu0 %v1047
      %v1505 = vpop.f32.mrb[0].mxu0
      %v1506 = vadd.f32 %v1281, %v1505
      %v1507 = vpop.f32.mrb[0].mxu0
      %1508 = vmatprep.mubr.f32.mxu0 0.0
      %1509 = vmatmul.mubr.f32.gmra.mrb[0].mxu0 %v1050
      %v1510 = vpop.f32.mrb[0].mxu0
      %v1511 = vadd.f32 %v1286, %v1510
      %v1512 = vpop.f32.mrb[0].mxu0
      %1513 = vmatprep.mubr.f32.mxu0 0.0
      %1514 = vmatmul.mubr.f32.gmra.mrb[0].mxu0 %v1053
      %v1515 = vpop.f32.mrb[0].mxu0
      %v1516 = vadd.f32 %v1291, %v1515
      %v1517 = vpop.f32.mrb[0].mxu0
      %1518 = vmatprep.mubr.f32.mxu0 0.0
      %1519 = vmatmul.mubr.f32.gmra.mrb[0].mxu0 %v1056
      %v1520 = vpop.f32.mrb[0].mxu0
      %v1521 = vadd.f32 %v1296, %v1520
      %v1522 = vpop.f32.mrb[0].mxu0
      %1523 = vmatprep.mubr.f32.mxu0 0.0
      %1524 = vmatmul.mubr.f32.gmra.mrb[0].mxu0 %v1059
      %v1525 = vpop.f32.mrb[0].mxu0
      %v1526 = vadd.f32 %v1301, %v1525
      %v1527 = vpop.f32.mrb[0].mxu0
      %1528 = vmatprep.mubr.f32.mxu0 0.0
      %1529 = vmatmul.mubr.f32.gmra.mrb[0].mxu0 %v1062
      %v1530 = vpop.f32.mrb[0].mxu0
      %v1531 = vadd.f32 %v1306, %v1530
      %v1532 = vpop.f32.mrb[0].mxu0
      %1533 = vmatprep.mubr.f32.mxu0 0.0
      %1534 = vmatmul.mubr.f32.gmra.mrb[0].mxu0 %v1065
      %v1535 = vpop.f32.mrb[0].mxu0
      %v1536 = vadd.f32 %v1311, %v1535
      %v1537 = vpop.f32.mrb[0].mxu0
      %1538 = vmatprep.mubr.f32.mxu0 0.0
      %1539 = vmatmul.mubr.f32.gmra.mrb[0].mxu0 %v1068
      %v1540 = vpop.f32.mrb[0].mxu0
      %v1541 = vadd.f32 %v1316, %v1540
      %v1542 = vpop.f32.mrb[0].mxu0
      %1543 = vmatprep.mubr.f32.mxu0 0.0
      %1544 = vmatmul.mubr.f32.gmra.mrb[0].mxu0 %v1071
      %v1545 = vpop.f32.mrb[0].mxu0
      %v1546 = vadd.f32 %v1321, %v1545
      %v1547 = vpop.f32.mrb[0].mxu0
      %1548 = vmatprep.mubr.f32.mxu0 0.0
      %1549 = vmatmul.mubr.f32.gmra.mrb[0].mxu0 %v1074
      %v1550 = vpop.f32.mrb[0].mxu0
      %v1551 = vadd.f32 %v1326, %v1550
      %v1552 = vpop.f32.mrb[0].mxu0
      %1553 = vmatprep.mubr.f32.mxu0 0.0
      %1554 = vmatmul.mubr.f32.gmra.mrb[0].mxu0 %v1077
      %v1555 = vpop.f32.mrb[0].mxu0
      %v1556 = vadd.f32 %v1331, %v1555
      %v1557 = vpop.f32.mrb[0].mxu0
      %1558 = vmatprep.mubr.f32.mxu0 0.0
      %1559 = vmatmul.mubr.f32.gmra.mrb[0].mxu0 %v1080
      %v1560 = vpop.f32.mrb[0].mxu0
      %v1561 = vadd.f32 %v1336, %v1560
      %v1562 = vpop.f32.mrb[0].mxu0
      %1563 = vmatprep.mubr.f32.mxu0 0.0
      %1564 = vmatmul.mubr.f32.gmra.mrb[0].mxu0 %v1083
      %v1565 = vpop.f32.mrb[0].mxu0
      %v1566 = vadd.f32 %v1341, %v1565
      %v1567 = vpop.f32.mrb[0].mxu0
      %1568 = vmatprep.mubr.f32.mxu0 0.0
      %1569 = vmatmul.mubr.f32.gmra.mrb[0].mxu0 %v1086
      %v1570 = vpop.f32.mrb[0].mxu0
      %v1571 = vadd.f32 %v1346, %v1570
      %v1572 = vpop.f32.mrb[0].mxu0
      %1573 = vmatprep.mubr.f32.mxu0 0.0
      %1574 = vmatmul.mubr.f32.gmra.mrb[0].mxu0 %v1089
      %v1575 = vpop.f32.mrb[0].mxu0
      %v1576 = vadd.f32 %v1351, %v1575
      %v1577 = vpop.f32.mrb[0].mxu0
      %1578 = vmatprep.mubr.f32.mxu0 0.0
      %1579 = vmatmul.mubr.f32.gmra.mrb[0].mxu0 %v1092
      %v1580 = vpop.f32.mrb[0].mxu0
      %v1581 = vadd.f32 %v1356, %v1580
      %v1582 = vpop.f32.mrb[0].mxu0
      %1583 = vmatprep.mubr.f32.mxu0 0.0
      %1584 = vmatmul.mubr.f32.gmra.mrb[0].mxu0 %v1095
      %v1585 = vpop.f32.mrb[0].mxu0
      %v1586 = vadd.f32 %v1361, %v1585
      %v1587 = vpop.f32.mrb[0].mxu0
      %1588 = vmatprep.mubr.f32.mxu0 0.0
      %1589 = vmatmul.mubr.f32.gmra.mrb[0].mxu0 %v1098
      %v1590 = vpop.f32.mrb[0].mxu0
      %v1591 = vadd.f32 %v1366, %v1590
      %v1592 = vpop.f32.mrb[0].mxu0
      %1593 = vmatprep.mubr.f32.mxu0 0.0
      %1594 = vmatmul.mubr.f32.gmra.mrb[0].mxu0 %v1101
      %v1595 = vpop.f32.mrb[0].mxu0
      %v1596 = vadd.f32 %v1371, %v1595
      %v1597 = vpop.f32.mrb[0].mxu0
      %1598 = vmatprep.mubr.f32.mxu0 0.0
      %1599 = vmatmul.mubr.f32.gmra.mrb[0].mxu0 %v1104
      %v1600 = vpop.f32.mrb[0].mxu0
      %v1601 = vadd.f32 %v1376, %v1600
      %v1602 = vpop.f32.mrb[0].mxu0
      %1603 = vdwg.mxu0
      %1604 = vmatprep.subr.mxu0 0.0
      %1605 = vmatpush1.msra.mxu0 %v961
      %1606 = vmatprep.subr.mxu0 0.0
      %1607 = vmatpush1.msra.mxu0 %v962
      %1608 = vmatprep.subr.mxu0 0.0
      %1609 = vmatpush1.msra.mxu0 %v963
      %1610 = vmatprep.subr.mxu0 0.0
      %1611 = vmatpush1.msra.mxu0 %v964
      %1612 = vmatprep.subr.mxu0 0.0
      %1613 = vmatpush1.msra.mxu0 %v965
      %1614 = vmatprep.subr.mxu0 0.0
      %1615 = vmatpush1.msra.mxu0 %v966
      %1616 = vmatprep.subr.mxu0 0.0
      %1617 = vmatpush1.msra.mxu0 %v967
      %1618 = vmatprep.subr.mxu0 0.0
      %1619 = vmatpush1.msra.mxu0 %v968
      %1620 = vmatprep.subr.mxu0 0.0
      %1621 = vmatpush1.msra.mxu0 %v969
      %1622 = vmatprep.subr.mxu0 0.0
      %1623 = vmatpush1.msra.mxu0 %v970
      %1624 = vmatprep.subr.mxu0 0.0
      %1625 = vmatpush1.msra.mxu0 %v971
      %1626 = vmatprep.subr.mxu0 0.0
      %1627 = vmatpush1.msra.mxu0 %v972
      %1628 = vmatprep.subr.mxu0 0.0
      %1629 = vmatpush1.msra.mxu0 %v973
      %1630 = vmatprep.subr.mxu0 0.0
      %1631 = vmatpush1.msra.mxu0 %v974
      %1632 = vmatprep.subr.mxu0 0.0
      %1633 = vmatpush1.msra.mxu0 %v975
      %1634 = vmatprep.subr.mxu0 0.0
      %1635 = vmatpush1.msra.mxu0 %v976
      %1636 = vmatprep.subr.mxu0 0.0
      %1637 = vmatpush1.msra.mxu0 %v977
      %1638 = vmatprep.subr.mxu0 0.0
      %1639 = vmatpush1.msra.mxu0 %v978
      %1640 = vmatprep.subr.mxu0 0.0
      %1641 = vmatpush1.msra.mxu0 %v979
      %1642 = vmatprep.subr.mxu0 0.0
      %1643 = vmatpush1.msra.mxu0 %v980
      %1644 = vmatprep.subr.mxu0 0.0
      %1645 = vmatpush1.msra.mxu0 %v981
      %1646 = vmatprep.subr.mxu0 0.0
      %1647 = vmatpush1.msra.mxu0 %v982
      %1648 = vmatprep.subr.mxu0 0.0
      %1649 = vmatpush1.msra.mxu0 %v983
      %1650 = vmatprep.subr.mxu0 0.0
      %1651 = vmatpush1.msra.mxu0 %v984
      %1652 = vmatprep.subr.mxu0 0.0
      %1653 = vmatpush1.msra.mxu0 %v985
      %1654 = vmatprep.subr.mxu0 0.0
      %1655 = vmatpush1.msra.mxu0 %v986
      %1656 = vmatprep.subr.mxu0 0.0
      %1657 = vmatpush1.msra.mxu0 %v987
      %1658 = vmatprep.subr.mxu0 0.0
      %1659 = vmatpush1.msra.mxu0 %v988
      %1660 = vmatprep.subr.mxu0 0.0
      %1661 = vmatpush1.msra.mxu0 %v989
      %1662 = vmatprep.subr.mxu0 0.0
      %1663 = vmatpush1.msra.mxu0 %v990
      %1664 = vmatprep.subr.mxu0 0.0
      %1665 = vmatpush1.msra.mxu0 %v991
      %1666 = vmatprep.subr.mxu0 0.0
      %1667 = vmatpush1.msra.mxu0 %v992
      %1668 = vmatprep.mubr.f32.mxu0 %v866
      %1669 = vmatmul.mubr.f32.gmra.mrb[0].mxu0 %v865
      %v1670 = vpop.f32.mrb[0].mxu0
      %v1671 = vadd.f32 %v1446, %v1670
      %v1672 = vpop.f32.mrb[0].mxu0
      %1673 = vmatprep.mubr.f32.mxu0 %v869
      %1674 = vmatmul.mubr.f32.gmra.mrb[0].mxu0 %v868
      %v1675 = vpop.f32.mrb[0].mxu0
      %v1676 = vadd.f32 %v1451, %v1675
      %v1677 = vpop.f32.mrb[0].mxu0
      %1678 = vmatprep.mubr.f32.mxu0 %v872
      %1679 = vmatmul.mubr.f32.gmra.mrb[0].mxu0 %v871
      %v1680 = vpop.f32.mrb[0].mxu0
      %v1681 = vadd.f32 %v1456, %v1680
      %v1682 = vpop.f32.mrb[0].mxu0
      %1683 = vmatprep.mubr.f32.mxu0 %v875
      %1684 = vmatmul.mubr.f32.gmra.mrb[0].mxu0 %v874
      %v1685 = vpop.f32.mrb[0].mxu0
      %v1686 = vadd.f32 %v1461, %v1685
      %v1687 = vpop.f32.mrb[0].mxu0
      %1688 = vmatprep.mubr.f32.mxu0 %v878
      %1689 = vmatmul.mubr.f32.gmra.mrb[0].mxu0 %v877
      %v1690 = vpop.f32.mrb[0].mxu0
      %v1691 = vadd.f32 %v1466, %v1690
      %v1692 = vpop.f32.mrb[0].mxu0
      %1693 = vmatprep.mubr.f32.mxu0 %v881
      %1694 = vmatmul.mubr.f32.gmra.mrb[0].mxu0 %v880
      %v1695 = vpop.f32.mrb[0].mxu0
      %v1696 = vadd.f32 %v1471, %v1695
      %v1697 = vpop.f32.mrb[0].mxu0
      %1698 = vmatprep.mubr.f32.mxu0 %v884
      %1699 = vmatmul.mubr.f32.gmra.mrb[0].mxu0 %v883
      %v1700 = vpop.f32.mrb[0].mxu0
      %v1701 = vadd.f32 %v1476, %v1700
      %v1702 = vpop.f32.mrb[0].mxu0
      %1703 = vmatprep.mubr.f32.mxu0 %v887
      %1704 = vmatmul.mubr.f32.gmra.mrb[0].mxu0 %v886
      %v1705 = vpop.f32.mrb[0].mxu0
      %v1706 = vadd.f32 %v1481, %v1705
      %v1707 = vpop.f32.mrb[0].mxu0
      %1708 = vmatprep.mubr.f32.mxu0 %v890
      %1709 = vmatmul.mubr.f32.gmra.mrb[0].mxu0 %v889
      %v1710 = vpop.f32.mrb[0].mxu0
      %v1711 = vadd.f32 %v1486, %v1710
      %v1712 = vpop.f32.mrb[0].mxu0
      %1713 = vmatprep.mubr.f32.mxu0 %v893
      %1714 = vmatmul.mubr.f32.gmra.mrb[0].mxu0 %v892
      %v1715 = vpop.f32.mrb[0].mxu0
      %v1716 = vadd.f32 %v1491, %v1715
      %v1717 = vpop.f32.mrb[0].mxu0
      %1718 = vmatprep.mubr.f32.mxu0 %v896
      %1719 = vmatmul.mubr.f32.gmra.mrb[0].mxu0 %v895
      %v1720 = vpop.f32.mrb[0].mxu0
      %v1721 = vadd.f32 %v1496, %v1720
      %v1722 = vpop.f32.mrb[0].mxu0
      %1723 = vmatprep.mubr.f32.mxu0 %v899
      %1724 = vmatmul.mubr.f32.gmra.mrb[0].mxu0 %v898
      %v1725 = vpop.f32.mrb[0].mxu0
      %v1726 = vadd.f32 %v1501, %v1725
      %v1727 = vpop.f32.mrb[0].mxu0
      %1728 = vmatprep.mubr.f32.mxu0 %v902
      %1729 = vmatmul.mubr.f32.gmra.mrb[0].mxu0 %v901
      %v1730 = vpop.f32.mrb[0].mxu0
      %v1731 = vadd.f32 %v1506, %v1730
      %v1732 = vpop.f32.mrb[0].mxu0
      %1733 = vmatprep.mubr.f32.mxu0 %v905
      %1734 = vmatmul.mubr.f32.gmra.mrb[0].mxu0 %v904
      %v1735 = vpop.f32.mrb[0].mxu0
      %v1736 = vadd.f32 %v1511, %v1735
      %v1737 = vpop.f32.mrb[0].mxu0
      %1738 = vmatprep.mubr.f32.mxu0 %v908
      %1739 = vmatmul.mubr.f32.gmra.mrb[0].mxu0 %v907
      %v1740 = vpop.f32.mrb[0].mxu0
      %v1741 = vadd.f32 %v1516, %v1740
      %v1742 = vpop.f32.mrb[0].mxu0
      %1743 = vmatprep.mubr.f32.mxu0 %v911
      %1744 = vmatmul.mubr.f32.gmra.mrb[0].mxu0 %v910
      %v1745 = vpop.f32.mrb[0].mxu0
      %v1746 = vadd.f32 %v1521, %v1745
      %v1747 = vpop.f32.mrb[0].mxu0
      %1748 = vmatprep.mubr.f32.mxu0 %v914
      %1749 = vmatmul.mubr.f32.gmra.mrb[0].mxu0 %v913
      %v1750 = vpop.f32.mrb[0].mxu0
      %v1751 = vadd.f32 %v1526, %v1750
      %v1752 = vpop.f32.mrb[0].mxu0
      %1753 = vmatprep.mubr.f32.mxu0 %v917
      %1754 = vmatmul.mubr.f32.gmra.mrb[0].mxu0 %v916
      %v1755 = vpop.f32.mrb[0].mxu0
      %v1756 = vadd.f32 %v1531, %v1755
      %v1757 = vpop.f32.mrb[0].mxu0
      %1758 = vmatprep.mubr.f32.mxu0 %v920
      %1759 = vmatmul.mubr.f32.gmra.mrb[0].mxu0 %v919
      %v1760 = vpop.f32.mrb[0].mxu0
      %v1761 = vadd.f32 %v1536, %v1760
      %v1762 = vpop.f32.mrb[0].mxu0
      %1763 = vmatprep.mubr.f32.mxu0 %v923
      %1764 = vmatmul.mubr.f32.gmra.mrb[0].mxu0 %v922
      %v1765 = vpop.f32.mrb[0].mxu0
      %v1766 = vadd.f32 %v1541, %v1765
      %v1767 = vpop.f32.mrb[0].mxu0
      %1768 = vmatprep.mubr.f32.mxu0 %v926
      %1769 = vmatmul.mubr.f32.gmra.mrb[0].mxu0 %v925
      %v1770 = vpop.f32.mrb[0].mxu0
      %v1771 = vadd.f32 %v1546, %v1770
      %v1772 = vpop.f32.mrb[0].mxu0
      %1773 = vmatprep.mubr.f32.mxu0 %v929
      %1774 = vmatmul.mubr.f32.gmra.mrb[0].mxu0 %v928
      %v1775 = vpop.f32.mrb[0].mxu0
      %v1776 = vadd.f32 %v1551, %v1775
      %v1777 = vpop.f32.mrb[0].mxu0
      %1778 = vmatprep.mubr.f32.mxu0 %v932
      %1779 = vmatmul.mubr.f32.gmra.mrb[0].mxu0 %v931
      %v1780 = vpop.f32.mrb[0].mxu0
      %v1781 = vadd.f32 %v1556, %v1780
      %v1782 = vpop.f32.mrb[0].mxu0
      %1783 = vmatprep.mubr.f32.mxu0 %v935
      %1784 = vmatmul.mubr.f32.gmra.mrb[0].mxu0 %v934
      %v1785 = vpop.f32.mrb[0].mxu0
      %v1786 = vadd.f32 %v1561, %v1785
      %v1787 = vpop.f32.mrb[0].mxu0
      %1788 = vmatprep.mubr.f32.mxu0 %v938
      %1789 = vmatmul.mubr.f32.gmra.mrb[0].mxu0 %v937
      %v1790 = vpop.f32.mrb[0].mxu0
      %v1791 = vadd.f32 %v1566, %v1790
      %v1792 = vpop.f32.mrb[0].mxu0
      %1793 = vmatprep.mubr.f32.mxu0 %v941
      %1794 = vmatmul.mubr.f32.gmra.mrb[0].mxu0 %v940
      %v1795 = vpop.f32.mrb[0].mxu0
      %v1796 = vadd.f32 %v1571, %v1795
      %v1797 = vpop.f32.mrb[0].mxu0
      %1798 = vmatprep.mubr.f32.mxu0 %v944
      %1799 = vmatmul.mubr.f32.gmra.mrb[0].mxu0 %v943
      %v1800 = vpop.f32.mrb[0].mxu0
      %v1801 = vadd.f32 %v1576, %v1800
      %v1802 = vpop.f32.mrb[0].mxu0
      %1803 = vmatprep.mubr.f32.mxu0 %v947
      %1804 = vmatmul.mubr.f32.gmra.mrb[0].mxu0 %v946
      %v1805 = vpop.f32.mrb[0].mxu0
      %v1806 = vadd.f32 %v1581, %v1805
      %v1807 = vpop.f32.mrb[0].mxu0
      %1808 = vmatprep.mubr.f32.mxu0 %v950
      %1809 = vmatmul.mubr.f32.gmra.mrb[0].mxu0 %v949
      %v1810 = vpop.f32.mrb[0].mxu0
      %v1811 = vadd.f32 %v1586, %v1810
      %v1812 = vpop.f32.mrb[0].mxu0
      %1813 = vmatprep.mubr.f32.mxu0 %v953
      %1814 = vmatmul.mubr.f32.gmra.mrb[0].mxu0 %v952
      %v1815 = vpop.f32.mrb[0].mxu0
      %v1816 = vadd.f32 %v1591, %v1815
      %v1817 = vpop.f32.mrb[0].mxu0
      %1818 = vmatprep.mubr.f32.mxu0 %v956
      %1819 = vmatmul.mubr.f32.gmra.mrb[0].mxu0 %v955
      %v1820 = vpop.f32.mrb[0].mxu0
      %v1821 = vadd.f32 %v1596, %v1820
      %v1822 = vpop.f32.mrb[0].mxu0
      %1823 = vmatprep.mubr.f32.mxu0 %v959
      %1824 = vmatmul.mubr.f32.gmra.mrb[0].mxu0 %v958
      %v1825 = vpop.f32.mrb[0].mxu0
      %v1826 = vadd.f32 %v1601, %v1825
      %v1827 = vpop.f32.mrb[0].mxu0
      %1828 = vdwg.mxu0
      %1829 = vmatprep.subr.mxu0 0.0
      %1830 = vmatpush1.msra.mxu0 %v993
      %1831 = vmatprep.subr.mxu0 0.0
      %1832 = vmatpush1.msra.mxu0 %v994
      %1833 = vmatprep.subr.mxu0 0.0
      %1834 = vmatpush1.msra.mxu0 %v995
      %1835 = vmatprep.subr.mxu0 0.0
      %1836 = vmatpush1.msra.mxu0 %v996
      %1837 = vmatprep.subr.mxu0 0.0
      %1838 = vmatpush1.msra.mxu0 %v997
      %1839 = vmatprep.subr.mxu0 0.0
      %1840 = vmatpush1.msra.mxu0 %v998
      %1841 = vmatprep.subr.mxu0 0.0
      %1842 = vmatpush1.msra.mxu0 %v999
      %1843 = vmatprep.subr.mxu0 0.0
      %1844 = vmatpush1.msra.mxu0 %v1000
      %1845 = vmatprep.subr.mxu0 0.0
      %1846 = vmatpush1.msra.mxu0 %v1001
      %1847 = vmatprep.subr.mxu0 0.0
      %1848 = vmatpush1.msra.mxu0 %v1002
      %1849 = vmatprep.subr.mxu0 0.0
      %1850 = vmatpush1.msra.mxu0 %v1003
      %1851 = vmatprep.subr.mxu0 0.0
      %1852 = vmatpush1.msra.mxu0 %v1004
      %1853 = vmatprep.subr.mxu0 0.0
      %1854 = vmatpush1.msra.mxu0 %v1005
      %1855 = vmatprep.subr.mxu0 0.0
      %1856 = vmatpush1.msra.mxu0 %v1006
      %1857 = vmatprep.subr.mxu0 0.0
      %1858 = vmatpush1.msra.mxu0 %v1007
      %1859 = vmatprep.subr.mxu0 0.0
      %1860 = vmatpush1.msra.mxu0 %v1008
      %1861 = vmatprep.subr.mxu0 0.0
      %1862 = vmatpush1.msra.mxu0 0.0
      %1863 = vmatprep.subr.mxu0 0.0
      %1864 = vmatpush1.msra.mxu0 0.0
      %1865 = vmatprep.subr.mxu0 0.0
      %1866 = vmatpush1.msra.mxu0 0.0
      %1867 = vmatprep.subr.mxu0 0.0
      %1868 = vmatpush1.msra.mxu0 0.0
      %1869 = vmatprep.subr.mxu0 0.0
      %1870 = vmatpush1.msra.mxu0 0.0
      %1871 = vmatprep.subr.mxu0 0.0
      %1872 = vmatpush1.msra.mxu0 0.0
      %1873 = vmatprep.subr.mxu0 0.0
      %1874 = vmatpush1.msra.mxu0 0.0
      %1875 = vmatprep.subr.mxu0 0.0
      %1876 = vmatpush1.msra.mxu0 0.0
      %1877 = vmatprep.subr.mxu0 0.0
      %1878 = vmatpush1.msra.mxu0 0.0
      %1879 = vmatprep.subr.mxu0 0.0
      %1880 = vmatpush1.msra.mxu0 0.0
      %1881 = vmatprep.subr.mxu0 0.0
      %1882 = vmatpush1.msra.mxu0 0.0
      %1883 = vmatprep.subr.mxu0 0.0
      %1884 = vmatpush1.msra.mxu0 0.0
      %1885 = vmatprep.subr.mxu0 0.0
      %1886 = vmatpush1.msra.mxu0 0.0
      %1887 = vmatprep.subr.mxu0 0.0
      %1888 = vmatpush1.msra.mxu0 0.0
      %1889 = vmatprep.subr.mxu0 0.0
      %1890 = vmatpush1.msra.mxu0 0.0
      %1891 = vmatprep.subr.mxu0 0.0
      %1892 = vmatpush1.msra.mxu0 0.0
      %1893 = vmatprep.mubr.f32.mxu0 0.0
      %1894 = vmatmul.mubr.f32.gmra.mrb[0].mxu0 %v867
      %v1895 = vpop.f32.mrb[0].mxu0
      %v1896 = vadd.f32 %v1671, %v1895
      %v1897 = vpop.f32.mrb[0].mxu0
      %1898 = vmatprep.mubr.f32.mxu0 0.0
      %1899 = vmatmul.mubr.f32.gmra.mrb[0].mxu0 %v870
      %v1900 = vpop.f32.mrb[0].mxu0
      %v1901 = vadd.f32 %v1676, %v1900
      %v1902 = vpop.f32.mrb[0].mxu0
      %1903 = vmatprep.mubr.f32.mxu0 0.0
      %1904 = vmatmul.mubr.f32.gmra.mrb[0].mxu0 %v873
      %v1905 = vpop.f32.mrb[0].mxu0
      %v1906 = vadd.f32 %v1681, %v1905
      %v1907 = vpop.f32.mrb[0].mxu0
      %1908 = vmatprep.mubr.f32.mxu0 0.0
      %1909 = vmatmul.mubr.f32.gmra.mrb[0].mxu0 %v876
      %v1910 = vpop.f32.mrb[0].mxu0
      %v1911 = vadd.f32 %v1686, %v1910
      %v1912 = vpop.f32.mrb[0].mxu0
      %1913 = vmatprep.mubr.f32.mxu0 0.0
      %1914 = vmatmul.mubr.f32.gmra.mrb[0].mxu0 %v879
      %v1915 = vpop.f32.mrb[0].mxu0
      %v1916 = vadd.f32 %v1691, %v1915
      %v1917 = vpop.f32.mrb[0].mxu0
      %1918 = vmatprep.mubr.f32.mxu0 0.0
      %1919 = vmatmul.mubr.f32.gmra.mrb[0].mxu0 %v882
      %v1920 = vpop.f32.mrb[0].mxu0
      %v1921 = vadd.f32 %v1696, %v1920
      %v1922 = vpop.f32.mrb[0].mxu0
      %1923 = vmatprep.mubr.f32.mxu0 0.0
      %1924 = vmatmul.mubr.f32.gmra.mrb[0].mxu0 %v885
      %v1925 = vpop.f32.mrb[0].mxu0
      %v1926 = vadd.f32 %v1701, %v1925
      %v1927 = vpop.f32.mrb[0].mxu0
      %1928 = vmatprep.mubr.f32.mxu0 0.0
      %1929 = vmatmul.mubr.f32.gmra.mrb[0].mxu0 %v888
      %v1930 = vpop.f32.mrb[0].mxu0
      %v1931 = vadd.f32 %v1706, %v1930
      %v1932 = vpop.f32.mrb[0].mxu0
      %1933 = vmatprep.mubr.f32.mxu0 0.0
      %1934 = vmatmul.mubr.f32.gmra.mrb[0].mxu0 %v891
      %v1935 = vpop.f32.mrb[0].mxu0
      %v1936 = vadd.f32 %v1711, %v1935
      %v1937 = vpop.f32.mrb[0].mxu0
      %1938 = vmatprep.mubr.f32.mxu0 0.0
      %1939 = vmatmul.mubr.f32.gmra.mrb[0].mxu0 %v894
      %v1940 = vpop.f32.mrb[0].mxu0
      %v1941 = vadd.f32 %v1716, %v1940
      %v1942 = vpop.f32.mrb[0].mxu0
      %1943 = vmatprep.mubr.f32.mxu0 0.0
      %1944 = vmatmul.mubr.f32.gmra.mrb[0].mxu0 %v897
      %v1945 = vpop.f32.mrb[0].mxu0
      %v1946 = vadd.f32 %v1721, %v1945
      %v1947 = vpop.f32.mrb[0].mxu0
      %1948 = vmatprep.mubr.f32.mxu0 0.0
      %1949 = vmatmul.mubr.f32.gmra.mrb[0].mxu0 %v900
      %v1950 = vpop.f32.mrb[0].mxu0
      %v1951 = vadd.f32 %v1726, %v1950
      %v1952 = vpop.f32.mrb[0].mxu0
      %1953 = vmatprep.mubr.f32.mxu0 0.0
      %1954 = vmatmul.mubr.f32.gmra.mrb[0].mxu0 %v903
      %v1955 = vpop.f32.mrb[0].mxu0
      %v1956 = vadd.f32 %v1731, %v1955
      %v1957 = vpop.f32.mrb[0].mxu0
      %1958 = vmatprep.mubr.f32.mxu0 0.0
      %1959 = vmatmul.mubr.f32.gmra.mrb[0].mxu0 %v906
      %v1960 = vpop.f32.mrb[0].mxu0
      %v1961 = vadd.f32 %v1736, %v1960
      %v1962 = vpop.f32.mrb[0].mxu0
      %1963 = vmatprep.mubr.f32.mxu0 0.0
      %1964 = vmatmul.mubr.f32.gmra.mrb[0].mxu0 %v909
      %v1965 = vpop.f32.mrb[0].mxu0
      %v1966 = vadd.f32 %v1741, %v1965
      %v1967 = vpop.f32.mrb[0].mxu0
      %1968 = vmatprep.mubr.f32.mxu0 0.0
      %1969 = vmatmul.mubr.f32.gmra.mrb[0].mxu0 %v912
      %v1970 = vpop.f32.mrb[0].mxu0
      %v1971 = vadd.f32 %v1746, %v1970
      %v1972 = vpop.f32.mrb[0].mxu0
      %1973 = vmatprep.mubr.f32.mxu0 0.0
      %1974 = vmatmul.mubr.f32.gmra.mrb[0].mxu0 %v915
      %v1975 = vpop.f32.mrb[0].mxu0
      %v1976 = vadd.f32 %v1751, %v1975
      %v1977 = vpop.f32.mrb[0].mxu0
      %1978 = vmatprep.mubr.f32.mxu0 0.0
      %1979 = vmatmul.mubr.f32.gmra.mrb[0].mxu0 %v918
      %v1980 = vpop.f32.mrb[0].mxu0
      %v1981 = vadd.f32 %v1756, %v1980
      %v1982 = vpop.f32.mrb[0].mxu0
      %1983 = vmatprep.mubr.f32.mxu0 0.0
      %1984 = vmatmul.mubr.f32.gmra.mrb[0].mxu0 %v921
      %v1985 = vpop.f32.mrb[0].mxu0
      %v1986 = vadd.f32 %v1761, %v1985
      %v1987 = vpop.f32.mrb[0].mxu0
      %1988 = vmatprep.mubr.f32.mxu0 0.0
      %1989 = vmatmul.mubr.f32.gmra.mrb[0].mxu0 %v924
      %v1990 = vpop.f32.mrb[0].mxu0
      %v1991 = vadd.f32 %v1766, %v1990
      %v1992 = vpop.f32.mrb[0].mxu0
      %1993 = vmatprep.mubr.f32.mxu0 0.0
      %1994 = vmatmul.mubr.f32.gmra.mrb[0].mxu0 %v927
      %v1995 = vpop.f32.mrb[0].mxu0
      %v1996 = vadd.f32 %v1771, %v1995
      %v1997 = vpop.f32.mrb[0].mxu0
      %1998 = vmatprep.mubr.f32.mxu0 0.0
      %1999 = vmatmul.mubr.f32.gmra.mrb[0].mxu0 %v930
      %v2000 = vpop.f32.mrb[0].mxu0
      %v2001 = vadd.f32 %v1776, %v2000
      %v2002 = vpop.f32.mrb[0].mxu0
      %2003 = vmatprep.mubr.f32.mxu0 0.0
      %2004 = vmatmul.mubr.f32.gmra.mrb[0].mxu0 %v933
      %v2005 = vpop.f32.mrb[0].mxu0
      %v2006 = vadd.f32 %v1781, %v2005
      %v2007 = vpop.f32.mrb[0].mxu0
      %2008 = vmatprep.mubr.f32.mxu0 0.0
      %2009 = vmatmul.mubr.f32.gmra.mrb[0].mxu0 %v936
      %v2010 = vpop.f32.mrb[0].mxu0
      %v2011 = vadd.f32 %v1786, %v2010
      %v2012 = vpop.f32.mrb[0].mxu0
      %2013 = vmatprep.mubr.f32.mxu0 0.0
      %2014 = vmatmul.mubr.f32.gmra.mrb[0].mxu0 %v939
      %v2015 = vpop.f32.mrb[0].mxu0
      %v2016 = vadd.f32 %v1791, %v2015
      %v2017 = vpop.f32.mrb[0].mxu0
      %2018 = vmatprep.mubr.f32.mxu0 0.0
      %2019 = vmatmul.mubr.f32.gmra.mrb[0].mxu0 %v942
      %v2020 = vpop.f32.mrb[0].mxu0
      %v2021 = vadd.f32 %v1796, %v2020
      %v2022 = vpop.f32.mrb[0].mxu0
      %2023 = vmatprep.mubr.f32.mxu0 0.0
      %2024 = vmatmul.mubr.f32.gmra.mrb[0].mxu0 %v945
      %v2025 = vpop.f32.mrb[0].mxu0
      %v2026 = vadd.f32 %v1801, %v2025
      %v2027 = vpop.f32.mrb[0].mxu0
      %2028 = vmatprep.mubr.f32.mxu0 0.0
      %2029 = vmatmul.mubr.f32.gmra.mrb[0].mxu0 %v948
      %v2030 = vpop.f32.mrb[0].mxu0
      %v2031 = vadd.f32 %v1806, %v2030
      %v2032 = vpop.f32.mrb[0].mxu0
      %2033 = vmatprep.mubr.f32.mxu0 0.0
      %2034 = vmatmul.mubr.f32.gmra.mrb[0].mxu0 %v951
      %v2035 = vpop.f32.mrb[0].mxu0
      %v2036 = vadd.f32 %v1811, %v2035
      %v2037 = vpop.f32.mrb[0].mxu0
      %2038 = vmatprep.mubr.f32.mxu0 0.0
      %2039 = vmatmul.mubr.f32.gmra.mrb[0].mxu0 %v954
      %v2040 = vpop.f32.mrb[0].mxu0
      %v2041 = vadd.f32 %v1816, %v2040
      %v2042 = vpop.f32.mrb[0].mxu0
      %2043 = vmatprep.mubr.f32.mxu0 0.0
      %2044 = vmatmul.mubr.f32.gmra.mrb[0].mxu0 %v957
      %v2045 = vpop.f32.mrb[0].mxu0
      %v2046 = vadd.f32 %v1821, %v2045
      %v2047 = vpop.f32.mrb[0].mxu0
      %2048 = vmatprep.mubr.f32.mxu0 0.0
      %2049 = vmatmul.mubr.f32.gmra.mrb[0].mxu0 %v960
      %v2050 = vpop.f32.mrb[0].mxu0
      %v2051 = vadd.f32 %v1826, %v2050
      %v2052 = vpop.f32.mrb[0].mxu0
      %2053 = vdwg.mxu0
      %s2054 = scalar_lea.vmem [#allocation2], 96
      %v2055 = vld [vmem:[%s2054] sm:$0xff]
      %v2056 = vld [vmem:[%s2054 + $0x8] sm:$0xff]
      %v2057 = vld [vmem:[%s2054 + $0x10] sm:$0xff]
      %v2058 = vld [vmem:[%s2054 + $0x18] sm:$0xff]
      %v2059 = vld [vmem:[%s2054 + $0x20] sm:$0xff]
      %v2060 = vld [vmem:[%s2054 + $0x28] sm:$0xff]
      %v2061 = vld [vmem:[%s2054 + $0x30] sm:$0xff]
      %v2062 = vld [vmem:[%s2054 + $0x38] sm:$0xff]
      %v2063 = vld [vmem:[%s2054 + $0x40] sm:$0xff]
      %v2064 = vld [vmem:[%s2054 + $0x48] sm:$0xff]
      %v2065 = vld [vmem:[%s2054 + $0x50] sm:$0xff]
      %v2066 = vld [vmem:[%s2054 + $0x58] sm:$0xff]
      %v2067 = vld [vmem:[%s2054 + $0x60] sm:$0xff]
      %v2068 = vld [vmem:[%s2054 + $0x68] sm:$0xff]
      %v2069 = vld [vmem:[%s2054 + $0x70] sm:$0xff]
      %v2070 = vld [vmem:[%s2054 + $0x78] sm:$0xff]
      %v2071 = vld [vmem:[%s2054 + $0x80] sm:$0xff]
      %v2072 = vld [vmem:[%s2054 + $0x88] sm:$0xff]
      %v2073 = vld [vmem:[%s2054 + $0x90] sm:$0xff]
      %v2074 = vld [vmem:[%s2054 + $0x98] sm:$0xff]
      %v2075 = vld [vmem:[%s2054 + $0xa0] sm:$0xff]
      %v2076 = vld [vmem:[%s2054 + $0xa8] sm:$0xff]
      %v2077 = vld [vmem:[%s2054 + $0xb0] sm:$0xff]
      %v2078 = vld [vmem:[%s2054 + $0xb8] sm:$0xff]
      %v2079 = vld [vmem:[%s2054 + $0xc0] sm:$0xff]
      %v2080 = vld [vmem:[%s2054 + $0xc8] sm:$0xff]
      %v2081 = vld [vmem:[%s2054 + $0xd0] sm:$0xff]
      %v2082 = vld [vmem:[%s2054 + $0xd8] sm:$0xff]
      %v2083 = vld [vmem:[%s2054 + $0xe0] sm:$0xff]
      %v2084 = vld [vmem:[%s2054 + $0xe8] sm:$0xff]
      %v2085 = vld [vmem:[%s2054 + $0xf0] sm:$0xff]
      %v2086 = vld [vmem:[%s2054 + $0xf8] sm:$0xff]
      %v2087 = vld [vmem:[%s2054 + $0x100] sm:$0xff]
      %v2088 = vld [vmem:[%s2054 + $0x108] sm:$0xff]
      %v2089 = vld [vmem:[%s2054 + $0x110] sm:$0xff]
      %v2090 = vld [vmem:[%s2054 + $0x118] sm:$0xff]
      %v2091 = vld [vmem:[%s2054 + $0x120] sm:$0xff]
      %v2092 = vld [vmem:[%s2054 + $0x128] sm:$0xff]
      %v2093 = vld [vmem:[%s2054 + $0x130] sm:$0xff]
      %v2094 = vld [vmem:[%s2054 + $0x138] sm:$0xff]
      %v2095 = vld [vmem:[%s2054 + $0x140] sm:$0xff]
      %v2096 = vld [vmem:[%s2054 + $0x148] sm:$0xff]
      %v2097 = vld [vmem:[%s2054 + $0x150] sm:$0xff]
      %v2098 = vld [vmem:[%s2054 + $0x158] sm:$0xff]
      %v2099 = vld [vmem:[%s2054 + $0x160] sm:$0xff]
      %v2100 = vld [vmem:[%s2054 + $0x168] sm:$0xff]
      %v2101 = vld [vmem:[%s2054 + $0x170] sm:$0xff]
      %v2102 = vld [vmem:[%s2054 + $0x178] sm:$0xff]
      %v2103 = vld [vmem:[%s2054 + $0x180] sm:$0xff]
      %v2104 = vld [vmem:[%s2054 + $0x188] sm:$0xff]
      %v2105 = vld [vmem:[%s2054 + $0x190] sm:$0xff]
      %v2106 = vld [vmem:[%s2054 + $0x198] sm:$0xff]
      %v2107 = vld [vmem:[%s2054 + $0x1a0] sm:$0xff]
      %v2108 = vld [vmem:[%s2054 + $0x1a8] sm:$0xff]
      %v2109 = vld [vmem:[%s2054 + $0x1b0] sm:$0xff]
      %v2110 = vld [vmem:[%s2054 + $0x1b8] sm:$0xff]
      %v2111 = vld [vmem:[%s2054 + $0x1c0] sm:$0xff]
      %v2112 = vld [vmem:[%s2054 + $0x1c8] sm:$0xff]
      %v2113 = vld [vmem:[%s2054 + $0x1d0] sm:$0xff]
      %v2114 = vld [vmem:[%s2054 + $0x1d8] sm:$0xff]
      %v2115 = vld [vmem:[%s2054 + $0x1e0] sm:$0xff]
      %v2116 = vld [vmem:[%s2054 + $0x1e8] sm:$0xff]
      %v2117 = vld [vmem:[%s2054 + $0x1f0] sm:$0xff]
      %v2118 = vld [vmem:[%s2054 + $0x1f8] sm:$0xff]
      %v2119 = vld [vmem:[%s2054 + $0x200] sm:$0xff]
      %v2120 = vld [vmem:[%s2054 + $0x208] sm:$0xff]
      %v2121 = vld [vmem:[%s2054 + $0x210] sm:$0xff]
      %v2122 = vld [vmem:[%s2054 + $0x218] sm:$0xff]
      %v2123 = vld [vmem:[%s2054 + $0x220] sm:$0xff]
      %v2124 = vld [vmem:[%s2054 + $0x228] sm:$0xff]
      %v2125 = vld [vmem:[%s2054 + $0x230] sm:$0xff]
      %v2126 = vld [vmem:[%s2054 + $0x238] sm:$0xff]
      %v2127 = vld [vmem:[%s2054 + $0x240] sm:$0xff]
      %v2128 = vld [vmem:[%s2054 + $0x248] sm:$0xff]
      %v2129 = vld [vmem:[%s2054 + $0x250] sm:$0xff]
      %v2130 = vld [vmem:[%s2054 + $0x258] sm:$0xff]
      %v2131 = vld [vmem:[%s2054 + $0x260] sm:$0xff]
      %v2132 = vld [vmem:[%s2054 + $0x268] sm:$0xff]
      %v2133 = vld [vmem:[%s2054 + $0x270] sm:$0xff]
      %v2134 = vld [vmem:[%s2054 + $0x278] sm:$0xff]
      %v2135 = vld [vmem:[%s2054 + $0x280] sm:$0xff]
      %v2136 = vld [vmem:[%s2054 + $0x288] sm:$0xff]
      %v2137 = vld [vmem:[%s2054 + $0x290] sm:$0xff]
      %v2138 = vld [vmem:[%s2054 + $0x298] sm:$0xff]
      %v2139 = vld [vmem:[%s2054 + $0x2a0] sm:$0xff]
      %v2140 = vld [vmem:[%s2054 + $0x2a8] sm:$0xff]
      %v2141 = vld [vmem:[%s2054 + $0x2b0] sm:$0xff]
      %v2142 = vld [vmem:[%s2054 + $0x2b8] sm:$0xff]
      %v2143 = vld [vmem:[%s2054 + $0x2c0] sm:$0xff]
      %v2144 = vld [vmem:[%s2054 + $0x2c8] sm:$0xff]
      %v2145 = vld [vmem:[%s2054 + $0x2d0] sm:$0xff]
      %v2146 = vld [vmem:[%s2054 + $0x2d8] sm:$0xff]
      %v2147 = vld [vmem:[%s2054 + $0x2e0] sm:$0xff]
      %v2148 = vld [vmem:[%s2054 + $0x2e8] sm:$0xff]
      %v2149 = vld [vmem:[%s2054 + $0x2f0] sm:$0xff]
      %v2150 = vld [vmem:[%s2054 + $0x2f8] sm:$0xff]
      %s2151 = scalar_lea.vmem %s2, 768
      %v2152 = vld [vmem:[%s2151] sm:$0xff]
      %v2153 = vld [vmem:[%s2151 + $0x8] sm:$0xff]
      %v2154 = vld [vmem:[%s2151 + $0x10] sm:$0xff]
      %v2155 = vld [vmem:[%s2151 + $0x18] sm:$0xff]
      %v2156 = vld [vmem:[%s2151 + $0x20] sm:$0xff]
      %v2157 = vld [vmem:[%s2151 + $0x28] sm:$0xff]
      %v2158 = vld [vmem:[%s2151 + $0x30] sm:$0xff]
      %v2159 = vld [vmem:[%s2151 + $0x38] sm:$0xff]
      %v2160 = vld [vmem:[%s2151 + $0x40] sm:$0xff]
      %v2161 = vld [vmem:[%s2151 + $0x48] sm:$0xff]
      %v2162 = vld [vmem:[%s2151 + $0x50] sm:$0xff]
      %v2163 = vld [vmem:[%s2151 + $0x58] sm:$0xff]
      %v2164 = vld [vmem:[%s2151 + $0x60] sm:$0xff]
      %v2165 = vld [vmem:[%s2151 + $0x68] sm:$0xff]
      %v2166 = vld [vmem:[%s2151 + $0x70] sm:$0xff]
      %v2167 = vld [vmem:[%s2151 + $0x78] sm:$0xff]
      %v2168 = vld [vmem:[%s2151 + $0x80] sm:$0xff]
      %v2169 = vld [vmem:[%s2151 + $0x88] sm:$0xff]
      %v2170 = vld [vmem:[%s2151 + $0x90] sm:$0xff]
      %v2171 = vld [vmem:[%s2151 + $0x98] sm:$0xff]
      %v2172 = vld [vmem:[%s2151 + $0xa0] sm:$0xff]
      %v2173 = vld [vmem:[%s2151 + $0xa8] sm:$0xff]
      %v2174 = vld [vmem:[%s2151 + $0xb0] sm:$0xff]
      %v2175 = vld [vmem:[%s2151 + $0xb8] sm:$0xff]
      %v2176 = vld [vmem:[%s2151 + $0xc0] sm:$0xff]
      %v2177 = vld [vmem:[%s2151 + $0xc8] sm:$0xff]
      %v2178 = vld [vmem:[%s2151 + $0xd0] sm:$0xff]
      %v2179 = vld [vmem:[%s2151 + $0xd8] sm:$0xff]
      %v2180 = vld [vmem:[%s2151 + $0xe0] sm:$0xff]
      %v2181 = vld [vmem:[%s2151 + $0xe8] sm:$0xff]
      %v2182 = vld [vmem:[%s2151 + $0xf0] sm:$0xff]
      %v2183 = vld [vmem:[%s2151 + $0xf8] sm:$0xff]
      %v2184 = vld [vmem:[%s2151 + $0x100] sm:$0xff]
      %v2185 = vld [vmem:[%s2151 + $0x108] sm:$0xff]
      %v2186 = vld [vmem:[%s2151 + $0x110] sm:$0xff]
      %v2187 = vld [vmem:[%s2151 + $0x118] sm:$0xff]
      %v2188 = vld [vmem:[%s2151 + $0x120] sm:$0xff]
      %v2189 = vld [vmem:[%s2151 + $0x128] sm:$0xff]
      %v2190 = vld [vmem:[%s2151 + $0x130] sm:$0xff]
      %v2191 = vld [vmem:[%s2151 + $0x138] sm:$0xff]
      %v2192 = vld [vmem:[%s2151 + $0x140] sm:$0xff]
      %v2193 = vld [vmem:[%s2151 + $0x148] sm:$0xff]
      %v2194 = vld [vmem:[%s2151 + $0x150] sm:$0xff]
      %v2195 = vld [vmem:[%s2151 + $0x158] sm:$0xff]
      %v2196 = vld [vmem:[%s2151 + $0x160] sm:$0xff]
      %v2197 = vld [vmem:[%s2151 + $0x168] sm:$0xff]
      %v2198 = vld [vmem:[%s2151 + $0x170] sm:$0xff]
      %v2199 = vld [vmem:[%s2151 + $0x178] sm:$0xff]
      %2200 = vmatprep.subr.mxu0 0.0
      %2201 = vmatpush1.msra.mxu0 %v2152
      %2202 = vmatprep.subr.mxu0 0.0
      %2203 = vmatpush1.msra.mxu0 %v2153
      %2204 = vmatprep.subr.mxu0 0.0
      %2205 = vmatpush1.msra.mxu0 %v2154
      %2206 = vmatprep.subr.mxu0 0.0
      %2207 = vmatpush1.msra.mxu0 %v2155
      %2208 = vmatprep.subr.mxu0 0.0
      %2209 = vmatpush1.msra.mxu0 %v2156
      %2210 = vmatprep.subr.mxu0 0.0
      %2211 = vmatpush1.msra.mxu0 %v2157
      %2212 = vmatprep.subr.mxu0 0.0
      %2213 = vmatpush1.msra.mxu0 %v2158
      %2214 = vmatprep.subr.mxu0 0.0
      %2215 = vmatpush1.msra.mxu0 %v2159
      %2216 = vmatprep.subr.mxu0 0.0
      %2217 = vmatpush1.msra.mxu0 %v2160
      %2218 = vmatprep.subr.mxu0 0.0
      %2219 = vmatpush1.msra.mxu0 %v2161
      %2220 = vmatprep.subr.mxu0 0.0
      %2221 = vmatpush1.msra.mxu0 %v2162
      %2222 = vmatprep.subr.mxu0 0.0
      %2223 = vmatpush1.msra.mxu0 %v2163
      %2224 = vmatprep.subr.mxu0 0.0
      %2225 = vmatpush1.msra.mxu0 %v2164
      %2226 = vmatprep.subr.mxu0 0.0
      %2227 = vmatpush1.msra.mxu0 %v2165
      %2228 = vmatprep.subr.mxu0 0.0
      %2229 = vmatpush1.msra.mxu0 %v2166
      %2230 = vmatprep.subr.mxu0 0.0
      %2231 = vmatpush1.msra.mxu0 %v2167
      %2232 = vmatprep.subr.mxu0 0.0
      %2233 = vmatpush1.msra.mxu0 %v2168
      %2234 = vmatprep.subr.mxu0 0.0
      %2235 = vmatpush1.msra.mxu0 %v2169
      %2236 = vmatprep.subr.mxu0 0.0
      %2237 = vmatpush1.msra.mxu0 %v2170
      %2238 = vmatprep.subr.mxu0 0.0
      %2239 = vmatpush1.msra.mxu0 %v2171
      %2240 = vmatprep.subr.mxu0 0.0
      %2241 = vmatpush1.msra.mxu0 %v2172
      %2242 = vmatprep.subr.mxu0 0.0
      %2243 = vmatpush1.msra.mxu0 %v2173
      %2244 = vmatprep.subr.mxu0 0.0
      %2245 = vmatpush1.msra.mxu0 %v2174
      %2246 = vmatprep.subr.mxu0 0.0
      %2247 = vmatpush1.msra.mxu0 %v2175
      %2248 = vmatprep.subr.mxu0 0.0
      %2249 = vmatpush1.msra.mxu0 %v2176
      %2250 = vmatprep.subr.mxu0 0.0
      %2251 = vmatpush1.msra.mxu0 %v2177
      %2252 = vmatprep.subr.mxu0 0.0
      %2253 = vmatpush1.msra.mxu0 %v2178
      %2254 = vmatprep.subr.mxu0 0.0
      %2255 = vmatpush1.msra.mxu0 %v2179
      %2256 = vmatprep.subr.mxu0 0.0
      %2257 = vmatpush1.msra.mxu0 %v2180
      %2258 = vmatprep.subr.mxu0 0.0
      %2259 = vmatpush1.msra.mxu0 %v2181
      %2260 = vmatprep.subr.mxu0 0.0
      %2261 = vmatpush1.msra.mxu0 %v2182
      %2262 = vmatprep.subr.mxu0 0.0
      %2263 = vmatpush1.msra.mxu0 %v2183
      %2264 = vmatprep.mubr.f32.mxu0 %v2056
      %2265 = vmatmul.mubr.f32.gmra.mrb[0].mxu0 %v2055
      %v2266 = vpop.f32.mrb[0].mxu0
      %v2267 = vadd.f32 0.0, %v2266
      %v2268 = vpop.f32.mrb[0].mxu0
      %2269 = vmatprep.mubr.f32.mxu0 %v2059
      %2270 = vmatmul.mubr.f32.gmra.mrb[0].mxu0 %v2058
      %v2271 = vpop.f32.mrb[0].mxu0
      %v2272 = vadd.f32 0.0, %v2271
      %v2273 = vpop.f32.mrb[0].mxu0
      %2274 = vmatprep.mubr.f32.mxu0 %v2062
      %2275 = vmatmul.mubr.f32.gmra.mrb[0].mxu0 %v2061
      %v2276 = vpop.f32.mrb[0].mxu0
      %v2277 = vadd.f32 0.0, %v2276
      %v2278 = vpop.f32.mrb[0].mxu0
      %2279 = vmatprep.mubr.f32.mxu0 %v2065
      %2280 = vmatmul.mubr.f32.gmra.mrb[0].mxu0 %v2064
      %v2281 = vpop.f32.mrb[0].mxu0
      %v2282 = vadd.f32 0.0, %v2281
      %v2283 = vpop.f32.mrb[0].mxu0
      %2284 = vmatprep.mubr.f32.mxu0 %v2068
      %2285 = vmatmul.mubr.f32.gmra.mrb[0].mxu0 %v2067
      %v2286 = vpop.f32.mrb[0].mxu0
      %v2287 = vadd.f32 0.0, %v2286
      %v2288 = vpop.f32.mrb[0].mxu0
      %2289 = vmatprep.mubr.f32.mxu0 %v2071
      %2290 = vmatmul.mubr.f32.gmra.mrb[0].mxu0 %v2070
      %v2291 = vpop.f32.mrb[0].mxu0
      %v2292 = vadd.f32 0.0, %v2291
      %v2293 = vpop.f32.mrb[0].mxu0
      %2294 = vmatprep.mubr.f32.mxu0 %v2074
      %2295 = vmatmul.mubr.f32.gmra.mrb[0].mxu0 %v2073
      %v2296 = vpop.f32.mrb[0].mxu0
      %v2297 = vadd.f32 0.0, %v2296
      %v2298 = vpop.f32.mrb[0].mxu0
      %2299 = vmatprep.mubr.f32.mxu0 %v2077
      %2300 = vmatmul.mubr.f32.gmra.mrb[0].mxu0 %v2076
      %v2301 = vpop.f32.mrb[0].mxu0
      %v2302 = vadd.f32 0.0, %v2301
      %v2303 = vpop.f32.mrb[0].mxu0
      %2304 = vmatprep.mubr.f32.mxu0 %v2080
      %2305 = vmatmul.mubr.f32.gmra.mrb[0].mxu0 %v2079
      %v2306 = vpop.f32.mrb[0].mxu0
      %v2307 = vadd.f32 0.0, %v2306
      %v2308 = vpop.f32.mrb[0].mxu0
      %2309 = vmatprep.mubr.f32.mxu0 %v2083
      %2310 = vmatmul.mubr.f32.gmra.mrb[0].mxu0 %v2082
      %v2311 = vpop.f32.mrb[0].mxu0
      %v2312 = vadd.f32 0.0, %v2311
      %v2313 = vpop.f32.mrb[0].mxu0
      %2314 = vmatprep.mubr.f32.mxu0 %v2086
      %2315 = vmatmul.mubr.f32.gmra.mrb[0].mxu0 %v2085
      %v2316 = vpop.f32.mrb[0].mxu0
      %v2317 = vadd.f32 0.0, %v2316
      %v2318 = vpop.f32.mrb[0].mxu0
      %2319 = vmatprep.mubr.f32.mxu0 %v2089
      %2320 = vmatmul.mubr.f32.gmra.mrb[0].mxu0 %v2088
      %v2321 = vpop.f32.mrb[0].mxu0
      %v2322 = vadd.f32 0.0, %v2321
      %v2323 = vpop.f32.mrb[0].mxu0
      %2324 = vmatprep.mubr.f32.mxu0 %v2092
      %2325 = vmatmul.mubr.f32.gmra.mrb[0].mxu0 %v2091
      %v2326 = vpop.f32.mrb[0].mxu0
      %v2327 = vadd.f32 0.0, %v2326
      %v2328 = vpop.f32.mrb[0].mxu0
      %2329 = vmatprep.mubr.f32.mxu0 %v2095
      %2330 = vmatmul.mubr.f32.gmra.mrb[0].mxu0 %v2094
      %v2331 = vpop.f32.mrb[0].mxu0
      %v2332 = vadd.f32 0.0, %v2331
      %v2333 = vpop.f32.mrb[0].mxu0
      %2334 = vmatprep.mubr.f32.mxu0 %v2098
      %2335 = vmatmul.mubr.f32.gmra.mrb[0].mxu0 %v2097
      %v2336 = vpop.f32.mrb[0].mxu0
      %v2337 = vadd.f32 0.0, %v2336
      %v2338 = vpop.f32.mrb[0].mxu0
      %2339 = vmatprep.mubr.f32.mxu0 %v2101
      %2340 = vmatmul.mubr.f32.gmra.mrb[0].mxu0 %v2100
      %v2341 = vpop.f32.mrb[0].mxu0
      %v2342 = vadd.f32 0.0, %v2341
      %v2343 = vpop.f32.mrb[0].mxu0
      %2344 = vmatprep.mubr.f32.mxu0 %v2104
      %2345 = vmatmul.mubr.f32.gmra.mrb[0].mxu0 %v2103
      %v2346 = vpop.f32.mrb[0].mxu0
      %v2347 = vadd.f32 0.0, %v2346
      %v2348 = vpop.f32.mrb[0].mxu0
      %2349 = vmatprep.mubr.f32.mxu0 %v2107
      %2350 = vmatmul.mubr.f32.gmra.mrb[0].mxu0 %v2106
      %v2351 = vpop.f32.mrb[0].mxu0
      %v2352 = vadd.f32 0.0, %v2351
      %v2353 = vpop.f32.mrb[0].mxu0
      %2354 = vmatprep.mubr.f32.mxu0 %v2110
      %2355 = vmatmul.mubr.f32.gmra.mrb[0].mxu0 %v2109
      %v2356 = vpop.f32.mrb[0].mxu0
      %v2357 = vadd.f32 0.0, %v2356
      %v2358 = vpop.f32.mrb[0].mxu0
      %2359 = vmatprep.mubr.f32.mxu0 %v2113
      %2360 = vmatmul.mubr.f32.gmra.mrb[0].mxu0 %v2112
      %v2361 = vpop.f32.mrb[0].mxu0
      %v2362 = vadd.f32 0.0, %v2361
      %v2363 = vpop.f32.mrb[0].mxu0
      %2364 = vmatprep.mubr.f32.mxu0 %v2116
      %2365 = vmatmul.mubr.f32.gmra.mrb[0].mxu0 %v2115
      %v2366 = vpop.f32.mrb[0].mxu0
      %v2367 = vadd.f32 0.0, %v2366
      %v2368 = vpop.f32.mrb[0].mxu0
      %2369 = vmatprep.mubr.f32.mxu0 %v2119
      %2370 = vmatmul.mubr.f32.gmra.mrb[0].mxu0 %v2118
      %v2371 = vpop.f32.mrb[0].mxu0
      %v2372 = vadd.f32 0.0, %v2371
      %v2373 = vpop.f32.mrb[0].mxu0
      %2374 = vmatprep.mubr.f32.mxu0 %v2122
      %2375 = vmatmul.mubr.f32.gmra.mrb[0].mxu0 %v2121
      %v2376 = vpop.f32.mrb[0].mxu0
      %v2377 = vadd.f32 0.0, %v2376
      %v2378 = vpop.f32.mrb[0].mxu0
      %2379 = vmatprep.mubr.f32.mxu0 %v2125
      %2380 = vmatmul.mubr.f32.gmra.mrb[0].mxu0 %v2124
      %v2381 = vpop.f32.mrb[0].mxu0
      %v2382 = vadd.f32 0.0, %v2381
      %v2383 = vpop.f32.mrb[0].mxu0
      %2384 = vmatprep.mubr.f32.mxu0 %v2128
      %2385 = vmatmul.mubr.f32.gmra.mrb[0].mxu0 %v2127
      %v2386 = vpop.f32.mrb[0].mxu0
      %v2387 = vadd.f32 0.0, %v2386
      %v2388 = vpop.f32.mrb[0].mxu0
      %2389 = vmatprep.mubr.f32.mxu0 %v2131
      %2390 = vmatmul.mubr.f32.gmra.mrb[0].mxu0 %v2130
      %v2391 = vpop.f32.mrb[0].mxu0
      %v2392 = vadd.f32 0.0, %v2391
      %v2393 = vpop.f32.mrb[0].mxu0
      %2394 = vmatprep.mubr.f32.mxu0 %v2134
      %2395 = vmatmul.mubr.f32.gmra.mrb[0].mxu0 %v2133
      %v2396 = vpop.f32.mrb[0].mxu0
      %v2397 = vadd.f32 0.0, %v2396
      %v2398 = vpop.f32.mrb[0].mxu0
      %2399 = vmatprep.mubr.f32.mxu0 %v2137
      %2400 = vmatmul.mubr.f32.gmra.mrb[0].mxu0 %v2136
      %v2401 = vpop.f32.mrb[0].mxu0
      %v2402 = vadd.f32 0.0, %v2401
      %v2403 = vpop.f32.mrb[0].mxu0
      %2404 = vmatprep.mubr.f32.mxu0 %v2140
      %2405 = vmatmul.mubr.f32.gmra.mrb[0].mxu0 %v2139
      %v2406 = vpop.f32.mrb[0].mxu0
      %v2407 = vadd.f32 0.0, %v2406
      %v2408 = vpop.f32.mrb[0].mxu0
      %2409 = vmatprep.mubr.f32.mxu0 %v2143
      %2410 = vmatmul.mubr.f32.gmra.mrb[0].mxu0 %v2142
      %v2411 = vpop.f32.mrb[0].mxu0
      %v2412 = vadd.f32 0.0, %v2411
      %v2413 = vpop.f32.mrb[0].mxu0
      %2414 = vmatprep.mubr.f32.mxu0 %v2146
      %2415 = vmatmul.mubr.f32.gmra.mrb[0].mxu0 %v2145
      %v2416 = vpop.f32.mrb[0].mxu0
      %v2417 = vadd.f32 0.0, %v2416
      %v2418 = vpop.f32.mrb[0].mxu0
      %2419 = vmatprep.mubr.f32.mxu0 %v2149
      %2420 = vmatmul.mubr.f32.gmra.mrb[0].mxu0 %v2148
      %v2421 = vpop.f32.mrb[0].mxu0
      %v2422 = vadd.f32 0.0, %v2421
      %v2423 = vpop.f32.mrb[0].mxu0
      %2424 = vdwg.mxu0
      %2425 = vmatprep.subr.mxu0 0.0
      %2426 = vmatpush1.msra.mxu0 %v2184
      %2427 = vmatprep.subr.mxu0 0.0
      %2428 = vmatpush1.msra.mxu0 %v2185
      %2429 = vmatprep.subr.mxu0 0.0
      %2430 = vmatpush1.msra.mxu0 %v2186
      %2431 = vmatprep.subr.mxu0 0.0
      %2432 = vmatpush1.msra.mxu0 %v2187
      %2433 = vmatprep.subr.mxu0 0.0
      %2434 = vmatpush1.msra.mxu0 %v2188
      %2435 = vmatprep.subr.mxu0 0.0
      %2436 = vmatpush1.msra.mxu0 %v2189
      %2437 = vmatprep.subr.mxu0 0.0
      %2438 = vmatpush1.msra.mxu0 %v2190
      %2439 = vmatprep.subr.mxu0 0.0
      %2440 = vmatpush1.msra.mxu0 %v2191
      %2441 = vmatprep.subr.mxu0 0.0
      %2442 = vmatpush1.msra.mxu0 %v2192
      %2443 = vmatprep.subr.mxu0 0.0
      %2444 = vmatpush1.msra.mxu0 %v2193
      %2445 = vmatprep.subr.mxu0 0.0
      %2446 = vmatpush1.msra.mxu0 %v2194
      %2447 = vmatprep.subr.mxu0 0.0
      %2448 = vmatpush1.msra.mxu0 %v2195
      %2449 = vmatprep.subr.mxu0 0.0
      %2450 = vmatpush1.msra.mxu0 %v2196
      %2451 = vmatprep.subr.mxu0 0.0
      %2452 = vmatpush1.msra.mxu0 %v2197
      %2453 = vmatprep.subr.mxu0 0.0
      %2454 = vmatpush1.msra.mxu0 %v2198
      %2455 = vmatprep.subr.mxu0 0.0
      %2456 = vmatpush1.msra.mxu0 %v2199
      %2457 = vmatprep.subr.mxu0 0.0
      %2458 = vmatpush1.msra.mxu0 0.0
      %2459 = vmatprep.subr.mxu0 0.0
      %2460 = vmatpush1.msra.mxu0 0.0
      %2461 = vmatprep.subr.mxu0 0.0
      %2462 = vmatpush1.msra.mxu0 0.0
      %2463 = vmatprep.subr.mxu0 0.0
      %2464 = vmatpush1.msra.mxu0 0.0
      %2465 = vmatprep.subr.mxu0 0.0
      %2466 = vmatpush1.msra.mxu0 0.0
      %2467 = vmatprep.subr.mxu0 0.0
      %2468 = vmatpush1.msra.mxu0 0.0
      %2469 = vmatprep.subr.mxu0 0.0
      %2470 = vmatpush1.msra.mxu0 0.0
      %2471 = vmatprep.subr.mxu0 0.0
      %2472 = vmatpush1.msra.mxu0 0.0
      %2473 = vmatprep.subr.mxu0 0.0
      %2474 = vmatpush1.msra.mxu0 0.0
      %2475 = vmatprep.subr.mxu0 0.0
      %2476 = vmatpush1.msra.mxu0 0.0
      %2477 = vmatprep.subr.mxu0 0.0
      %2478 = vmatpush1.msra.mxu0 0.0
      %2479 = vmatprep.subr.mxu0 0.0
      %2480 = vmatpush1.msra.mxu0 0.0
      %2481 = vmatprep.subr.mxu0 0.0
      %2482 = vmatpush1.msra.mxu0 0.0
      %2483 = vmatprep.subr.mxu0 0.0
      %2484 = vmatpush1.msra.mxu0 0.0
      %2485 = vmatprep.subr.mxu0 0.0
      %2486 = vmatpush1.msra.mxu0 0.0
      %2487 = vmatprep.subr.mxu0 0.0
      %2488 = vmatpush1.msra.mxu0 0.0
      %2489 = vmatprep.mubr.f32.mxu0 0.0
      %2490 = vmatmul.mubr.f32.gmra.mrb[0].mxu0 %v2057
      %v2491 = vpop.f32.mrb[0].mxu0
      %v2492 = vadd.f32 %v2267, %v2491
      %v2493 = vpop.f32.mrb[0].mxu0
      %2494 = vmatprep.mubr.f32.mxu0 0.0
      %2495 = vmatmul.mubr.f32.gmra.mrb[0].mxu0 %v2060
      %v2496 = vpop.f32.mrb[0].mxu0
      %v2497 = vadd.f32 %v2272, %v2496
      %v2498 = vpop.f32.mrb[0].mxu0
      %2499 = vmatprep.mubr.f32.mxu0 0.0
      %2500 = vmatmul.mubr.f32.gmra.mrb[0].mxu0 %v2063
      %v2501 = vpop.f32.mrb[0].mxu0
      %v2502 = vadd.f32 %v2277, %v2501
      %v2503 = vpop.f32.mrb[0].mxu0
      %2504 = vmatprep.mubr.f32.mxu0 0.0
      %2505 = vmatmul.mubr.f32.gmra.mrb[0].mxu0 %v2066
      %v2506 = vpop.f32.mrb[0].mxu0
      %v2507 = vadd.f32 %v2282, %v2506
      %v2508 = vpop.f32.mrb[0].mxu0
      %2509 = vmatprep.mubr.f32.mxu0 0.0
      %2510 = vmatmul.mubr.f32.gmra.mrb[0].mxu0 %v2069
      %v2511 = vpop.f32.mrb[0].mxu0
      %v2512 = vadd.f32 %v2287, %v2511
      %v2513 = vpop.f32.mrb[0].mxu0
      %2514 = vmatprep.mubr.f32.mxu0 0.0
      %2515 = vmatmul.mubr.f32.gmra.mrb[0].mxu0 %v2072
      %v2516 = vpop.f32.mrb[0].mxu0
      %v2517 = vadd.f32 %v2292, %v2516
      %v2518 = vpop.f32.mrb[0].mxu0
      %2519 = vmatprep.mubr.f32.mxu0 0.0
      %2520 = vmatmul.mubr.f32.gmra.mrb[0].mxu0 %v2075
      %v2521 = vpop.f32.mrb[0].mxu0
      %v2522 = vadd.f32 %v2297, %v2521
      %v2523 = vpop.f32.mrb[0].mxu0
      %2524 = vmatprep.mubr.f32.mxu0 0.0
      %2525 = vmatmul.mubr.f32.gmra.mrb[0].mxu0 %v2078
      %v2526 = vpop.f32.mrb[0].mxu0
      %v2527 = vadd.f32 %v2302, %v2526
      %v2528 = vpop.f32.mrb[0].mxu0
      %2529 = vmatprep.mubr.f32.mxu0 0.0
      %2530 = vmatmul.mubr.f32.gmra.mrb[0].mxu0 %v2081
      %v2531 = vpop.f32.mrb[0].mxu0
      %v2532 = vadd.f32 %v2307, %v2531
      %v2533 = vpop.f32.mrb[0].mxu0
      %2534 = vmatprep.mubr.f32.mxu0 0.0
      %2535 = vmatmul.mubr.f32.gmra.mrb[0].mxu0 %v2084
      %v2536 = vpop.f32.mrb[0].mxu0
      %v2537 = vadd.f32 %v2312, %v2536
      %v2538 = vpop.f32.mrb[0].mxu0
      %2539 = vmatprep.mubr.f32.mxu0 0.0
      %2540 = vmatmul.mubr.f32.gmra.mrb[0].mxu0 %v2087
      %v2541 = vpop.f32.mrb[0].mxu0
      %v2542 = vadd.f32 %v2317, %v2541
      %v2543 = vpop.f32.mrb[0].mxu0
      %2544 = vmatprep.mubr.f32.mxu0 0.0
      %2545 = vmatmul.mubr.f32.gmra.mrb[0].mxu0 %v2090
      %v2546 = vpop.f32.mrb[0].mxu0
      %v2547 = vadd.f32 %v2322, %v2546
      %v2548 = vpop.f32.mrb[0].mxu0
      %2549 = vmatprep.mubr.f32.mxu0 0.0
      %2550 = vmatmul.mubr.f32.gmra.mrb[0].mxu0 %v2093
      %v2551 = vpop.f32.mrb[0].mxu0
      %v2552 = vadd.f32 %v2327, %v2551
      %v2553 = vpop.f32.mrb[0].mxu0
      %2554 = vmatprep.mubr.f32.mxu0 0.0
      %2555 = vmatmul.mubr.f32.gmra.mrb[0].mxu0 %v2096
      %v2556 = vpop.f32.mrb[0].mxu0
      %v2557 = vadd.f32 %v2332, %v2556
      %v2558 = vpop.f32.mrb[0].mxu0
      %2559 = vmatprep.mubr.f32.mxu0 0.0
      %2560 = vmatmul.mubr.f32.gmra.mrb[0].mxu0 %v2099
      %v2561 = vpop.f32.mrb[0].mxu0
      %v2562 = vadd.f32 %v2337, %v2561
      %v2563 = vpop.f32.mrb[0].mxu0
      %2564 = vmatprep.mubr.f32.mxu0 0.0
      %2565 = vmatmul.mubr.f32.gmra.mrb[0].mxu0 %v2102
      %v2566 = vpop.f32.mrb[0].mxu0
      %v2567 = vadd.f32 %v2342, %v2566
      %v2568 = vpop.f32.mrb[0].mxu0
      %2569 = vmatprep.mubr.f32.mxu0 0.0
      %2570 = vmatmul.mubr.f32.gmra.mrb[0].mxu0 %v2105
      %v2571 = vpop.f32.mrb[0].mxu0
      %v2572 = vadd.f32 %v2347, %v2571
      %v2573 = vpop.f32.mrb[0].mxu0
      %2574 = vmatprep.mubr.f32.mxu0 0.0
      %2575 = vmatmul.mubr.f32.gmra.mrb[0].mxu0 %v2108
      %v2576 = vpop.f32.mrb[0].mxu0
      %v2577 = vadd.f32 %v2352, %v2576
      %v2578 = vpop.f32.mrb[0].mxu0
      %2579 = vmatprep.mubr.f32.mxu0 0.0
      %2580 = vmatmul.mubr.f32.gmra.mrb[0].mxu0 %v2111
      %v2581 = vpop.f32.mrb[0].mxu0
      %v2582 = vadd.f32 %v2357, %v2581
      %v2583 = vpop.f32.mrb[0].mxu0
      %2584 = vmatprep.mubr.f32.mxu0 0.0
      %2585 = vmatmul.mubr.f32.gmra.mrb[0].mxu0 %v2114
      %v2586 = vpop.f32.mrb[0].mxu0
      %v2587 = vadd.f32 %v2362, %v2586
      %v2588 = vpop.f32.mrb[0].mxu0
      %2589 = vmatprep.mubr.f32.mxu0 0.0
      %2590 = vmatmul.mubr.f32.gmra.mrb[0].mxu0 %v2117
      %v2591 = vpop.f32.mrb[0].mxu0
      %v2592 = vadd.f32 %v2367, %v2591
      %v2593 = vpop.f32.mrb[0].mxu0
      %2594 = vmatprep.mubr.f32.mxu0 0.0
      %2595 = vmatmul.mubr.f32.gmra.mrb[0].mxu0 %v2120
      %v2596 = vpop.f32.mrb[0].mxu0
      %v2597 = vadd.f32 %v2372, %v2596
      %v2598 = vpop.f32.mrb[0].mxu0
      %2599 = vmatprep.mubr.f32.mxu0 0.0
      %2600 = vmatmul.mubr.f32.gmra.mrb[0].mxu0 %v2123
      %v2601 = vpop.f32.mrb[0].mxu0
      %v2602 = vadd.f32 %v2377, %v2601
      %v2603 = vpop.f32.mrb[0].mxu0
      %2604 = vmatprep.mubr.f32.mxu0 0.0
      %2605 = vmatmul.mubr.f32.gmra.mrb[0].mxu0 %v2126
      %v2606 = vpop.f32.mrb[0].mxu0
      %v2607 = vadd.f32 %v2382, %v2606
      %v2608 = vpop.f32.mrb[0].mxu0
      %2609 = vmatprep.mubr.f32.mxu0 0.0
      %2610 = vmatmul.mubr.f32.gmra.mrb[0].mxu0 %v2129
      %v2611 = vpop.f32.mrb[0].mxu0
      %v2612 = vadd.f32 %v2387, %v2611
      %v2613 = vpop.f32.mrb[0].mxu0
      %2614 = vmatprep.mubr.f32.mxu0 0.0
      %2615 = vmatmul.mubr.f32.gmra.mrb[0].mxu0 %v2132
      %v2616 = vpop.f32.mrb[0].mxu0
      %v2617 = vadd.f32 %v2392, %v2616
      %v2618 = vpop.f32.mrb[0].mxu0
      %2619 = vmatprep.mubr.f32.mxu0 0.0
      %2620 = vmatmul.mubr.f32.gmra.mrb[0].mxu0 %v2135
      %v2621 = vpop.f32.mrb[0].mxu0
      %v2622 = vadd.f32 %v2397, %v2621
      %v2623 = vpop.f32.mrb[0].mxu0
      %2624 = vmatprep.mubr.f32.mxu0 0.0
      %2625 = vmatmul.mubr.f32.gmra.mrb[0].mxu0 %v2138
      %v2626 = vpop.f32.mrb[0].mxu0
      %v2627 = vadd.f32 %v2402, %v2626
      %v2628 = vpop.f32.mrb[0].mxu0
      %2629 = vmatprep.mubr.f32.mxu0 0.0
      %2630 = vmatmul.mubr.f32.gmra.mrb[0].mxu0 %v2141
      %v2631 = vpop.f32.mrb[0].mxu0
      %v2632 = vadd.f32 %v2407, %v2631
      %v2633 = vpop.f32.mrb[0].mxu0
      %2634 = vmatprep.mubr.f32.mxu0 0.0
      %2635 = vmatmul.mubr.f32.gmra.mrb[0].mxu0 %v2144
      %v2636 = vpop.f32.mrb[0].mxu0
      %v2637 = vadd.f32 %v2412, %v2636
      %v2638 = vpop.f32.mrb[0].mxu0
      %2639 = vmatprep.mubr.f32.mxu0 0.0
      %2640 = vmatmul.mubr.f32.gmra.mrb[0].mxu0 %v2147
      %v2641 = vpop.f32.mrb[0].mxu0
      %v2642 = vadd.f32 %v2417, %v2641
      %v2643 = vpop.f32.mrb[0].mxu0
      %2644 = vmatprep.mubr.f32.mxu0 0.0
      %2645 = vmatmul.mubr.f32.gmra.mrb[0].mxu0 %v2150
      %v2646 = vpop.f32.mrb[0].mxu0
      %v2647 = vadd.f32 %v2422, %v2646
      %v2648 = vpop.f32.mrb[0].mxu0
      %2649 = vdwg.mxu0
      %v2650 = vadd.f32 %v1896, %v2492
      %v2651 = vadd.f32 %v1901, %v2497
      %v2652 = vadd.f32 %v1906, %v2502
      %v2653 = vadd.f32 %v1911, %v2507
      %v2654 = vadd.f32 %v1916, %v2512
      %v2655 = vadd.f32 %v1921, %v2517
      %v2656 = vadd.f32 %v1926, %v2522
      %v2657 = vadd.f32 %v1931, %v2527
      %v2658 = vadd.f32 %v1936, %v2532
      %v2659 = vadd.f32 %v1941, %v2537
      %v2660 = vadd.f32 %v1946, %v2542
      %v2661 = vadd.f32 %v1951, %v2547
      %v2662 = vadd.f32 %v1956, %v2552
      %v2663 = vadd.f32 %v1961, %v2557
      %v2664 = vadd.f32 %v1966, %v2562
      %v2665 = vadd.f32 %v1971, %v2567
      %v2666 = vadd.f32 %v1976, %v2572
      %v2667 = vadd.f32 %v1981, %v2577
      %v2668 = vadd.f32 %v1986, %v2582
      %v2669 = vadd.f32 %v1991, %v2587
      %v2670 = vadd.f32 %v1996, %v2592
      %v2671 = vadd.f32 %v2001, %v2597
      %v2672 = vadd.f32 %v2006, %v2602
      %v2673 = vadd.f32 %v2011, %v2607
      %v2674 = vadd.f32 %v2016, %v2612
      %v2675 = vadd.f32 %v2021, %v2617
      %v2676 = vadd.f32 %v2026, %v2622
      %v2677 = vadd.f32 %v2031, %v2627
      %v2678 = vadd.f32 %v2036, %v2632
      %v2679 = vadd.f32 %v2041, %v2637
      %v2680 = vadd.f32 %v2046, %v2642
      %v2681 = vadd.f32 %v2051, %v2647
      %v2682 = vld [vmem:[%s5] sm:$0x1]
      %v2684 = vlaneseq
      %v2685 = vshrl.u32 %v2684, 7
      %v2686 = vsub.s32 0, %v2685
      %v2687 = vrot.slane %v2682, %v2686
      %v2689 = vadd.f32 %v2650, %v2687
      %v2690 = vadd.f32 %v2651, %v2687
      %v2691 = vadd.f32 %v2652, %v2687
      %v2692 = vadd.f32 %v2653, %v2687
      %v2693 = vadd.f32 %v2654, %v2687
      %v2694 = vadd.f32 %v2655, %v2687
      %v2695 = vadd.f32 %v2656, %v2687
      %v2696 = vadd.f32 %v2657, %v2687
      %v2697 = vadd.f32 %v2658, %v2687
      %v2698 = vadd.f32 %v2659, %v2687
      %v2699 = vadd.f32 %v2660, %v2687
      %v2700 = vadd.f32 %v2661, %v2687
      %v2701 = vadd.f32 %v2662, %v2687
      %v2702 = vadd.f32 %v2663, %v2687
      %v2703 = vadd.f32 %v2664, %v2687
      %v2704 = vadd.f32 %v2665, %v2687
      %v2705 = vadd.f32 %v2666, %v2687
      %v2706 = vadd.f32 %v2667, %v2687
      %v2707 = vadd.f32 %v2668, %v2687
      %v2708 = vadd.f32 %v2669, %v2687
      %v2709 = vadd.f32 %v2670, %v2687
      %v2710 = vadd.f32 %v2671, %v2687
      %v2711 = vadd.f32 %v2672, %v2687
      %v2712 = vadd.f32 %v2673, %v2687
      %v2713 = vadd.f32 %v2674, %v2687
      %v2714 = vadd.f32 %v2675, %v2687
      %v2715 = vadd.f32 %v2676, %v2687
      %v2716 = vadd.f32 %v2677, %v2687
      %v2717 = vadd.f32 %v2678, %v2687
      %v2718 = vadd.f32 %v2679, %v2687
      %v2719 = vadd.f32 %v2680, %v2687
      %v2720 = vadd.f32 %v2681, %v2687
      %v2721 = vmax.f32 %v2689, 0.0
      %v2722 = vmax.f32 %v2690, 0.0
      %v2723 = vmax.f32 %v2691, 0.0
      %v2724 = vmax.f32 %v2692, 0.0
      %v2725 = vmax.f32 %v2693, 0.0
      %v2726 = vmax.f32 %v2694, 0.0
      %v2727 = vmax.f32 %v2695, 0.0
      %v2728 = vmax.f32 %v2696, 0.0
      %v2729 = vmax.f32 %v2697, 0.0
      %v2730 = vmax.f32 %v2698, 0.0
      %v2731 = vmax.f32 %v2699, 0.0
      %v2732 = vmax.f32 %v2700, 0.0
      %v2733 = vmax.f32 %v2701, 0.0
      %v2734 = vmax.f32 %v2702, 0.0
      %v2735 = vmax.f32 %v2703, 0.0
      %v2736 = vmax.f32 %v2704, 0.0
      %v2737 = vmax.f32 %v2705, 0.0
      %v2738 = vmax.f32 %v2706, 0.0
      %v2739 = vmax.f32 %v2707, 0.0
      %v2740 = vmax.f32 %v2708, 0.0
      %v2741 = vmax.f32 %v2709, 0.0
      %v2742 = vmax.f32 %v2710, 0.0
      %v2743 = vmax.f32 %v2711, 0.0
      %v2744 = vmax.f32 %v2712, 0.0
      %v2745 = vmax.f32 %v2713, 0.0
      %v2746 = vmax.f32 %v2714, 0.0
      %v2747 = vmax.f32 %v2715, 0.0
      %v2748 = vmax.f32 %v2716, 0.0
      %v2749 = vmax.f32 %v2717, 0.0
      %v2750 = vmax.f32 %v2718, 0.0
      %v2751 = vmax.f32 %v2719, 0.0
      %v2752 = vmax.f32 %v2720, 0.0
      %v2753 = vld [vmem:[%s3] sm:$0xff]
      %v2754 = vld [vmem:[%s3 + $0x8] sm:$0xff]
      %v2755 = vld [vmem:[%s3 + $0x10] sm:$0xff]
      %v2756 = vld [vmem:[%s3 + $0x18] sm:$0xff]
      %v2757 = vld [vmem:[%s3 + $0x20] sm:$0xff]
      %v2758 = vld [vmem:[%s3 + $0x28] sm:$0xff]
      %v2759 = vld [vmem:[%s3 + $0x30] sm:$0xff]
      %v2760 = vld [vmem:[%s3 + $0x38] sm:$0xff]
      %v2761 = vld [vmem:[%s3 + $0x40] sm:$0xff]
      %v2762 = vld [vmem:[%s3 + $0x48] sm:$0xff]
      %v2763 = vld [vmem:[%s3 + $0x50] sm:$0xff]
      %v2764 = vld [vmem:[%s3 + $0x58] sm:$0xff]
      %v2765 = vld [vmem:[%s3 + $0x60] sm:$0xff]
      %v2766 = vld [vmem:[%s3 + $0x68] sm:$0xff]
      %v2767 = vld [vmem:[%s3 + $0x70] sm:$0xff]
      %v2768 = vld [vmem:[%s3 + $0x78] sm:$0xff]
      %v2769 = vld [vmem:[%s6] sm:$0x1]
      %v2771 = vlaneseq
      %v2772 = vshrl.u32 %v2771, 7
      %v2773 = vsub.s32 0, %v2772
      %v2774 = vrot.slane %v2769, %v2773
      %2776 = vmatprep.subr.mxu0 0.0
      %2777 = vmatpush1.msra.mxu0 %v2753
      %2778 = vmatprep.subr.mxu0 0.0
      %2779 = vmatpush1.msra.mxu0 %v2754
      %2780 = vmatprep.subr.mxu0 0.0
      %2781 = vmatpush1.msra.mxu0 %v2755
      %2782 = vmatprep.subr.mxu0 0.0
      %2783 = vmatpush1.msra.mxu0 %v2756
      %2784 = vmatprep.subr.mxu0 0.0
      %2785 = vmatpush1.msra.mxu0 %v2757
      %2786 = vmatprep.subr.mxu0 0.0
      %2787 = vmatpush1.msra.mxu0 %v2758
      %2788 = vmatprep.subr.mxu0 0.0
      %2789 = vmatpush1.msra.mxu0 %v2759
      %2790 = vmatprep.subr.mxu0 0.0
      %2791 = vmatpush1.msra.mxu0 %v2760
      %2792 = vmatprep.subr.mxu0 0.0
      %2793 = vmatpush1.msra.mxu0 %v2761
      %2794 = vmatprep.subr.mxu0 0.0
      %2795 = vmatpush1.msra.mxu0 %v2762
      %2796 = vmatprep.subr.mxu0 0.0
      %2797 = vmatpush1.msra.mxu0 %v2763
      %2798 = vmatprep.subr.mxu0 0.0
      %2799 = vmatpush1.msra.mxu0 %v2764
      %2800 = vmatprep.subr.mxu0 0.0
      %2801 = vmatpush1.msra.mxu0 %v2765
      %2802 = vmatprep.subr.mxu0 0.0
      %2803 = vmatpush1.msra.mxu0 %v2766
      %2804 = vmatprep.subr.mxu0 0.0
      %2805 = vmatpush1.msra.mxu0 %v2767
      %2806 = vmatprep.subr.mxu0 0.0
      %2807 = vmatpush1.msra.mxu0 %v2768
      %2808 = vmatprep.subr.mxu0 0.0
      %2809 = vmatpush1.msra.mxu0 0.0
      %2810 = vmatprep.subr.mxu0 0.0
      %2811 = vmatpush1.msra.mxu0 0.0
      %2812 = vmatprep.subr.mxu0 0.0
      %2813 = vmatpush1.msra.mxu0 0.0
      %2814 = vmatprep.subr.mxu0 0.0
      %2815 = vmatpush1.msra.mxu0 0.0
      %2816 = vmatprep.subr.mxu0 0.0
      %2817 = vmatpush1.msra.mxu0 0.0
      %2818 = vmatprep.subr.mxu0 0.0
      %2819 = vmatpush1.msra.mxu0 0.0
      %2820 = vmatprep.subr.mxu0 0.0
      %2821 = vmatpush1.msra.mxu0 0.0
      %2822 = vmatprep.subr.mxu0 0.0
      %2823 = vmatpush1.msra.mxu0 0.0
      %2824 = vmatprep.subr.mxu0 0.0
      %2825 = vmatpush1.msra.mxu0 0.0
      %2826 = vmatprep.subr.mxu0 0.0
      %2827 = vmatpush1.msra.mxu0 0.0
      %2828 = vmatprep.subr.mxu0 0.0
      %2829 = vmatpush1.msra.mxu0 0.0
      %2830 = vmatprep.subr.mxu0 0.0
      %2831 = vmatpush1.msra.mxu0 0.0
      %2832 = vmatprep.subr.mxu0 0.0
      %2833 = vmatpush1.msra.mxu0 0.0
      %2834 = vmatprep.subr.mxu0 0.0
      %2835 = vmatpush1.msra.mxu0 0.0
      %2836 = vmatprep.subr.mxu0 0.0
      %2837 = vmatpush1.msra.mxu0 0.0
      %2838 = vmatprep.subr.mxu0 0.0
      %2839 = vmatpush1.msra.mxu0 0.0
      %2840 = vmatprep.mubr.f32.mxu0 0.0
      %2841 = vmatmul.mubr.f32.gmra.mrb[0].mxu0 %v2721
      %v2842 = vpop.f32.mrb[0].mxu0
      %v2843 = vadd.f32 %v2774, %v2842
      %v2844 = vpop.f32.mrb[0].mxu0
      %2845 = vmatprep.mubr.f32.mxu0 0.0
      %2846 = vmatmul.mubr.f32.gmra.mrb[0].mxu0 %v2722
      %v2847 = vpop.f32.mrb[0].mxu0
      %v2848 = vadd.f32 %v2774, %v2847
      %v2849 = vpop.f32.mrb[0].mxu0
      %2850 = vmatprep.mubr.f32.mxu0 0.0
      %2851 = vmatmul.mubr.f32.gmra.mrb[0].mxu0 %v2723
      %v2852 = vpop.f32.mrb[0].mxu0
      %v2853 = vadd.f32 %v2774, %v2852
      %v2854 = vpop.f32.mrb[0].mxu0
      %2855 = vmatprep.mubr.f32.mxu0 0.0
      %2856 = vmatmul.mubr.f32.gmra.mrb[0].mxu0 %v2724
      %v2857 = vpop.f32.mrb[0].mxu0
      %v2858 = vadd.f32 %v2774, %v2857
      %v2859 = vpop.f32.mrb[0].mxu0
      %2860 = vmatprep.mubr.f32.mxu0 0.0
      %2861 = vmatmul.mubr.f32.gmra.mrb[0].mxu0 %v2725
      %v2862 = vpop.f32.mrb[0].mxu0
      %v2863 = vadd.f32 %v2774, %v2862
      %v2864 = vpop.f32.mrb[0].mxu0
      %2865 = vmatprep.mubr.f32.mxu0 0.0
      %2866 = vmatmul.mubr.f32.gmra.mrb[0].mxu0 %v2726
      %v2867 = vpop.f32.mrb[0].mxu0
      %v2868 = vadd.f32 %v2774, %v2867
      %v2869 = vpop.f32.mrb[0].mxu0
      %2870 = vmatprep.mubr.f32.mxu0 0.0
      %2871 = vmatmul.mubr.f32.gmra.mrb[0].mxu0 %v2727
      %v2872 = vpop.f32.mrb[0].mxu0
      %v2873 = vadd.f32 %v2774, %v2872
      %v2874 = vpop.f32.mrb[0].mxu0
      %2875 = vmatprep.mubr.f32.mxu0 0.0
      %2876 = vmatmul.mubr.f32.gmra.mrb[0].mxu0 %v2728
      %v2877 = vpop.f32.mrb[0].mxu0
      %v2878 = vadd.f32 %v2774, %v2877
      %v2879 = vpop.f32.mrb[0].mxu0
      %2880 = vmatprep.mubr.f32.mxu0 0.0
      %2881 = vmatmul.mubr.f32.gmra.mrb[0].mxu0 %v2729
      %v2882 = vpop.f32.mrb[0].mxu0
      %v2883 = vadd.f32 %v2774, %v2882
      %v2884 = vpop.f32.mrb[0].mxu0
      %2885 = vmatprep.mubr.f32.mxu0 0.0
      %2886 = vmatmul.mubr.f32.gmra.mrb[0].mxu0 %v2730
      %v2887 = vpop.f32.mrb[0].mxu0
      %v2888 = vadd.f32 %v2774, %v2887
      %v2889 = vpop.f32.mrb[0].mxu0
      %2890 = vmatprep.mubr.f32.mxu0 0.0
      %2891 = vmatmul.mubr.f32.gmra.mrb[0].mxu0 %v2731
      %v2892 = vpop.f32.mrb[0].mxu0
      %v2893 = vadd.f32 %v2774, %v2892
      %v2894 = vpop.f32.mrb[0].mxu0
      %2895 = vmatprep.mubr.f32.mxu0 0.0
      %2896 = vmatmul.mubr.f32.gmra.mrb[0].mxu0 %v2732
      %v2897 = vpop.f32.mrb[0].mxu0
      %v2898 = vadd.f32 %v2774, %v2897
      %v2899 = vpop.f32.mrb[0].mxu0
      %2900 = vmatprep.mubr.f32.mxu0 0.0
      %2901 = vmatmul.mubr.f32.gmra.mrb[0].mxu0 %v2733
      %v2902 = vpop.f32.mrb[0].mxu0
      %v2903 = vadd.f32 %v2774, %v2902
      %v2904 = vpop.f32.mrb[0].mxu0
      %2905 = vmatprep.mubr.f32.mxu0 0.0
      %2906 = vmatmul.mubr.f32.gmra.mrb[0].mxu0 %v2734
      %v2907 = vpop.f32.mrb[0].mxu0
      %v2908 = vadd.f32 %v2774, %v2907
      %v2909 = vpop.f32.mrb[0].mxu0
      %2910 = vmatprep.mubr.f32.mxu0 0.0
      %2911 = vmatmul.mubr.f32.gmra.mrb[0].mxu0 %v2735
      %v2912 = vpop.f32.mrb[0].mxu0
      %v2913 = vadd.f32 %v2774, %v2912
      %v2914 = vpop.f32.mrb[0].mxu0
      %2915 = vmatprep.mubr.f32.mxu0 0.0
      %2916 = vmatmul.mubr.f32.gmra.mrb[0].mxu0 %v2736
      %v2917 = vpop.f32.mrb[0].mxu0
      %v2918 = vadd.f32 %v2774, %v2917
      %v2919 = vpop.f32.mrb[0].mxu0
      %2920 = vmatprep.mubr.f32.mxu0 0.0
      %2921 = vmatmul.mubr.f32.gmra.mrb[0].mxu0 %v2737
      %v2922 = vpop.f32.mrb[0].mxu0
      %v2923 = vadd.f32 %v2774, %v2922
      %v2924 = vpop.f32.mrb[0].mxu0
      %2925 = vmatprep.mubr.f32.mxu0 0.0
      %2926 = vmatmul.mubr.f32.gmra.mrb[0].mxu0 %v2738
      %v2927 = vpop.f32.mrb[0].mxu0
      %v2928 = vadd.f32 %v2774, %v2927
      %v2929 = vpop.f32.mrb[0].mxu0
      %2930 = vmatprep.mubr.f32.mxu0 0.0
      %2931 = vmatmul.mubr.f32.gmra.mrb[0].mxu0 %v2739
      %v2932 = vpop.f32.mrb[0].mxu0
      %v2933 = vadd.f32 %v2774, %v2932
      %v2934 = vpop.f32.mrb[0].mxu0
      %2935 = vmatprep.mubr.f32.mxu0 0.0
      %2936 = vmatmul.mubr.f32.gmra.mrb[0].mxu0 %v2740
      %v2937 = vpop.f32.mrb[0].mxu0
      %v2938 = vadd.f32 %v2774, %v2937
      %v2939 = vpop.f32.mrb[0].mxu0
      %2940 = vmatprep.mubr.f32.mxu0 0.0
      %2941 = vmatmul.mubr.f32.gmra.mrb[0].mxu0 %v2741
      %v2942 = vpop.f32.mrb[0].mxu0
      %v2943 = vadd.f32 %v2774, %v2942
      %v2944 = vpop.f32.mrb[0].mxu0
      %2945 = vmatprep.mubr.f32.mxu0 0.0
      %2946 = vmatmul.mubr.f32.gmra.mrb[0].mxu0 %v2742
      %v2947 = vpop.f32.mrb[0].mxu0
      %v2948 = vadd.f32 %v2774, %v2947
      %v2949 = vpop.f32.mrb[0].mxu0
      %2950 = vmatprep.mubr.f32.mxu0 0.0
      %2951 = vmatmul.mubr.f32.gmra.mrb[0].mxu0 %v2743
      %v2952 = vpop.f32.mrb[0].mxu0
      %v2953 = vadd.f32 %v2774, %v2952
      %v2954 = vpop.f32.mrb[0].mxu0
      %2955 = vmatprep.mubr.f32.mxu0 0.0
      %2956 = vmatmul.mubr.f32.gmra.mrb[0].mxu0 %v2744
      %v2957 = vpop.f32.mrb[0].mxu0
      %v2958 = vadd.f32 %v2774, %v2957
      %v2959 = vpop.f32.mrb[0].mxu0
      %2960 = vmatprep.mubr.f32.mxu0 0.0
      %2961 = vmatmul.mubr.f32.gmra.mrb[0].mxu0 %v2745
      %v2962 = vpop.f32.mrb[0].mxu0
      %v2963 = vadd.f32 %v2774, %v2962
      %v2964 = vpop.f32.mrb[0].mxu0
      %2965 = vmatprep.mubr.f32.mxu0 0.0
      %2966 = vmatmul.mubr.f32.gmra.mrb[0].mxu0 %v2746
      %v2967 = vpop.f32.mrb[0].mxu0
      %v2968 = vadd.f32 %v2774, %v2967
      %v2969 = vpop.f32.mrb[0].mxu0
      %2970 = vmatprep.mubr.f32.mxu0 0.0
      %2971 = vmatmul.mubr.f32.gmra.mrb[0].mxu0 %v2747
      %v2972 = vpop.f32.mrb[0].mxu0
      %v2973 = vadd.f32 %v2774, %v2972
      %v2974 = vpop.f32.mrb[0].mxu0
      %2975 = vmatprep.mubr.f32.mxu0 0.0
      %2976 = vmatmul.mubr.f32.gmra.mrb[0].mxu0 %v2748
      %v2977 = vpop.f32.mrb[0].mxu0
      %v2978 = vadd.f32 %v2774, %v2977
      %v2979 = vpop.f32.mrb[0].mxu0
      %2980 = vmatprep.mubr.f32.mxu0 0.0
      %2981 = vmatmul.mubr.f32.gmra.mrb[0].mxu0 %v2749
      %v2982 = vpop.f32.mrb[0].mxu0
      %v2983 = vadd.f32 %v2774, %v2982
      %v2984 = vpop.f32.mrb[0].mxu0
      %2985 = vmatprep.mubr.f32.mxu0 0.0
      %2986 = vmatmul.mubr.f32.gmra.mrb[0].mxu0 %v2750
      %v2987 = vpop.f32.mrb[0].mxu0
      %v2988 = vadd.f32 %v2774, %v2987
      %v2989 = vpop.f32.mrb[0].mxu0
      %2990 = vmatprep.mubr.f32.mxu0 0.0
      %2991 = vmatmul.mubr.f32.gmra.mrb[0].mxu0 %v2751
      %v2992 = vpop.f32.mrb[0].mxu0
      %v2993 = vadd.f32 %v2774, %v2992
      %v2994 = vpop.f32.mrb[0].mxu0
      %2995 = vmatprep.mubr.f32.mxu0 0.0
      %2996 = vmatmul.mubr.f32.gmra.mrb[0].mxu0 %v2752
      %v2997 = vpop.f32.mrb[0].mxu0
      %v2998 = vadd.f32 %v2774, %v2997
      %v2999 = vpop.f32.mrb[0].mxu0
      %3000 = vdwg.mxu0
      %v3001 = vadd.f32 %v2843, %v279
      %v3002 = vadd.f32 %v2848, %v280
      %v3003 = vadd.f32 %v2853, %v281
      %v3004 = vadd.f32 %v2858, %v282
      %v3005 = vadd.f32 %v2863, %v283
      %v3006 = vadd.f32 %v2868, %v284
      %v3007 = vadd.f32 %v2873, %v285
      %v3008 = vadd.f32 %v2878, %v286
      %v3009 = vadd.f32 %v2883, %v287
      %v3010 = vadd.f32 %v2888, %v288
      %v3011 = vadd.f32 %v2893, %v289
      %v3012 = vadd.f32 %v2898, %v290
      %v3013 = vadd.f32 %v2903, %v291
      %v3014 = vadd.f32 %v2908, %v292
      %v3015 = vadd.f32 %v2913, %v293
      %v3016 = vadd.f32 %v2918, %v294
      %v3017 = vadd.f32 %v2923, %v295
      %v3018 = vadd.f32 %v2928, %v296
      %v3019 = vadd.f32 %v2933, %v297
      %v3020 = vadd.f32 %v2938, %v298
      %v3021 = vadd.f32 %v2943, %v299
      %v3022 = vadd.f32 %v2948, %v300
      %v3023 = vadd.f32 %v2953, %v301
      %v3024 = vadd.f32 %v2958, %v302
      %v3025 = vadd.f32 %v2963, %v303
      %v3026 = vadd.f32 %v2968, %v304
      %v3027 = vadd.f32 %v2973, %v305
      %v3028 = vadd.f32 %v2978, %v306
      %v3029 = vadd.f32 %v2983, %v307
      %v3030 = vadd.f32 %v2988, %v308
      %v3031 = vadd.f32 %v2993, %v309
      %v3032 = vadd.f32 %v2998, %v310
      %v3033 = vmax.f32 %v3001, 0.0
      %v3034 = vmax.f32 %v3002, 0.0
      %v3035 = vmax.f32 %v3003, 0.0
      %v3036 = vmax.f32 %v3004, 0.0
      %v3037 = vmax.f32 %v3005, 0.0
      %v3038 = vmax.f32 %v3006, 0.0
      %v3039 = vmax.f32 %v3007, 0.0
      %v3040 = vmax.f32 %v3008, 0.0
      %v3041 = vmax.f32 %v3009, 0.0
      %v3042 = vmax.f32 %v3010, 0.0
      %v3043 = vmax.f32 %v3011, 0.0
      %v3044 = vmax.f32 %v3012, 0.0
      %v3045 = vmax.f32 %v3013, 0.0
      %v3046 = vmax.f32 %v3014, 0.0
      %v3047 = vmax.f32 %v3015, 0.0
      %v3048 = vmax.f32 %v3016, 0.0
      %v3049 = vmax.f32 %v3017, 0.0
      %v3050 = vmax.f32 %v3018, 0.0
      %v3051 = vmax.f32 %v3019, 0.0
      %v3052 = vmax.f32 %v3020, 0.0
      %v3053 = vmax.f32 %v3021, 0.0
      %v3054 = vmax.f32 %v3022, 0.0
      %v3055 = vmax.f32 %v3023, 0.0
      %v3056 = vmax.f32 %v3024, 0.0
      %v3057 = vmax.f32 %v3025, 0.0
      %v3058 = vmax.f32 %v3026, 0.0
      %v3059 = vmax.f32 %v3027, 0.0
      %v3060 = vmax.f32 %v3028, 0.0
      %v3061 = vmax.f32 %v3029, 0.0
      %v3062 = vmax.f32 %v3030, 0.0
      %v3063 = vmax.f32 %v3031, 0.0
      %v3064 = vmax.f32 %v3032, 0.0
      %3065 = vst [vmem:[%s278] sm:$0xff] %v3033
      %3066 = vst [vmem:[%s278 + $0x8] sm:$0xff] %v3034
      %3067 = vst [vmem:[%s278 + $0x10] sm:$0xff] %v3035
      %3068 = vst [vmem:[%s278 + $0x18] sm:$0xff] %v3036
      %3069 = vst [vmem:[%s278 + $0x20] sm:$0xff] %v3037
      %3070 = vst [vmem:[%s278 + $0x28] sm:$0xff] %v3038
      %3071 = vst [vmem:[%s278 + $0x30] sm:$0xff] %v3039
      %3072 = vst [vmem:[%s278 + $0x38] sm:$0xff] %v3040
      %3073 = vst [vmem:[%s278 + $0x40] sm:$0xff] %v3041
      %3074 = vst [vmem:[%s278 + $0x48] sm:$0xff] %v3042
      %3075 = vst [vmem:[%s278 + $0x50] sm:$0xff] %v3043
      %3076 = vst [vmem:[%s278 + $0x58] sm:$0xff] %v3044
      %3077 = vst [vmem:[%s278 + $0x60] sm:$0xff] %v3045
      %3078 = vst [vmem:[%s278 + $0x68] sm:$0xff] %v3046
      %3079 = vst [vmem:[%s278 + $0x70] sm:$0xff] %v3047
      %3080 = vst [vmem:[%s278 + $0x78] sm:$0xff] %v3048
      %3081 = vst [vmem:[%s278 + $0x80] sm:$0xff] %v3049
      %3082 = vst [vmem:[%s278 + $0x88] sm:$0xff] %v3050
      %3083 = vst [vmem:[%s278 + $0x90] sm:$0xff] %v3051
      %3084 = vst [vmem:[%s278 + $0x98] sm:$0xff] %v3052
      %3085 = vst [vmem:[%s278 + $0xa0] sm:$0xff] %v3053
      %3086 = vst [vmem:[%s278 + $0xa8] sm:$0xff] %v3054
      %3087 = vst [vmem:[%s278 + $0xb0] sm:$0xff] %v3055
      %3088 = vst [vmem:[%s278 + $0xb8] sm:$0xff] %v3056
      %3089 = vst [vmem:[%s278 + $0xc0] sm:$0xff] %v3057
      %3090 = vst [vmem:[%s278 + $0xc8] sm:$0xff] %v3058
      %3091 = vst [vmem:[%s278 + $0xd0] sm:$0xff] %v3059
      %3092 = vst [vmem:[%s278 + $0xd8] sm:$0xff] %v3060
      %3093 = vst [vmem:[%s278 + $0xe0] sm:$0xff] %v3061
      %3094 = vst [vmem:[%s278 + $0xe8] sm:$0xff] %v3062
      %3095 = vst [vmem:[%s278 + $0xf0] sm:$0xff] %v3063
      %3096 = vst [vmem:[%s278 + $0xf8] sm:$0xff] %v3064
      %p3097 = scmp.lt.s32.totalorder %s18, 1
      %s3098 = scalar_select %p3097, %s18, 1
      %s3099 = smul.addr %s3098, 32
      %s3100 = smul.addr %s3099, 8
      %s3101 = scalar_lea.vmem %s7, %s3100
      // Predicated region
      $region49: #{bottleneck_forward.1} parent=47 // pred_check
        %p3102 = pneg %p188
      $region50: #{bottleneck_forward.1} parent=47 // pred_check_branch
        %3104 = sbr.rel (%p3102) target = $region52
      $region51: #{bottleneck_forward.1} parent=47 // pred_region
        _
      $region52: #{bottleneck_forward.1} parent=47 // pred_fallthru
        _
    $region48: #{bottleneck_forward.1} parent=5 // pred_fallthru
      _
    %p3105 = scmp.le.s32.totalorder 2, %s13
    // Predicated region
    $region53: #{bottleneck_forward.1} parent=5 // pred_check
      %p3106 = pneg %p3105
    $region54: #{bottleneck_forward.1} parent=5 // pred_check_branch
      %3108 = sbr.rel (%p3106) target = $region56
    $region55: #{bottleneck_forward.1} parent=5 // pred_region
      %s3109 = ssub.s32 %s13, 2
      // Predicated region
      $region57: #{bottleneck_forward.1} parent=55 // pred_check
        %p3110 = pneg %p194
      $region58: #{bottleneck_forward.1} parent=55 // pred_check_branch
        %3112 = sbr.rel (%p3110) target = $region60
      $region59: #{bottleneck_forward.1} parent=55 // pred_region
        %p3113 = scmp.lt.s32.totalorder %s19, 1
        %s3114 = scalar_select %p3113, %s19, 1
        %s3115 = smul.addr %s3114, 32
        %s3116 = smul.addr %s3115, 8
        %s3117 = scalar_lea.vmem %s7, %s3116
      $region60: #{bottleneck_forward.1} parent=55 // pred_fallthru
        _
    $region56: #{bottleneck_forward.1} parent=5 // pred_fallthru
      _
  $region6: #{bottleneck_forward.1} parent=0 // loop_footer
    %s17 = sadd.s32 1, %s13
  $region7: #{bottleneck_forward.1} parent=0 // loop_footer_branch
    %12 = sbr.rel target = $region3
  $region8: #{bottleneck_forward.1} parent=0 // loop_exit
    _

</llo_original>
